<compile_context>
chip_gen: v6e
topology: v6e:2x2x1
jax: 0.10.0
libtpu: 0.0.40
codegen_flags: <defaults>
</compile_context>

<pallas_src>
import jax
import jax.numpy as jnp
from jax import lax
from jax.experimental import pallas as pl
from jax.experimental.pallas import tpu as pltpu

# ----- small, module-consistent dimensions -----
B = 2        # batch_size
T_INGR = 8   # args.max_ingr
L_MAX = 8    # args.max_length
V_IN = 16    # len(vocab_ingrs)   (encoder input vocab)
V_OUT = 32   # len(vocab_tokens)  (decoder output vocab)
E_INGR = 16  # args.ingr_embed
H = 32       # args.hidden_size   (bidirectional = False)
SOS = 1      # SOS_token


def _mm(a, b):
    return jnp.dot(a, b, preferred_element_type=jnp.float32)


def _gru_step(x, h, wi, wh, b_r, b_z, b_in, b_hn):
    """PyTorch nn.GRU cell with fused gate matmuls.

    wi = [Wir|Wiz|Win] (in, 3H), wh = [Whr|Whz|Whn] (H, 3H),
    b_r = bir+bhr, b_z = biz+bhz (pre-summed), b_in / b_hn separate.
    """
    gi = _mm(x, wi)                                   # (B, 3H)
    gh = _mm(h, wh)                                   # (B, 3H)
    r = jax.nn.sigmoid(gi[:, 0:H] + gh[:, 0:H] + b_r)
    z = jax.nn.sigmoid(gi[:, H:2 * H] + gh[:, H:2 * H] + b_z)
    n = jnp.tanh(gi[:, 2 * H:3 * H] + b_in + r * (gh[:, 2 * H:3 * H] + b_hn))
    return (1.0 - z) * n + z * h


# ---------------------------------------------------------------------------
# Fused kernel: GRU encoder -> encoder_fusion -> greedy GRU decoder
# ---------------------------------------------------------------------------
def seq2seq_kernel(x_ref,                  # (B, T_INGR, E_INGR) embedded ingredients
                   e_wi_ref, e_wh_ref,     # (E_INGR, 3H), (H, 3H)
                   e_b_ref,                # (1, 4H): [b_r | b_z | b_in | b_hn]
                   wf_ref, bf_ref,         # encoder_fusion Linear: (H, H), (1, H)
                   emb_ref,                # (V_OUT, H) decoder embedding table
                   d_wi_ref, d_wh_ref,     # (H, 3H), (H, 3H)
                   d_b_ref,                # (1, 4H)
                   wout_ref, bout_ref,     # (H, V_OUT), (1, V_OUT)
                   dec_out_ref,            # (B, L_MAX*V_OUT) f32 log-probs (lane-dense)
                   tok_ref):               # (B, L_MAX) int32 greedy tokens
    # ---------------- encoder: GRU over T_INGR steps ----------------
    e_wi, e_wh = e_wi_ref[...], e_wh_ref[...]
    e_b = e_b_ref[...]
    e_br, e_bz = e_b[:, 0:H], e_b[:, H:2 * H]
    e_bin, e_bhn = e_b[:, 2 * H:3 * H], e_b[:, 3 * H:4 * H]

    h = jnp.zeros((B, H), jnp.float32)                # PyTorch default h0 = 0
    for t in range(T_INGR):                           # static count -> fully unrolled
        x_t = x_ref[:, t, :]                          # (B, E_INGR)
        h = _gru_step(x_t, h, e_wi, e_wh, e_br, e_bz, e_bin, e_bhn)

    # encoder_fusion = Linear(H, H) + ReLU
    h = jnp.maximum(_mm(h, wf_ref[...]) + bf_ref[...], 0.0)

    # ---------------- decoder: greedy GRU loop over L_MAX steps ----------------
    emb = emb_ref[...]
    d_wi, d_wh = d_wi_ref[...], d_wh_ref[...]
    d_b = d_b_ref[...]
    d_br, d_bz = d_b[:, 0:H], d_b[:, H:2 * H]
    d_bin, d_bhn = d_b[:, 2 * H:3 * H], d_b[:, 3 * H:4 * H]
    wout, bout = wout_ref[...], bout_ref[...]

    iota_v = lax.broadcasted_iota(jnp.int32, (B, V_OUT), 1)
    tok = jnp.full((B, 1), SOS, jnp.int32)            # SOS start token
    logps, toks = [], []
    for _ in range(L_MAX):                            # static count -> fully unrolled
        # embedding lookup as one-hot matmul, then ReLU (tutorial DecoderRNN)
        onehot = (iota_v == tok).astype(jnp.float32)  # (B, V_OUT)
        x = jnp.maximum(_mm(onehot, emb), 0.0)        # (B, H)
        h = _gru_step(x, h, d_wi, d_wh, d_br, d_bz, d_bin, d_bhn)
        logits = _mm(h, wout) + bout                  # (B, V_OUT)
        logp = logits - jax.nn.logsumexp(logits, axis=-1, keepdims=True)
        logps.append(logp)
        # greedy argmax (first index on ties)
        m = jnp.max(logp, axis=-1, keepdims=True)
        cand = jnp.where(logp == m, iota_v, V_OUT)
        tok = jnp.min(cand, axis=-1, keepdims=True).astype(jnp.int32)  # (B, 1)
        toks.append(tok)

    # single lane-dense stores at the end (no per-step masked partial stores)
    dec_out_ref[...] = jnp.concatenate(logps, axis=-1)   # (B, L_MAX*V_OUT) = (2, 256)
    tok_ref[...] = jnp.concatenate(toks, axis=-1)        # (B, L_MAX)


# ---------------------------------------------------------------------------
# Wrapper (mirrors Seq2seq.forward in eval mode with greedy decoding)
# ---------------------------------------------------------------------------
_VMEM = pl.BlockSpec(memory_space=pltpu.MemorySpace.VMEM)


def seq2seq_forward(params, ingr_ids):
    """Returns: decoder_outputs (B, L_MAX, V_OUT) log-probs,
                decoded token ids (B, L_MAX),
                decoder_attentions (L_MAX, B, T_INGR) [zeros, no attention]."""
    # ingredient embedding lookup (glue, not the hot path)
    x_emb = jnp.take(params["emb_ingr"], ingr_ids, axis=0)   # (B, T_INGR, E_INGR)

    dec_flat, tok = pl.pallas_call(
        seq2seq_kernel,
        out_shape=(jax.ShapeDtypeStruct((B, L_MAX * V_OUT), jnp.float32),
                   jax.ShapeDtypeStruct((B, L_MAX), jnp.int32)),
        in_specs=[_VMEM] * 12,
        out_specs=(_VMEM, _VMEM),
    )(x_emb,
      params["e_wi"], params["e_wh"], params["e_b"],
      params["wf"], params["bf"],
      params["emb_dec"],
      params["d_wi"], params["d_wh"], params["d_b"],
      params["wout"], params["bout"])

    dec_out = dec_flat.reshape(B, L_MAX, V_OUT)
    attentions = jnp.zeros((L_MAX, B, T_INGR), jnp.float32)  # plain decoder -> None attention
    return dec_out, tok, attentions


# ---------------------------------------------------------------------------
# Deterministic parameter init (shapes follow the module's __init__), with the
# GRU weights packed host-side into the fused [r|z|n] layout.
# ---------------------------------------------------------------------------
def init_params(key):
    ks = iter(jax.random.split(key, 40))

    def unif(shape, fan_in):
        b = 1.0 / jnp.sqrt(jnp.float32(fan_in))
        return jax.random.uniform(next(ks), shape, jnp.float32, -b, b)

    def gru_params(in_dim):
        wi = jnp.concatenate([unif((in_dim, H), H) for _ in range(3)], axis=-1)  # (in, 3H)
        wh = jnp.concatenate([unif((H, H), H) for _ in range(3)], axis=-1)       # (H, 3H)
        bi = unif((1, 3 * H), H)
        bh = unif((1, 3 * H), H)
        b = jnp.concatenate([bi[:, 0:H] + bh[:, 0:H],            # b_r = bir + bhr
                             bi[:, H:2 * H] + bh[:, H:2 * H],    # b_z = biz + bhz
                             bi[:, 2 * H:3 * H],                 # b_in
                             bh[:, 2 * H:3 * H]], axis=-1)       # b_hn -> (1, 4H)
        return wi, wh, b

    p = {}
    p["emb_ingr"] = jax.random.normal(next(ks), (V_IN, E_INGR), jnp.float32)
    # encoder GRU (input E_INGR -> hidden H)
    p["e_wi"], p["e_wh"], p["e_b"] = gru_params(E_INGR)
    # encoder_fusion Linear(H, H)
    p["wf"] = unif((H, H), H)
    p["bf"] = unif((1, H), H)
    # decoder embedding + GRU (H -> H) + output Linear(H, V_OUT)
    p["emb_dec"] = jax.random.normal(next(ks), (V_OUT, H), jnp.float32)
    p["d_wi"], p["d_wh"], p["d_b"] = gru_params(H)
    p["wout"] = unif((H, V_OUT), H)
    p["bout"] = unif((1, V_OUT), H)
    return p


if __name__ == "__main__":
    key = jax.random.PRNGKey(0)
    k_param, k_data = jax.random.split(key)
    params = init_params(k_param)
    ingr_ids = jax.random.randint(k_data, (B, T_INGR), 0, V_IN)  # batch['ingr']

    fwd = jax.jit(seq2seq_forward)
    dec_out, decoded_words, attentions = fwd(params, ingr_ids)
    jax.block_until_ready((dec_out, decoded_words, attentions))

    assert dec_out.shape == (B, L_MAX, V_OUT)
    assert decoded_words.shape == (B, L_MAX)
    assert attentions.shape == (L_MAX, B, T_INGR)
    assert bool(jnp.all(jnp.isfinite(dec_out)))
    print("KERNEL_OK")
</pallas_src>

<mosaic_0001>
module attributes {stable_mosaic.version = 11 : i64} {
  func.func @seq2seq_kernel(%arg0: memref<2x8x16xf32, #tpu.memory_space<vmem>>, %arg1: memref<16x96xf32, #tpu.memory_space<vmem>>, %arg2: memref<32x96xf32, #tpu.memory_space<vmem>>, %arg3: memref<1x128xf32, #tpu.memory_space<vmem>>, %arg4: memref<32x32xf32, #tpu.memory_space<vmem>>, %arg5: memref<1x32xf32, #tpu.memory_space<vmem>>, %arg6: memref<32x32xf32, #tpu.memory_space<vmem>>, %arg7: memref<32x96xf32, #tpu.memory_space<vmem>>, %arg8: memref<32x96xf32, #tpu.memory_space<vmem>>, %arg9: memref<1x128xf32, #tpu.memory_space<vmem>>, %arg10: memref<32x32xf32, #tpu.memory_space<vmem>>, %arg11: memref<1x32xf32, #tpu.memory_space<vmem>>, %arg12: memref<2x256xf32, #tpu.memory_space<vmem>>, %arg13: memref<2x8xi32, #tpu.memory_space<vmem>>) attributes {dimension_semantics = [], scalar_prefetch = 0 : i64, scratch_operands = 0 : i64, tpu.core_type = #tpu.core_type<tc>} {
    %c0 = arith.constant 0 : index
    %c0_0 = arith.constant 0 : index
    %0 = vector.load %arg1[%c0, %c0_0] : memref<16x96xf32, #tpu.memory_space<vmem>>, vector<16x96xf32>
    %c0_1 = arith.constant 0 : index
    %c0_2 = arith.constant 0 : index
    %1 = vector.load %arg2[%c0_1, %c0_2] : memref<32x96xf32, #tpu.memory_space<vmem>>, vector<32x96xf32>
    %c0_3 = arith.constant 0 : index
    %c0_4 = arith.constant 0 : index
    %2 = vector.load %arg3[%c0_3, %c0_4] : memref<1x128xf32, #tpu.memory_space<vmem>>, vector<1x128xf32>
    %3 = vector.extract_strided_slice %2 {offsets = [0, 0], sizes = [1, 32], strides = [1, 1]} : vector<1x128xf32> to vector<1x32xf32>
    %4 = vector.extract_strided_slice %2 {offsets = [0, 32], sizes = [1, 32], strides = [1, 1]} : vector<1x128xf32> to vector<1x32xf32>
    %5 = vector.extract_strided_slice %2 {offsets = [0, 64], sizes = [1, 32], strides = [1, 1]} : vector<1x128xf32> to vector<1x32xf32>
    %6 = vector.extract_strided_slice %2 {offsets = [0, 96], sizes = [1, 32], strides = [1, 1]} : vector<1x128xf32> to vector<1x32xf32>
    %cst = arith.constant 0.000000e+00 : f32
    %7 = vector.broadcast %cst : f32 to vector<2x32xf32>
    %c0_5 = arith.constant 0 : index
    %c0_6 = arith.constant 0 : index
    %c0_7 = arith.constant 0 : index
    %8 = vector.load %arg0[%c0_5, %c0_6, %c0_7] : memref<2x8x16xf32, #tpu.memory_space<vmem>>, vector<2x1x16xf32>
    %9 = vector.shape_cast %8 : vector<2x1x16xf32> to vector<2x16xf32>
    %cst_8 = arith.constant dense<0.000000e+00> : vector<2x96xf32>
    %10 = tpu.matmul %9, %0, %cst_8 {dimension_numbers = #tpu.dot_dimension_numbers<[1], [0], [0], [1], [0, 0, 1, 1], [], []>} : vector<2x16xf32>, vector<16x96xf32>, vector<2x96xf32> -> vector<2x96xf32>
    %cst_9 = arith.constant dense<0.000000e+00> : vector<2x96xf32>
    %11 = tpu.matmul %7, %1, %cst_9 {dimension_numbers = #tpu.dot_dimension_numbers<[1], [0], [0], [1], [0, 0, 1, 1], [], []>} : vector<2x32xf32>, vector<32x96xf32>, vector<2x96xf32> -> vector<2x96xf32>
    %12 = vector.extract_strided_slice %10 {offsets = [0, 0], sizes = [2, 32], strides = [1, 1]} : vector<2x96xf32> to vector<2x32xf32>
    %13 = vector.extract_strided_slice %11 {offsets = [0, 0], sizes = [2, 32], strides = [1, 1]} : vector<2x96xf32> to vector<2x32xf32>
    %14 = arith.addf %12, %13 : vector<2x32xf32>
    %15 = vector.broadcast %3 : vector<1x32xf32> to vector<2x32xf32>
    %16 = arith.addf %14, %15 : vector<2x32xf32>
    %17 = arith.negf %16 : vector<2x32xf32>
    %18 = math.exp %17 : vector<2x32xf32>
    %cst_10 = arith.constant 1.000000e+00 : f32
    %19 = vector.broadcast %cst_10 : f32 to vector<2x32xf32>
    %20 = arith.addf %19, %18 : vector<2x32xf32>
    %21 = arith.divf %19, %20 : vector<2x32xf32>
    %22 = vector.extract_strided_slice %10 {offsets = [0, 32], sizes = [2, 32], strides = [1, 1]} : vector<2x96xf32> to vector<2x32xf32>
    %23 = vector.extract_strided_slice %11 {offsets = [0, 32], sizes = [2, 32], strides = [1, 1]} : vector<2x96xf32> to vector<2x32xf32>
    %24 = arith.addf %22, %23 : vector<2x32xf32>
    %25 = vector.broadcast %4 : vector<1x32xf32> to vector<2x32xf32>
    %26 = arith.addf %24, %25 : vector<2x32xf32>
    %27 = arith.negf %26 : vector<2x32xf32>
    %28 = math.exp %27 : vector<2x32xf32>
    %cst_11 = arith.constant 1.000000e+00 : f32
    %29 = vector.broadcast %cst_11 : f32 to vector<2x32xf32>
    %30 = arith.addf %29, %28 : vector<2x32xf32>
    %31 = arith.divf %29, %30 : vector<2x32xf32>
    %32 = vector.extract_strided_slice %10 {offsets = [0, 64], sizes = [2, 32], strides = [1, 1]} : vector<2x96xf32> to vector<2x32xf32>
    %33 = vector.broadcast %5 : vector<1x32xf32> to vector<2x32xf32>
    %34 = arith.addf %32, %33 : vector<2x32xf32>
    %35 = vector.extract_strided_slice %11 {offsets = [0, 64], sizes = [2, 32], strides = [1, 1]} : vector<2x96xf32> to vector<2x32xf32>
    %36 = vector.broadcast %6 : vector<1x32xf32> to vector<2x32xf32>
    %37 = arith.addf %35, %36 : vector<2x32xf32>
    %38 = arith.mulf %21, %37 : vector<2x32xf32>
    %39 = arith.addf %34, %38 : vector<2x32xf32>
    %40 = math.tanh %39 : vector<2x32xf32>
    %cst_12 = arith.constant 1.000000e+00 : f32
    %41 = vector.broadcast %cst_12 : f32 to vector<2x32xf32>
    %42 = arith.subf %41, %31 : vector<2x32xf32>
    %43 = arith.mulf %42, %40 : vector<2x32xf32>
    %44 = arith.mulf %31, %7 : vector<2x32xf32>
    %45 = arith.addf %43, %44 : vector<2x32xf32>
    %c0_13 = arith.constant 0 : index
    %c1 = arith.constant 1 : index
    %c0_14 = arith.constant 0 : index
    %46 = vector.load %arg0[%c0_13, %c1, %c0_14] : memref<2x8x16xf32, #tpu.memory_space<vmem>>, vector<2x1x16xf32>
    %47 = vector.shape_cast %46 : vector<2x1x16xf32> to vector<2x16xf32>
    %cst_15 = arith.constant dense<0.000000e+00> : vector<2x96xf32>
    %48 = tpu.matmul %47, %0, %cst_15 {dimension_numbers = #tpu.dot_dimension_numbers<[1], [0], [0], [1], [0, 0, 1, 1], [], []>} : vector<2x16xf32>, vector<16x96xf32>, vector<2x96xf32> -> vector<2x96xf32>
    %cst_16 = arith.constant dense<0.000000e+00> : vector<2x96xf32>
    %49 = tpu.matmul %45, %1, %cst_16 {dimension_numbers = #tpu.dot_dimension_numbers<[1], [0], [0], [1], [0, 0, 1, 1], [], []>} : vector<2x32xf32>, vector<32x96xf32>, vector<2x96xf32> -> vector<2x96xf32>
    %50 = vector.extract_strided_slice %48 {offsets = [0, 0], sizes = [2, 32], strides = [1, 1]} : vector<2x96xf32> to vector<2x32xf32>
    %51 = vector.extract_strided_slice %49 {offsets = [0, 0], sizes = [2, 32], strides = [1, 1]} : vector<2x96xf32> to vector<2x32xf32>
    %52 = arith.addf %50, %51 : vector<2x32xf32>
    %53 = vector.broadcast %3 : vector<1x32xf32> to vector<2x32xf32>
    %54 = arith.addf %52, %53 : vector<2x32xf32>
    %55 = arith.negf %54 : vector<2x32xf32>
    %56 = math.exp %55 : vector<2x32xf32>
    %cst_17 = arith.constant 1.000000e+00 : f32
    %57 = vector.broadcast %cst_17 : f32 to vector<2x32xf32>
    %58 = arith.addf %57, %56 : vector<2x32xf32>
    %59 = arith.divf %57, %58 : vector<2x32xf32>
    %60 = vector.extract_strided_slice %48 {offsets = [0, 32], sizes = [2, 32], strides = [1, 1]} : vector<2x96xf32> to vector<2x32xf32>
    %61 = vector.extract_strided_slice %49 {offsets = [0, 32], sizes = [2, 32], strides = [1, 1]} : vector<2x96xf32> to vector<2x32xf32>
    %62 = arith.addf %60, %61 : vector<2x32xf32>
    %63 = vector.broadcast %4 : vector<1x32xf32> to vector<2x32xf32>
    %64 = arith.addf %62, %63 : vector<2x32xf32>
    %65 = arith.negf %64 : vector<2x32xf32>
    %66 = math.exp %65 : vector<2x32xf32>
    %cst_18 = arith.constant 1.000000e+00 : f32
    %67 = vector.broadcast %cst_18 : f32 to vector<2x32xf32>
    %68 = arith.addf %67, %66 : vector<2x32xf32>
    %69 = arith.divf %67, %68 : vector<2x32xf32>
    %70 = vector.extract_strided_slice %48 {offsets = [0, 64], sizes = [2, 32], strides = [1, 1]} : vector<2x96xf32> to vector<2x32xf32>
    %71 = vector.broadcast %5 : vector<1x32xf32> to vector<2x32xf32>
    %72 = arith.addf %70, %71 : vector<2x32xf32>
    %73 = vector.extract_strided_slice %49 {offsets = [0, 64], sizes = [2, 32], strides = [1, 1]} : vector<2x96xf32> to vector<2x32xf32>
    %74 = vector.broadcast %6 : vector<1x32xf32> to vector<2x32xf32>
    %75 = arith.addf %73, %74 : vector<2x32xf32>
    %76 = arith.mulf %59, %75 : vector<2x32xf32>
    %77 = arith.addf %72, %76 : vector<2x32xf32>
    %78 = math.tanh %77 : vector<2x32xf32>
    %cst_19 = arith.constant 1.000000e+00 : f32
    %79 = vector.broadcast %cst_19 : f32 to vector<2x32xf32>
    %80 = arith.subf %79, %69 : vector<2x32xf32>
    %81 = arith.mulf %80, %78 : vector<2x32xf32>
    %82 = arith.mulf %69, %45 : vector<2x32xf32>
    %83 = arith.addf %81, %82 : vector<2x32xf32>
    %c0_20 = arith.constant 0 : index
    %c2 = arith.constant 2 : index
    %c0_21 = arith.constant 0 : index
    %84 = vector.load %arg0[%c0_20, %c2, %c0_21] : memref<2x8x16xf32, #tpu.memory_space<vmem>>, vector<2x1x16xf32>
    %85 = vector.shape_cast %84 : vector<2x1x16xf32> to vector<2x16xf32>
    %cst_22 = arith.constant dense<0.000000e+00> : vector<2x96xf32>
    %86 = tpu.matmul %85, %0, %cst_22 {dimension_numbers = #tpu.dot_dimension_numbers<[1], [0], [0], [1], [0, 0, 1, 1], [], []>} : vector<2x16xf32>, vector<16x96xf32>, vector<2x96xf32> -> vector<2x96xf32>
    %cst_23 = arith.constant dense<0.000000e+00> : vector<2x96xf32>
    %87 = tpu.matmul %83, %1, %cst_23 {dimension_numbers = #tpu.dot_dimension_numbers<[1], [0], [0], [1], [0, 0, 1, 1], [], []>} : vector<2x32xf32>, vector<32x96xf32>, vector<2x96xf32> -> vector<2x96xf32>
    %88 = vector.extract_strided_slice %86 {offsets = [0, 0], sizes = [2, 32], strides = [1, 1]} : vector<2x96xf32> to vector<2x32xf32>
    %89 = vector.extract_strided_slice %87 {offsets = [0, 0], sizes = [2, 32], strides = [1, 1]} : vector<2x96xf32> to vector<2x32xf32>
    %90 = arith.addf %88, %89 : vector<2x32xf32>
    %91 = vector.broadcast %3 : vector<1x32xf32> to vector<2x32xf32>
    %92 = arith.addf %90, %91 : vector<2x32xf32>
    %93 = arith.negf %92 : vector<2x32xf32>
    %94 = math.exp %93 : vector<2x32xf32>
    %cst_24 = arith.constant 1.000000e+00 : f32
    %95 = vector.broadcast %cst_24 : f32 to vector<2x32xf32>
    %96 = arith.addf %95, %94 : vector<2x32xf32>
    %97 = arith.divf %95, %96 : vector<2x32xf32>
    %98 = vector.extract_strided_slice %86 {offsets = [0, 32], sizes = [2, 32], strides = [1, 1]} : vector<2x96xf32> to vector<2x32xf32>
    %99 = vector.extract_strided_slice %87 {offsets = [0, 32], sizes = [2, 32], strides = [1, 1]} : vector<2x96xf32> to vector<2x32xf32>
    %100 = arith.addf %98, %99 : vector<2x32xf32>
    %101 = vector.broadcast %4 : vector<1x32xf32> to vector<2x32xf32>
    %102 = arith.addf %100, %101 : vector<2x32xf32>
    %103 = arith.negf %102 : vector<2x32xf32>
    %104 = math.exp %103 : vector<2x32xf32>
    %cst_25 = arith.constant 1.000000e+00 : f32
    %105 = vector.broadcast %cst_25 : f32 to vector<2x32xf32>
    %106 = arith.addf %105, %104 : vector<2x32xf32>
    %107 = arith.divf %105, %106 : vector<2x32xf32>
    %108 = vector.extract_strided_slice %86 {offsets = [0, 64], sizes = [2, 32], strides = [1, 1]} : vector<2x96xf32> to vector<2x32xf32>
    %109 = vector.broadcast %5 : vector<1x32xf32> to vector<2x32xf32>
    %110 = arith.addf %108, %109 : vector<2x32xf32>
    %111 = vector.extract_strided_slice %87 {offsets = [0, 64], sizes = [2, 32], strides = [1, 1]} : vector<2x96xf32> to vector<2x32xf32>
    %112 = vector.broadcast %6 : vector<1x32xf32> to vector<2x32xf32>
    %113 = arith.addf %111, %112 : vector<2x32xf32>
    %114 = arith.mulf %97, %113 : vector<2x32xf32>
    %115 = arith.addf %110, %114 : vector<2x32xf32>
    %116 = math.tanh %115 : vector<2x32xf32>
    %cst_26 = arith.constant 1.000000e+00 : f32
    %117 = vector.broadcast %cst_26 : f32 to vector<2x32xf32>
    %118 = arith.subf %117, %107 : vector<2x32xf32>
    %119 = arith.mulf %118, %116 : vector<2x32xf32>
    %120 = arith.mulf %107, %83 : vector<2x32xf32>
    %121 = arith.addf %119, %120 : vector<2x32xf32>
    %c0_27 = arith.constant 0 : index
    %c3 = arith.constant 3 : index
    %c0_28 = arith.constant 0 : index
    %122 = vector.load %arg0[%c0_27, %c3, %c0_28] : memref<2x8x16xf32, #tpu.memory_space<vmem>>, vector<2x1x16xf32>
    %123 = vector.shape_cast %122 : vector<2x1x16xf32> to vector<2x16xf32>
    %cst_29 = arith.constant dense<0.000000e+00> : vector<2x96xf32>
    %124 = tpu.matmul %123, %0, %cst_29 {dimension_numbers = #tpu.dot_dimension_numbers<[1], [0], [0], [1], [0, 0, 1, 1], [], []>} : vector<2x16xf32>, vector<16x96xf32>, vector<2x96xf32> -> vector<2x96xf32>
    %cst_30 = arith.constant dense<0.000000e+00> : vector<2x96xf32>
    %125 = tpu.matmul %121, %1, %cst_30 {dimension_numbers = #tpu.dot_dimension_numbers<[1], [0], [0], [1], [0, 0, 1, 1], [], []>} : vector<2x32xf32>, vector<32x96xf32>, vector<2x96xf32> -> vector<2x96xf32>
    %126 = vector.extract_strided_slice %124 {offsets = [0, 0], sizes = [2, 32], strides = [1, 1]} : vector<2x96xf32> to vector<2x32xf32>
    %127 = vector.extract_strided_slice %125 {offsets = [0, 0], sizes = [2, 32], strides = [1, 1]} : vector<2x96xf32> to vector<2x32xf32>
    %128 = arith.addf %126, %127 : vector<2x32xf32>
    %129 = vector.broadcast %3 : vector<1x32xf32> to vector<2x32xf32>
    %130 = arith.addf %128, %129 : vector<2x32xf32>
    %131 = arith.negf %130 : vector<2x32xf32>
    %132 = math.exp %131 : vector<2x32xf32>
    %cst_31 = arith.constant 1.000000e+00 : f32
    %133 = vector.broadcast %cst_31 : f32 to vector<2x32xf32>
    %134 = arith.addf %133, %132 : vector<2x32xf32>
    %135 = arith.divf %133, %134 : vector<2x32xf32>
    %136 = vector.extract_strided_slice %124 {offsets = [0, 32], sizes = [2, 32], strides = [1, 1]} : vector<2x96xf32> to vector<2x32xf32>
    %137 = vector.extract_strided_slice %125 {offsets = [0, 32], sizes = [2, 32], strides = [1, 1]} : vector<2x96xf32> to vector<2x32xf32>
    %138 = arith.addf %136, %137 : vector<2x32xf32>
    %139 = vector.broadcast %4 : vector<1x32xf32> to vector<2x32xf32>
    %140 = arith.addf %138, %139 : vector<2x32xf32>
    %141 = arith.negf %140 : vector<2x32xf32>
    %142 = math.exp %141 : vector<2x32xf32>
    %cst_32 = arith.constant 1.000000e+00 : f32
    %143 = vector.broadcast %cst_32 : f32 to vector<2x32xf32>
    %144 = arith.addf %143, %142 : vector<2x32xf32>
    %145 = arith.divf %143, %144 : vector<2x32xf32>
    %146 = vector.extract_strided_slice %124 {offsets = [0, 64], sizes = [2, 32], strides = [1, 1]} : vector<2x96xf32> to vector<2x32xf32>
    %147 = vector.broadcast %5 : vector<1x32xf32> to vector<2x32xf32>
    %148 = arith.addf %146, %147 : vector<2x32xf32>
    %149 = vector.extract_strided_slice %125 {offsets = [0, 64], sizes = [2, 32], strides = [1, 1]} : vector<2x96xf32> to vector<2x32xf32>
    %150 = vector.broadcast %6 : vector<1x32xf32> to vector<2x32xf32>
    %151 = arith.addf %149, %150 : vector<2x32xf32>
    %152 = arith.mulf %135, %151 : vector<2x32xf32>
    %153 = arith.addf %148, %152 : vector<2x32xf32>
    %154 = math.tanh %153 : vector<2x32xf32>
    %cst_33 = arith.constant 1.000000e+00 : f32
    %155 = vector.broadcast %cst_33 : f32 to vector<2x32xf32>
    %156 = arith.subf %155, %145 : vector<2x32xf32>
    %157 = arith.mulf %156, %154 : vector<2x32xf32>
    %158 = arith.mulf %145, %121 : vector<2x32xf32>
    %159 = arith.addf %157, %158 : vector<2x32xf32>
    %c0_34 = arith.constant 0 : index
    %c4 = arith.constant 4 : index
    %c0_35 = arith.constant 0 : index
    %160 = vector.load %arg0[%c0_34, %c4, %c0_35] : memref<2x8x16xf32, #tpu.memory_space<vmem>>, vector<2x1x16xf32>
    %161 = vector.shape_cast %160 : vector<2x1x16xf32> to vector<2x16xf32>
    %cst_36 = arith.constant dense<0.000000e+00> : vector<2x96xf32>
    %162 = tpu.matmul %161, %0, %cst_36 {dimension_numbers = #tpu.dot_dimension_numbers<[1], [0], [0], [1], [0, 0, 1, 1], [], []>} : vector<2x16xf32>, vector<16x96xf32>, vector<2x96xf32> -> vector<2x96xf32>
    %cst_37 = arith.constant dense<0.000000e+00> : vector<2x96xf32>
    %163 = tpu.matmul %159, %1, %cst_37 {dimension_numbers = #tpu.dot_dimension_numbers<[1], [0], [0], [1], [0, 0, 1, 1], [], []>} : vector<2x32xf32>, vector<32x96xf32>, vector<2x96xf32> -> vector<2x96xf32>
    %164 = vector.extract_strided_slice %162 {offsets = [0, 0], sizes = [2, 32], strides = [1, 1]} : vector<2x96xf32> to vector<2x32xf32>
    %165 = vector.extract_strided_slice %163 {offsets = [0, 0], sizes = [2, 32], strides = [1, 1]} : vector<2x96xf32> to vector<2x32xf32>
    %166 = arith.addf %164, %165 : vector<2x32xf32>
    %167 = vector.broadcast %3 : vector<1x32xf32> to vector<2x32xf32>
    %168 = arith.addf %166, %167 : vector<2x32xf32>
    %169 = arith.negf %168 : vector<2x32xf32>
    %170 = math.exp %169 : vector<2x32xf32>
    %cst_38 = arith.constant 1.000000e+00 : f32
    %171 = vector.broadcast %cst_38 : f32 to vector<2x32xf32>
    %172 = arith.addf %171, %170 : vector<2x32xf32>
    %173 = arith.divf %171, %172 : vector<2x32xf32>
    %174 = vector.extract_strided_slice %162 {offsets = [0, 32], sizes = [2, 32], strides = [1, 1]} : vector<2x96xf32> to vector<2x32xf32>
    %175 = vector.extract_strided_slice %163 {offsets = [0, 32], sizes = [2, 32], strides = [1, 1]} : vector<2x96xf32> to vector<2x32xf32>
    %176 = arith.addf %174, %175 : vector<2x32xf32>
    %177 = vector.broadcast %4 : vector<1x32xf32> to vector<2x32xf32>
    %178 = arith.addf %176, %177 : vector<2x32xf32>
    %179 = arith.negf %178 : vector<2x32xf32>
    %180 = math.exp %179 : vector<2x32xf32>
    %cst_39 = arith.constant 1.000000e+00 : f32
    %181 = vector.broadcast %cst_39 : f32 to vector<2x32xf32>
    %182 = arith.addf %181, %180 : vector<2x32xf32>
    %183 = arith.divf %181, %182 : vector<2x32xf32>
    %184 = vector.extract_strided_slice %162 {offsets = [0, 64], sizes = [2, 32], strides = [1, 1]} : vector<2x96xf32> to vector<2x32xf32>
    %185 = vector.broadcast %5 : vector<1x32xf32> to vector<2x32xf32>
    %186 = arith.addf %184, %185 : vector<2x32xf32>
    %187 = vector.extract_strided_slice %163 {offsets = [0, 64], sizes = [2, 32], strides = [1, 1]} : vector<2x96xf32> to vector<2x32xf32>
    %188 = vector.broadcast %6 : vector<1x32xf32> to vector<2x32xf32>
    %189 = arith.addf %187, %188 : vector<2x32xf32>
    %190 = arith.mulf %173, %189 : vector<2x32xf32>
    %191 = arith.addf %186, %190 : vector<2x32xf32>
    %192 = math.tanh %191 : vector<2x32xf32>
    %cst_40 = arith.constant 1.000000e+00 : f32
    %193 = vector.broadcast %cst_40 : f32 to vector<2x32xf32>
    %194 = arith.subf %193, %183 : vector<2x32xf32>
    %195 = arith.mulf %194, %192 : vector<2x32xf32>
    %196 = arith.mulf %183, %159 : vector<2x32xf32>
    %197 = arith.addf %195, %196 : vector<2x32xf32>
    %c0_41 = arith.constant 0 : index
    %c5 = arith.constant 5 : index
    %c0_42 = arith.constant 0 : index
    %198 = vector.load %arg0[%c0_41, %c5, %c0_42] : memref<2x8x16xf32, #tpu.memory_space<vmem>>, vector<2x1x16xf32>
    %199 = vector.shape_cast %198 : vector<2x1x16xf32> to vector<2x16xf32>
    %cst_43 = arith.constant dense<0.000000e+00> : vector<2x96xf32>
    %200 = tpu.matmul %199, %0, %cst_43 {dimension_numbers = #tpu.dot_dimension_numbers<[1], [0], [0], [1], [0, 0, 1, 1], [], []>} : vector<2x16xf32>, vector<16x96xf32>, vector<2x96xf32> -> vector<2x96xf32>
    %cst_44 = arith.constant dense<0.000000e+00> : vector<2x96xf32>
    %201 = tpu.matmul %197, %1, %cst_44 {dimension_numbers = #tpu.dot_dimension_numbers<[1], [0], [0], [1], [0, 0, 1, 1], [], []>} : vector<2x32xf32>, vector<32x96xf32>, vector<2x96xf32> -> vector<2x96xf32>
    %202 = vector.extract_strided_slice %200 {offsets = [0, 0], sizes = [2, 32], strides = [1, 1]} : vector<2x96xf32> to vector<2x32xf32>
    %203 = vector.extract_strided_slice %201 {offsets = [0, 0], sizes = [2, 32], strides = [1, 1]} : vector<2x96xf32> to vector<2x32xf32>
    %204 = arith.addf %202, %203 : vector<2x32xf32>
    %205 = vector.broadcast %3 : vector<1x32xf32> to vector<2x32xf32>
    %206 = arith.addf %204, %205 : vector<2x32xf32>
    %207 = arith.negf %206 : vector<2x32xf32>
    %208 = math.exp %207 : vector<2x32xf32>
    %cst_45 = arith.constant 1.000000e+00 : f32
    %209 = vector.broadcast %cst_45 : f32 to vector<2x32xf32>
    %210 = arith.addf %209, %208 : vector<2x32xf32>
    %211 = arith.divf %209, %210 : vector<2x32xf32>
    %212 = vector.extract_strided_slice %200 {offsets = [0, 32], sizes = [2, 32], strides = [1, 1]} : vector<2x96xf32> to vector<2x32xf32>
    %213 = vector.extract_strided_slice %201 {offsets = [0, 32], sizes = [2, 32], strides = [1, 1]} : vector<2x96xf32> to vector<2x32xf32>
    %214 = arith.addf %212, %213 : vector<2x32xf32>
    %215 = vector.broadcast %4 : vector<1x32xf32> to vector<2x32xf32>
    %216 = arith.addf %214, %215 : vector<2x32xf32>
    %217 = arith.negf %216 : vector<2x32xf32>
    %218 = math.exp %217 : vector<2x32xf32>
    %cst_46 = arith.constant 1.000000e+00 : f32
    %219 = vector.broadcast %cst_46 : f32 to vector<2x32xf32>
    %220 = arith.addf %219, %218 : vector<2x32xf32>
    %221 = arith.divf %219, %220 : vector<2x32xf32>
    %222 = vector.extract_strided_slice %200 {offsets = [0, 64], sizes = [2, 32], strides = [1, 1]} : vector<2x96xf32> to vector<2x32xf32>
    %223 = vector.broadcast %5 : vector<1x32xf32> to vector<2x32xf32>
    %224 = arith.addf %222, %223 : vector<2x32xf32>
    %225 = vector.extract_strided_slice %201 {offsets = [0, 64], sizes = [2, 32], strides = [1, 1]} : vector<2x96xf32> to vector<2x32xf32>
    %226 = vector.broadcast %6 : vector<1x32xf32> to vector<2x32xf32>
    %227 = arith.addf %225, %226 : vector<2x32xf32>
    %228 = arith.mulf %211, %227 : vector<2x32xf32>
    %229 = arith.addf %224, %228 : vector<2x32xf32>
    %230 = math.tanh %229 : vector<2x32xf32>
    %cst_47 = arith.constant 1.000000e+00 : f32
    %231 = vector.broadcast %cst_47 : f32 to vector<2x32xf32>
    %232 = arith.subf %231, %221 : vector<2x32xf32>
    %233 = arith.mulf %232, %230 : vector<2x32xf32>
    %234 = arith.mulf %221, %197 : vector<2x32xf32>
    %235 = arith.addf %233, %234 : vector<2x32xf32>
    %c0_48 = arith.constant 0 : index
    %c6 = arith.constant 6 : index
    %c0_49 = arith.constant 0 : index
    %236 = vector.load %arg0[%c0_48, %c6, %c0_49] : memref<2x8x16xf32, #tpu.memory_space<vmem>>, vector<2x1x16xf32>
    %237 = vector.shape_cast %236 : vector<2x1x16xf32> to vector<2x16xf32>
    %cst_50 = arith.constant dense<0.000000e+00> : vector<2x96xf32>
    %238 = tpu.matmul %237, %0, %cst_50 {dimension_numbers = #tpu.dot_dimension_numbers<[1], [0], [0], [1], [0, 0, 1, 1], [], []>} : vector<2x16xf32>, vector<16x96xf32>, vector<2x96xf32> -> vector<2x96xf32>
    %cst_51 = arith.constant dense<0.000000e+00> : vector<2x96xf32>
    %239 = tpu.matmul %235, %1, %cst_51 {dimension_numbers = #tpu.dot_dimension_numbers<[1], [0], [0], [1], [0, 0, 1, 1], [], []>} : vector<2x32xf32>, vector<32x96xf32>, vector<2x96xf32> -> vector<2x96xf32>
    %240 = vector.extract_strided_slice %238 {offsets = [0, 0], sizes = [2, 32], strides = [1, 1]} : vector<2x96xf32> to vector<2x32xf32>
    %241 = vector.extract_strided_slice %239 {offsets = [0, 0], sizes = [2, 32], strides = [1, 1]} : vector<2x96xf32> to vector<2x32xf32>
    %242 = arith.addf %240, %241 : vector<2x32xf32>
    %243 = vector.broadcast %3 : vector<1x32xf32> to vector<2x32xf32>
    %244 = arith.addf %242, %243 : vector<2x32xf32>
    %245 = arith.negf %244 : vector<2x32xf32>
    %246 = math.exp %245 : vector<2x32xf32>
    %cst_52 = arith.constant 1.000000e+00 : f32
    %247 = vector.broadcast %cst_52 : f32 to vector<2x32xf32>
    %248 = arith.addf %247, %246 : vector<2x32xf32>
    %249 = arith.divf %247, %248 : vector<2x32xf32>
    %250 = vector.extract_strided_slice %238 {offsets = [0, 32], sizes = [2, 32], strides = [1, 1]} : vector<2x96xf32> to vector<2x32xf32>
    %251 = vector.extract_strided_slice %239 {offsets = [0, 32], sizes = [2, 32], strides = [1, 1]} : vector<2x96xf32> to vector<2x32xf32>
    %252 = arith.addf %250, %251 : vector<2x32xf32>
    %253 = vector.broadcast %4 : vector<1x32xf32> to vector<2x32xf32>
    %254 = arith.addf %252, %253 : vector<2x32xf32>
    %255 = arith.negf %254 : vector<2x32xf32>
    %256 = math.exp %255 : vector<2x32xf32>
    %cst_53 = arith.constant 1.000000e+00 : f32
    %257 = vector.broadcast %cst_53 : f32 to vector<2x32xf32>
    %258 = arith.addf %257, %256 : vector<2x32xf32>
    %259 = arith.divf %257, %258 : vector<2x32xf32>
    %260 = vector.extract_strided_slice %238 {offsets = [0, 64], sizes = [2, 32], strides = [1, 1]} : vector<2x96xf32> to vector<2x32xf32>
    %261 = vector.broadcast %5 : vector<1x32xf32> to vector<2x32xf32>
    %262 = arith.addf %260, %261 : vector<2x32xf32>
    %263 = vector.extract_strided_slice %239 {offsets = [0, 64], sizes = [2, 32], strides = [1, 1]} : vector<2x96xf32> to vector<2x32xf32>
    %264 = vector.broadcast %6 : vector<1x32xf32> to vector<2x32xf32>
    %265 = arith.addf %263, %264 : vector<2x32xf32>
    %266 = arith.mulf %249, %265 : vector<2x32xf32>
    %267 = arith.addf %262, %266 : vector<2x32xf32>
    %268 = math.tanh %267 : vector<2x32xf32>
    %cst_54 = arith.constant 1.000000e+00 : f32
    %269 = vector.broadcast %cst_54 : f32 to vector<2x32xf32>
    %270 = arith.subf %269, %259 : vector<2x32xf32>
    %271 = arith.mulf %270, %268 : vector<2x32xf32>
    %272 = arith.mulf %259, %235 : vector<2x32xf32>
    %273 = arith.addf %271, %272 : vector<2x32xf32>
    %c0_55 = arith.constant 0 : index
    %c7 = arith.constant 7 : index
    %c0_56 = arith.constant 0 : index
    %274 = vector.load %arg0[%c0_55, %c7, %c0_56] : memref<2x8x16xf32, #tpu.memory_space<vmem>>, vector<2x1x16xf32>
    %275 = vector.shape_cast %274 : vector<2x1x16xf32> to vector<2x16xf32>
    %cst_57 = arith.constant dense<0.000000e+00> : vector<2x96xf32>
    %276 = tpu.matmul %275, %0, %cst_57 {dimension_numbers = #tpu.dot_dimension_numbers<[1], [0], [0], [1], [0, 0, 1, 1], [], []>} : vector<2x16xf32>, vector<16x96xf32>, vector<2x96xf32> -> vector<2x96xf32>
    %cst_58 = arith.constant dense<0.000000e+00> : vector<2x96xf32>
    %277 = tpu.matmul %273, %1, %cst_58 {dimension_numbers = #tpu.dot_dimension_numbers<[1], [0], [0], [1], [0, 0, 1, 1], [], []>} : vector<2x32xf32>, vector<32x96xf32>, vector<2x96xf32> -> vector<2x96xf32>
    %278 = vector.extract_strided_slice %276 {offsets = [0, 0], sizes = [2, 32], strides = [1, 1]} : vector<2x96xf32> to vector<2x32xf32>
    %279 = vector.extract_strided_slice %277 {offsets = [0, 0], sizes = [2, 32], strides = [1, 1]} : vector<2x96xf32> to vector<2x32xf32>
    %280 = arith.addf %278, %279 : vector<2x32xf32>
    %281 = vector.broadcast %3 : vector<1x32xf32> to vector<2x32xf32>
    %282 = arith.addf %280, %281 : vector<2x32xf32>
    %283 = arith.negf %282 : vector<2x32xf32>
    %284 = math.exp %283 : vector<2x32xf32>
    %cst_59 = arith.constant 1.000000e+00 : f32
    %285 = vector.broadcast %cst_59 : f32 to vector<2x32xf32>
    %286 = arith.addf %285, %284 : vector<2x32xf32>
    %287 = arith.divf %285, %286 : vector<2x32xf32>
    %288 = vector.extract_strided_slice %276 {offsets = [0, 32], sizes = [2, 32], strides = [1, 1]} : vector<2x96xf32> to vector<2x32xf32>
    %289 = vector.extract_strided_slice %277 {offsets = [0, 32], sizes = [2, 32], strides = [1, 1]} : vector<2x96xf32> to vector<2x32xf32>
    %290 = arith.addf %288, %289 : vector<2x32xf32>
    %291 = vector.broadcast %4 : vector<1x32xf32> to vector<2x32xf32>
    %292 = arith.addf %290, %291 : vector<2x32xf32>
    %293 = arith.negf %292 : vector<2x32xf32>
    %294 = math.exp %293 : vector<2x32xf32>
    %cst_60 = arith.constant 1.000000e+00 : f32
    %295 = vector.broadcast %cst_60 : f32 to vector<2x32xf32>
    %296 = arith.addf %295, %294 : vector<2x32xf32>
    %297 = arith.divf %295, %296 : vector<2x32xf32>
    %298 = vector.extract_strided_slice %276 {offsets = [0, 64], sizes = [2, 32], strides = [1, 1]} : vector<2x96xf32> to vector<2x32xf32>
    %299 = vector.broadcast %5 : vector<1x32xf32> to vector<2x32xf32>
    %300 = arith.addf %298, %299 : vector<2x32xf32>
    %301 = vector.extract_strided_slice %277 {offsets = [0, 64], sizes = [2, 32], strides = [1, 1]} : vector<2x96xf32> to vector<2x32xf32>
    %302 = vector.broadcast %6 : vector<1x32xf32> to vector<2x32xf32>
    %303 = arith.addf %301, %302 : vector<2x32xf32>
    %304 = arith.mulf %287, %303 : vector<2x32xf32>
    %305 = arith.addf %300, %304 : vector<2x32xf32>
    %306 = math.tanh %305 : vector<2x32xf32>
    %cst_61 = arith.constant 1.000000e+00 : f32
    %307 = vector.broadcast %cst_61 : f32 to vector<2x32xf32>
    %308 = arith.subf %307, %297 : vector<2x32xf32>
    %309 = arith.mulf %308, %306 : vector<2x32xf32>
    %310 = arith.mulf %297, %273 : vector<2x32xf32>
    %311 = arith.addf %309, %310 : vector<2x32xf32>
    %c0_62 = arith.constant 0 : index
    %c0_63 = arith.constant 0 : index
    %312 = vector.load %arg4[%c0_62, %c0_63] : memref<32x32xf32, #tpu.memory_space<vmem>>, vector<32x32xf32>
    %cst_64 = arith.constant dense<0.000000e+00> : vector<2x32xf32>
    %313 = tpu.matmul %311, %312, %cst_64 {dimension_numbers = #tpu.dot_dimension_numbers<[1], [0], [0], [1], [0, 0, 1, 1], [], []>} : vector<2x32xf32>, vector<32x32xf32>, vector<2x32xf32> -> vector<2x32xf32>
    %c0_65 = arith.constant 0 : index
    %c0_66 = arith.constant 0 : index
    %314 = vector.load %arg5[%c0_65, %c0_66] : memref<1x32xf32, #tpu.memory_space<vmem>>, vector<1x32xf32>
    %315 = vector.broadcast %314 : vector<1x32xf32> to vector<2x32xf32>
    %316 = arith.addf %313, %315 : vector<2x32xf32>
    %cst_67 = arith.constant 0.000000e+00 : f32
    %317 = vector.broadcast %cst_67 : f32 to vector<2x32xf32>
    %318 = arith.maximumf %316, %317 : vector<2x32xf32>
    %c0_68 = arith.constant 0 : index
    %c0_69 = arith.constant 0 : index
    %319 = vector.load %arg6[%c0_68, %c0_69] : memref<32x32xf32, #tpu.memory_space<vmem>>, vector<32x32xf32>
    %c0_70 = arith.constant 0 : index
    %c0_71 = arith.constant 0 : index
    %320 = vector.load %arg7[%c0_70, %c0_71] : memref<32x96xf32, #tpu.memory_space<vmem>>, vector<32x96xf32>
    %c0_72 = arith.constant 0 : index
    %c0_73 = arith.constant 0 : index
    %321 = vector.load %arg8[%c0_72, %c0_73] : memref<32x96xf32, #tpu.memory_space<vmem>>, vector<32x96xf32>
    %c0_74 = arith.constant 0 : index
    %c0_75 = arith.constant 0 : index
    %322 = vector.load %arg9[%c0_74, %c0_75] : memref<1x128xf32, #tpu.memory_space<vmem>>, vector<1x128xf32>
    %323 = vector.extract_strided_slice %322 {offsets = [0, 0], sizes = [1, 32], strides = [1, 1]} : vector<1x128xf32> to vector<1x32xf32>
    %324 = vector.extract_strided_slice %322 {offsets = [0, 32], sizes = [1, 32], strides = [1, 1]} : vector<1x128xf32> to vector<1x32xf32>
    %325 = vector.extract_strided_slice %322 {offsets = [0, 64], sizes = [1, 32], strides = [1, 1]} : vector<1x128xf32> to vector<1x32xf32>
    %326 = vector.extract_strided_slice %322 {offsets = [0, 96], sizes = [1, 32], strides = [1, 1]} : vector<1x128xf32> to vector<1x32xf32>
    %c0_76 = arith.constant 0 : index
    %c0_77 = arith.constant 0 : index
    %327 = vector.load %arg10[%c0_76, %c0_77] : memref<32x32xf32, #tpu.memory_space<vmem>>, vector<32x32xf32>
    %c0_78 = arith.constant 0 : index
    %c0_79 = arith.constant 0 : index
    %328 = vector.load %arg11[%c0_78, %c0_79] : memref<1x32xf32, #tpu.memory_space<vmem>>, vector<1x32xf32>
    %329 = tpu.iota {dimensions = array<i32: 1>} : vector<2x32xi32>
    %c1_i32 = arith.constant 1 : i32
    %330 = vector.broadcast %c1_i32 : i32 to vector<2x1xi32>
    %331 = vector.broadcast %330 : vector<2x1xi32> to vector<2x32xi32>
    %332 = arith.cmpi eq, %329, %331 : vector<2x32xi32>
    %333 = arith.extui %332 : vector<2x32xi1> to vector<2x32xi32>
    %334 = arith.sitofp %333 : vector<2x32xi32> to vector<2x32xf32>
    %cst_80 = arith.constant dense<0.000000e+00> : vector<2x32xf32>
    %335 = tpu.matmul %334, %319, %cst_80 {dimension_numbers = #tpu.dot_dimension_numbers<[1], [0], [0], [1], [0, 0, 1, 1], [], []>} : vector<2x32xf32>, vector<32x32xf32>, vector<2x32xf32> -> vector<2x32xf32>
    %cst_81 = arith.constant 0.000000e+00 : f32
    %336 = vector.broadcast %cst_81 : f32 to vector<2x32xf32>
    %337 = arith.maximumf %335, %336 : vector<2x32xf32>
    %cst_82 = arith.constant dense<0.000000e+00> : vector<2x96xf32>
    %338 = tpu.matmul %337, %320, %cst_82 {dimension_numbers = #tpu.dot_dimension_numbers<[1], [0], [0], [1], [0, 0, 1, 1], [], []>} : vector<2x32xf32>, vector<32x96xf32>, vector<2x96xf32> -> vector<2x96xf32>
    %cst_83 = arith.constant dense<0.000000e+00> : vector<2x96xf32>
    %339 = tpu.matmul %318, %321, %cst_83 {dimension_numbers = #tpu.dot_dimension_numbers<[1], [0], [0], [1], [0, 0, 1, 1], [], []>} : vector<2x32xf32>, vector<32x96xf32>, vector<2x96xf32> -> vector<2x96xf32>
    %340 = vector.extract_strided_slice %338 {offsets = [0, 0], sizes = [2, 32], strides = [1, 1]} : vector<2x96xf32> to vector<2x32xf32>
    %341 = vector.extract_strided_slice %339 {offsets = [0, 0], sizes = [2, 32], strides = [1, 1]} : vector<2x96xf32> to vector<2x32xf32>
    %342 = arith.addf %340, %341 : vector<2x32xf32>
    %343 = vector.broadcast %323 : vector<1x32xf32> to vector<2x32xf32>
    %344 = arith.addf %342, %343 : vector<2x32xf32>
    %345 = arith.negf %344 : vector<2x32xf32>
    %346 = math.exp %345 : vector<2x32xf32>
    %cst_84 = arith.constant 1.000000e+00 : f32
    %347 = vector.broadcast %cst_84 : f32 to vector<2x32xf32>
    %348 = arith.addf %347, %346 : vector<2x32xf32>
    %349 = arith.divf %347, %348 : vector<2x32xf32>
    %350 = vector.extract_strided_slice %338 {offsets = [0, 32], sizes = [2, 32], strides = [1, 1]} : vector<2x96xf32> to vector<2x32xf32>
    %351 = vector.extract_strided_slice %339 {offsets = [0, 32], sizes = [2, 32], strides = [1, 1]} : vector<2x96xf32> to vector<2x32xf32>
    %352 = arith.addf %350, %351 : vector<2x32xf32>
    %353 = vector.broadcast %324 : vector<1x32xf32> to vector<2x32xf32>
    %354 = arith.addf %352, %353 : vector<2x32xf32>
    %355 = arith.negf %354 : vector<2x32xf32>
    %356 = math.exp %355 : vector<2x32xf32>
    %cst_85 = arith.constant 1.000000e+00 : f32
    %357 = vector.broadcast %cst_85 : f32 to vector<2x32xf32>
    %358 = arith.addf %357, %356 : vector<2x32xf32>
    %359 = arith.divf %357, %358 : vector<2x32xf32>
    %360 = vector.extract_strided_slice %338 {offsets = [0, 64], sizes = [2, 32], strides = [1, 1]} : vector<2x96xf32> to vector<2x32xf32>
    %361 = vector.broadcast %325 : vector<1x32xf32> to vector<2x32xf32>
    %362 = arith.addf %360, %361 : vector<2x32xf32>
    %363 = vector.extract_strided_slice %339 {offsets = [0, 64], sizes = [2, 32], strides = [1, 1]} : vector<2x96xf32> to vector<2x32xf32>
    %364 = vector.broadcast %326 : vector<1x32xf32> to vector<2x32xf32>
    %365 = arith.addf %363, %364 : vector<2x32xf32>
    %366 = arith.mulf %349, %365 : vector<2x32xf32>
    %367 = arith.addf %362, %366 : vector<2x32xf32>
    %368 = math.tanh %367 : vector<2x32xf32>
    %cst_86 = arith.constant 1.000000e+00 : f32
    %369 = vector.broadcast %cst_86 : f32 to vector<2x32xf32>
    %370 = arith.subf %369, %359 : vector<2x32xf32>
    %371 = arith.mulf %370, %368 : vector<2x32xf32>
    %372 = arith.mulf %359, %318 : vector<2x32xf32>
    %373 = arith.addf %371, %372 : vector<2x32xf32>
    %cst_87 = arith.constant dense<0.000000e+00> : vector<2x32xf32>
    %374 = tpu.matmul %373, %327, %cst_87 {dimension_numbers = #tpu.dot_dimension_numbers<[1], [0], [0], [1], [0, 0, 1, 1], [], []>} : vector<2x32xf32>, vector<32x32xf32>, vector<2x32xf32> -> vector<2x32xf32>
    %375 = vector.broadcast %328 : vector<1x32xf32> to vector<2x32xf32>
    %376 = arith.addf %374, %375 : vector<2x32xf32>
    %cst_88 = arith.constant dense<0xFF800000> : vector<2xf32>
    %377 = vector.multi_reduction <maximumf>, %376, %cst_88 [1] : vector<2x32xf32> to vector<2xf32>
    %cst_89 = arith.constant 0xFF800000 : f32
    %378 = vector.broadcast %cst_89 : f32 to vector<2xf32>
    %379 = arith.maximumf %378, %377 : vector<2xf32>
    %380 = vector.shape_cast %379 : vector<2xf32> to vector<2x1xf32>
    %381 = tpu.weird %380 : vector<2x1xf32> -> vector<2x1xi1>
    %cst_90 = arith.constant dense<true> : vector<2x1xi1>
    %382 = arith.xori %381, %cst_90 : vector<2x1xi1>
    %cst_91 = arith.constant 0.000000e+00 : f32
    %383 = vector.broadcast %cst_91 : f32 to vector<2x1xf32>
    %384 = arith.select %382, %380, %383 : vector<2x1xi1>, vector<2x1xf32>
    %385 = vector.broadcast %384 : vector<2x1xf32> to vector<2x32xf32>
    %386 = arith.subf %376, %385 : vector<2x32xf32>
    %387 = math.exp %386 : vector<2x32xf32>
    %cst_92 = arith.constant dense<0.000000e+00> : vector<2xf32>
    %388 = vector.multi_reduction <add>, %387, %cst_92 [1] : vector<2x32xf32> to vector<2xf32>
    %389 = vector.shape_cast %388 : vector<2xf32> to vector<2x1xf32>
    %390 = math.absf %389 : vector<2x1xf32>
    %391 = math.log %390 : vector<2x1xf32>
    %392 = arith.addf %391, %384 : vector<2x1xf32>
    %393 = vector.broadcast %392 : vector<2x1xf32> to vector<2x32xf32>
    %394 = arith.subf %376, %393 : vector<2x32xf32>
    %cst_93 = arith.constant dense<0xFF800000> : vector<2xf32>
    %395 = vector.multi_reduction <maximumf>, %394, %cst_93 [1] : vector<2x32xf32> to vector<2xf32>
    %396 = vector.shape_cast %395 : vector<2xf32> to vector<2x1xf32>
    %397 = vector.broadcast %396 : vector<2x1xf32> to vector<2x32xf32>
    %398 = arith.cmpf oeq, %394, %397 : vector<2x32xf32>
    %c32_i32 = arith.constant 32 : i32
    %399 = vector.broadcast %c32_i32 : i32 to vector<2x32xi32>
    %400 = arith.select %398, %329, %399 : vector<2x32xi1>, vector<2x32xi32>
    %cst_94 = arith.constant dense<2147483647> : vector<2xi32>
    %401 = vector.multi_reduction <minsi>, %400, %cst_94 [1] : vector<2x32xi32> to vector<2xi32>
    %402 = vector.shape_cast %401 : vector<2xi32> to vector<2x1xi32>
    %403 = vector.broadcast %402 : vector<2x1xi32> to vector<2x32xi32>
    %404 = arith.cmpi eq, %329, %403 : vector<2x32xi32>
    %405 = arith.extui %404 : vector<2x32xi1> to vector<2x32xi32>
    %406 = arith.sitofp %405 : vector<2x32xi32> to vector<2x32xf32>
    %cst_95 = arith.constant dense<0.000000e+00> : vector<2x32xf32>
    %407 = tpu.matmul %406, %319, %cst_95 {dimension_numbers = #tpu.dot_dimension_numbers<[1], [0], [0], [1], [0, 0, 1, 1], [], []>} : vector<2x32xf32>, vector<32x32xf32>, vector<2x32xf32> -> vector<2x32xf32>
    %cst_96 = arith.constant 0.000000e+00 : f32
    %408 = vector.broadcast %cst_96 : f32 to vector<2x32xf32>
    %409 = arith.maximumf %407, %408 : vector<2x32xf32>
    %cst_97 = arith.constant dense<0.000000e+00> : vector<2x96xf32>
    %410 = tpu.matmul %409, %320, %cst_97 {dimension_numbers = #tpu.dot_dimension_numbers<[1], [0], [0], [1], [0, 0, 1, 1], [], []>} : vector<2x32xf32>, vector<32x96xf32>, vector<2x96xf32> -> vector<2x96xf32>
    %cst_98 = arith.constant dense<0.000000e+00> : vector<2x96xf32>
    %411 = tpu.matmul %373, %321, %cst_98 {dimension_numbers = #tpu.dot_dimension_numbers<[1], [0], [0], [1], [0, 0, 1, 1], [], []>} : vector<2x32xf32>, vector<32x96xf32>, vector<2x96xf32> -> vector<2x96xf32>
    %412 = vector.extract_strided_slice %410 {offsets = [0, 0], sizes = [2, 32], strides = [1, 1]} : vector<2x96xf32> to vector<2x32xf32>
    %413 = vector.extract_strided_slice %411 {offsets = [0, 0], sizes = [2, 32], strides = [1, 1]} : vector<2x96xf32> to vector<2x32xf32>
    %414 = arith.addf %412, %413 : vector<2x32xf32>
    %415 = vector.broadcast %323 : vector<1x32xf32> to vector<2x32xf32>
    %416 = arith.addf %414, %415 : vector<2x32xf32>
    %417 = arith.negf %416 : vector<2x32xf32>
    %418 = math.exp %417 : vector<2x32xf32>
    %cst_99 = arith.constant 1.000000e+00 : f32
    %419 = vector.broadcast %cst_99 : f32 to vector<2x32xf32>
    %420 = arith.addf %419, %418 : vector<2x32xf32>
    %421 = arith.divf %419, %420 : vector<2x32xf32>
    %422 = vector.extract_strided_slice %410 {offsets = [0, 32], sizes = [2, 32], strides = [1, 1]} : vector<2x96xf32> to vector<2x32xf32>
    %423 = vector.extract_strided_slice %411 {offsets = [0, 32], sizes = [2, 32], strides = [1, 1]} : vector<2x96xf32> to vector<2x32xf32>
    %424 = arith.addf %422, %423 : vector<2x32xf32>
    %425 = vector.broadcast %324 : vector<1x32xf32> to vector<2x32xf32>
    %426 = arith.addf %424, %425 : vector<2x32xf32>
    %427 = arith.negf %426 : vector<2x32xf32>
    %428 = math.exp %427 : vector<2x32xf32>
    %cst_100 = arith.constant 1.000000e+00 : f32
    %429 = vector.broadcast %cst_100 : f32 to vector<2x32xf32>
    %430 = arith.addf %429, %428 : vector<2x32xf32>
    %431 = arith.divf %429, %430 : vector<2x32xf32>
    %432 = vector.extract_strided_slice %410 {offsets = [0, 64], sizes = [2, 32], strides = [1, 1]} : vector<2x96xf32> to vector<2x32xf32>
    %433 = vector.broadcast %325 : vector<1x32xf32> to vector<2x32xf32>
    %434 = arith.addf %432, %433 : vector<2x32xf32>
    %435 = vector.extract_strided_slice %411 {offsets = [0, 64], sizes = [2, 32], strides = [1, 1]} : vector<2x96xf32> to vector<2x32xf32>
    %436 = vector.broadcast %326 : vector<1x32xf32> to vector<2x32xf32>
    %437 = arith.addf %435, %436 : vector<2x32xf32>
    %438 = arith.mulf %421, %437 : vector<2x32xf32>
    %439 = arith.addf %434, %438 : vector<2x32xf32>
    %440 = math.tanh %439 : vector<2x32xf32>
    %cst_101 = arith.constant 1.000000e+00 : f32
    %441 = vector.broadcast %cst_101 : f32 to vector<2x32xf32>
    %442 = arith.subf %441, %431 : vector<2x32xf32>
    %443 = arith.mulf %442, %440 : vector<2x32xf32>
    %444 = arith.mulf %431, %373 : vector<2x32xf32>
    %445 = arith.addf %443, %444 : vector<2x32xf32>
    %cst_102 = arith.constant dense<0.000000e+00> : vector<2x32xf32>
    %446 = tpu.matmul %445, %327, %cst_102 {dimension_numbers = #tpu.dot_dimension_numbers<[1], [0], [0], [1], [0, 0, 1, 1], [], []>} : vector<2x32xf32>, vector<32x32xf32>, vector<2x32xf32> -> vector<2x32xf32>
    %447 = vector.broadcast %328 : vector<1x32xf32> to vector<2x32xf32>
    %448 = arith.addf %446, %447 : vector<2x32xf32>
    %cst_103 = arith.constant dense<0xFF800000> : vector<2xf32>
    %449 = vector.multi_reduction <maximumf>, %448, %cst_103 [1] : vector<2x32xf32> to vector<2xf32>
    %cst_104 = arith.constant 0xFF800000 : f32
    %450 = vector.broadcast %cst_104 : f32 to vector<2xf32>
    %451 = arith.maximumf %450, %449 : vector<2xf32>
    %452 = vector.shape_cast %451 : vector<2xf32> to vector<2x1xf32>
    %453 = tpu.weird %452 : vector<2x1xf32> -> vector<2x1xi1>
    %cst_105 = arith.constant dense<true> : vector<2x1xi1>
    %454 = arith.xori %453, %cst_105 : vector<2x1xi1>
    %cst_106 = arith.constant 0.000000e+00 : f32
    %455 = vector.broadcast %cst_106 : f32 to vector<2x1xf32>
    %456 = arith.select %454, %452, %455 : vector<2x1xi1>, vector<2x1xf32>
    %457 = vector.broadcast %456 : vector<2x1xf32> to vector<2x32xf32>
    %458 = arith.subf %448, %457 : vector<2x32xf32>
    %459 = math.exp %458 : vector<2x32xf32>
    %cst_107 = arith.constant dense<0.000000e+00> : vector<2xf32>
    %460 = vector.multi_reduction <add>, %459, %cst_107 [1] : vector<2x32xf32> to vector<2xf32>
    %461 = vector.shape_cast %460 : vector<2xf32> to vector<2x1xf32>
    %462 = math.absf %461 : vector<2x1xf32>
    %463 = math.log %462 : vector<2x1xf32>
    %464 = arith.addf %463, %456 : vector<2x1xf32>
    %465 = vector.broadcast %464 : vector<2x1xf32> to vector<2x32xf32>
    %466 = arith.subf %448, %465 : vector<2x32xf32>
    %cst_108 = arith.constant dense<0xFF800000> : vector<2xf32>
    %467 = vector.multi_reduction <maximumf>, %466, %cst_108 [1] : vector<2x32xf32> to vector<2xf32>
    %468 = vector.shape_cast %467 : vector<2xf32> to vector<2x1xf32>
    %469 = vector.broadcast %468 : vector<2x1xf32> to vector<2x32xf32>
    %470 = arith.cmpf oeq, %466, %469 : vector<2x32xf32>
    %c32_i32_109 = arith.constant 32 : i32
    %471 = vector.broadcast %c32_i32_109 : i32 to vector<2x32xi32>
    %472 = arith.select %470, %329, %471 : vector<2x32xi1>, vector<2x32xi32>
    %cst_110 = arith.constant dense<2147483647> : vector<2xi32>
    %473 = vector.multi_reduction <minsi>, %472, %cst_110 [1] : vector<2x32xi32> to vector<2xi32>
    %474 = vector.shape_cast %473 : vector<2xi32> to vector<2x1xi32>
    %475 = vector.broadcast %474 : vector<2x1xi32> to vector<2x32xi32>
    %476 = arith.cmpi eq, %329, %475 : vector<2x32xi32>
    %477 = arith.extui %476 : vector<2x32xi1> to vector<2x32xi32>
    %478 = arith.sitofp %477 : vector<2x32xi32> to vector<2x32xf32>
    %cst_111 = arith.constant dense<0.000000e+00> : vector<2x32xf32>
    %479 = tpu.matmul %478, %319, %cst_111 {dimension_numbers = #tpu.dot_dimension_numbers<[1], [0], [0], [1], [0, 0, 1, 1], [], []>} : vector<2x32xf32>, vector<32x32xf32>, vector<2x32xf32> -> vector<2x32xf32>
    %cst_112 = arith.constant 0.000000e+00 : f32
    %480 = vector.broadcast %cst_112 : f32 to vector<2x32xf32>
    %481 = arith.maximumf %479, %480 : vector<2x32xf32>
    %cst_113 = arith.constant dense<0.000000e+00> : vector<2x96xf32>
    %482 = tpu.matmul %481, %320, %cst_113 {dimension_numbers = #tpu.dot_dimension_numbers<[1], [0], [0], [1], [0, 0, 1, 1], [], []>} : vector<2x32xf32>, vector<32x96xf32>, vector<2x96xf32> -> vector<2x96xf32>
    %cst_114 = arith.constant dense<0.000000e+00> : vector<2x96xf32>
    %483 = tpu.matmul %445, %321, %cst_114 {dimension_numbers = #tpu.dot_dimension_numbers<[1], [0], [0], [1], [0, 0, 1, 1], [], []>} : vector<2x32xf32>, vector<32x96xf32>, vector<2x96xf32> -> vector<2x96xf32>
    %484 = vector.extract_strided_slice %482 {offsets = [0, 0], sizes = [2, 32], strides = [1, 1]} : vector<2x96xf32> to vector<2x32xf32>
    %485 = vector.extract_strided_slice %483 {offsets = [0, 0], sizes = [2, 32], strides = [1, 1]} : vector<2x96xf32> to vector<2x32xf32>
    %486 = arith.addf %484, %485 : vector<2x32xf32>
    %487 = vector.broadcast %323 : vector<1x32xf32> to vector<2x32xf32>
    %488 = arith.addf %486, %487 : vector<2x32xf32>
    %489 = arith.negf %488 : vector<2x32xf32>
    %490 = math.exp %489 : vector<2x32xf32>
    %cst_115 = arith.constant 1.000000e+00 : f32
    %491 = vector.broadcast %cst_115 : f32 to vector<2x32xf32>
    %492 = arith.addf %491, %490 : vector<2x32xf32>
    %493 = arith.divf %491, %492 : vector<2x32xf32>
    %494 = vector.extract_strided_slice %482 {offsets = [0, 32], sizes = [2, 32], strides = [1, 1]} : vector<2x96xf32> to vector<2x32xf32>
    %495 = vector.extract_strided_slice %483 {offsets = [0, 32], sizes = [2, 32], strides = [1, 1]} : vector<2x96xf32> to vector<2x32xf32>
    %496 = arith.addf %494, %495 : vector<2x32xf32>
    %497 = vector.broadcast %324 : vector<1x32xf32> to vector<2x32xf32>
    %498 = arith.addf %496, %497 : vector<2x32xf32>
    %499 = arith.negf %498 : vector<2x32xf32>
    %500 = math.exp %499 : vector<2x32xf32>
    %cst_116 = arith.constant 1.000000e+00 : f32
    %501 = vector.broadcast %cst_116 : f32 to vector<2x32xf32>
    %502 = arith.addf %501, %500 : vector<2x32xf32>
    %503 = arith.divf %501, %502 : vector<2x32xf32>
    %504 = vector.extract_strided_slice %482 {offsets = [0, 64], sizes = [2, 32], strides = [1, 1]} : vector<2x96xf32> to vector<2x32xf32>
    %505 = vector.broadcast %325 : vector<1x32xf32> to vector<2x32xf32>
    %506 = arith.addf %504, %505 : vector<2x32xf32>
    %507 = vector.extract_strided_slice %483 {offsets = [0, 64], sizes = [2, 32], strides = [1, 1]} : vector<2x96xf32> to vector<2x32xf32>
    %508 = vector.broadcast %326 : vector<1x32xf32> to vector<2x32xf32>
    %509 = arith.addf %507, %508 : vector<2x32xf32>
    %510 = arith.mulf %493, %509 : vector<2x32xf32>
    %511 = arith.addf %506, %510 : vector<2x32xf32>
    %512 = math.tanh %511 : vector<2x32xf32>
    %cst_117 = arith.constant 1.000000e+00 : f32
    %513 = vector.broadcast %cst_117 : f32 to vector<2x32xf32>
    %514 = arith.subf %513, %503 : vector<2x32xf32>
    %515 = arith.mulf %514, %512 : vector<2x32xf32>
    %516 = arith.mulf %503, %445 : vector<2x32xf32>
    %517 = arith.addf %515, %516 : vector<2x32xf32>
    %cst_118 = arith.constant dense<0.000000e+00> : vector<2x32xf32>
    %518 = tpu.matmul %517, %327, %cst_118 {dimension_numbers = #tpu.dot_dimension_numbers<[1], [0], [0], [1], [0, 0, 1, 1], [], []>} : vector<2x32xf32>, vector<32x32xf32>, vector<2x32xf32> -> vector<2x32xf32>
    %519 = vector.broadcast %328 : vector<1x32xf32> to vector<2x32xf32>
    %520 = arith.addf %518, %519 : vector<2x32xf32>
    %cst_119 = arith.constant dense<0xFF800000> : vector<2xf32>
    %521 = vector.multi_reduction <maximumf>, %520, %cst_119 [1] : vector<2x32xf32> to vector<2xf32>
    %cst_120 = arith.constant 0xFF800000 : f32
    %522 = vector.broadcast %cst_120 : f32 to vector<2xf32>
    %523 = arith.maximumf %522, %521 : vector<2xf32>
    %524 = vector.shape_cast %523 : vector<2xf32> to vector<2x1xf32>
    %525 = tpu.weird %524 : vector<2x1xf32> -> vector<2x1xi1>
    %cst_121 = arith.constant dense<true> : vector<2x1xi1>
    %526 = arith.xori %525, %cst_121 : vector<2x1xi1>
    %cst_122 = arith.constant 0.000000e+00 : f32
    %527 = vector.broadcast %cst_122 : f32 to vector<2x1xf32>
    %528 = arith.select %526, %524, %527 : vector<2x1xi1>, vector<2x1xf32>
    %529 = vector.broadcast %528 : vector<2x1xf32> to vector<2x32xf32>
    %530 = arith.subf %520, %529 : vector<2x32xf32>
    %531 = math.exp %530 : vector<2x32xf32>
    %cst_123 = arith.constant dense<0.000000e+00> : vector<2xf32>
    %532 = vector.multi_reduction <add>, %531, %cst_123 [1] : vector<2x32xf32> to vector<2xf32>
    %533 = vector.shape_cast %532 : vector<2xf32> to vector<2x1xf32>
    %534 = math.absf %533 : vector<2x1xf32>
    %535 = math.log %534 : vector<2x1xf32>
    %536 = arith.addf %535, %528 : vector<2x1xf32>
    %537 = vector.broadcast %536 : vector<2x1xf32> to vector<2x32xf32>
    %538 = arith.subf %520, %537 : vector<2x32xf32>
    %cst_124 = arith.constant dense<0xFF800000> : vector<2xf32>
    %539 = vector.multi_reduction <maximumf>, %538, %cst_124 [1] : vector<2x32xf32> to vector<2xf32>
    %540 = vector.shape_cast %539 : vector<2xf32> to vector<2x1xf32>
    %541 = vector.broadcast %540 : vector<2x1xf32> to vector<2x32xf32>
    %542 = arith.cmpf oeq, %538, %541 : vector<2x32xf32>
    %c32_i32_125 = arith.constant 32 : i32
    %543 = vector.broadcast %c32_i32_125 : i32 to vector<2x32xi32>
    %544 = arith.select %542, %329, %543 : vector<2x32xi1>, vector<2x32xi32>
    %cst_126 = arith.constant dense<2147483647> : vector<2xi32>
    %545 = vector.multi_reduction <minsi>, %544, %cst_126 [1] : vector<2x32xi32> to vector<2xi32>
    %546 = vector.shape_cast %545 : vector<2xi32> to vector<2x1xi32>
    %547 = vector.broadcast %546 : vector<2x1xi32> to vector<2x32xi32>
    %548 = arith.cmpi eq, %329, %547 : vector<2x32xi32>
    %549 = arith.extui %548 : vector<2x32xi1> to vector<2x32xi32>
    %550 = arith.sitofp %549 : vector<2x32xi32> to vector<2x32xf32>
    %cst_127 = arith.constant dense<0.000000e+00> : vector<2x32xf32>
    %551 = tpu.matmul %550, %319, %cst_127 {dimension_numbers = #tpu.dot_dimension_numbers<[1], [0], [0], [1], [0, 0, 1, 1], [], []>} : vector<2x32xf32>, vector<32x32xf32>, vector<2x32xf32> -> vector<2x32xf32>
    %cst_128 = arith.constant 0.000000e+00 : f32
    %552 = vector.broadcast %cst_128 : f32 to vector<2x32xf32>
    %553 = arith.maximumf %551, %552 : vector<2x32xf32>
    %cst_129 = arith.constant dense<0.000000e+00> : vector<2x96xf32>
    %554 = tpu.matmul %553, %320, %cst_129 {dimension_numbers = #tpu.dot_dimension_numbers<[1], [0], [0], [1], [0, 0, 1, 1], [], []>} : vector<2x32xf32>, vector<32x96xf32>, vector<2x96xf32> -> vector<2x96xf32>
    %cst_130 = arith.constant dense<0.000000e+00> : vector<2x96xf32>
    %555 = tpu.matmul %517, %321, %cst_130 {dimension_numbers = #tpu.dot_dimension_numbers<[1], [0], [0], [1], [0, 0, 1, 1], [], []>} : vector<2x32xf32>, vector<32x96xf32>, vector<2x96xf32> -> vector<2x96xf32>
    %556 = vector.extract_strided_slice %554 {offsets = [0, 0], sizes = [2, 32], strides = [1, 1]} : vector<2x96xf32> to vector<2x32xf32>
    %557 = vector.extract_strided_slice %555 {offsets = [0, 0], sizes = [2, 32], strides = [1, 1]} : vector<2x96xf32> to vector<2x32xf32>
    %558 = arith.addf %556, %557 : vector<2x32xf32>
    %559 = vector.broadcast %323 : vector<1x32xf32> to vector<2x32xf32>
    %560 = arith.addf %558, %559 : vector<2x32xf32>
    %561 = arith.negf %560 : vector<2x32xf32>
    %562 = math.exp %561 : vector<2x32xf32>
    %cst_131 = arith.constant 1.000000e+00 : f32
    %563 = vector.broadcast %cst_131 : f32 to vector<2x32xf32>
    %564 = arith.addf %563, %562 : vector<2x32xf32>
    %565 = arith.divf %563, %564 : vector<2x32xf32>
    %566 = vector.extract_strided_slice %554 {offsets = [0, 32], sizes = [2, 32], strides = [1, 1]} : vector<2x96xf32> to vector<2x32xf32>
    %567 = vector.extract_strided_slice %555 {offsets = [0, 32], sizes = [2, 32], strides = [1, 1]} : vector<2x96xf32> to vector<2x32xf32>
    %568 = arith.addf %566, %567 : vector<2x32xf32>
    %569 = vector.broadcast %324 : vector<1x32xf32> to vector<2x32xf32>
    %570 = arith.addf %568, %569 : vector<2x32xf32>
    %571 = arith.negf %570 : vector<2x32xf32>
    %572 = math.exp %571 : vector<2x32xf32>
    %cst_132 = arith.constant 1.000000e+00 : f32
    %573 = vector.broadcast %cst_132 : f32 to vector<2x32xf32>
    %574 = arith.addf %573, %572 : vector<2x32xf32>
    %575 = arith.divf %573, %574 : vector<2x32xf32>
    %576 = vector.extract_strided_slice %554 {offsets = [0, 64], sizes = [2, 32], strides = [1, 1]} : vector<2x96xf32> to vector<2x32xf32>
    %577 = vector.broadcast %325 : vector<1x32xf32> to vector<2x32xf32>
    %578 = arith.addf %576, %577 : vector<2x32xf32>
    %579 = vector.extract_strided_slice %555 {offsets = [0, 64], sizes = [2, 32], strides = [1, 1]} : vector<2x96xf32> to vector<2x32xf32>
    %580 = vector.broadcast %326 : vector<1x32xf32> to vector<2x32xf32>
    %581 = arith.addf %579, %580 : vector<2x32xf32>
    %582 = arith.mulf %565, %581 : vector<2x32xf32>
    %583 = arith.addf %578, %582 : vector<2x32xf32>
    %584 = math.tanh %583 : vector<2x32xf32>
    %cst_133 = arith.constant 1.000000e+00 : f32
    %585 = vector.broadcast %cst_133 : f32 to vector<2x32xf32>
    %586 = arith.subf %585, %575 : vector<2x32xf32>
    %587 = arith.mulf %586, %584 : vector<2x32xf32>
    %588 = arith.mulf %575, %517 : vector<2x32xf32>
    %589 = arith.addf %587, %588 : vector<2x32xf32>
    %cst_134 = arith.constant dense<0.000000e+00> : vector<2x32xf32>
    %590 = tpu.matmul %589, %327, %cst_134 {dimension_numbers = #tpu.dot_dimension_numbers<[1], [0], [0], [1], [0, 0, 1, 1], [], []>} : vector<2x32xf32>, vector<32x32xf32>, vector<2x32xf32> -> vector<2x32xf32>
    %591 = vector.broadcast %328 : vector<1x32xf32> to vector<2x32xf32>
    %592 = arith.addf %590, %591 : vector<2x32xf32>
    %cst_135 = arith.constant dense<0xFF800000> : vector<2xf32>
    %593 = vector.multi_reduction <maximumf>, %592, %cst_135 [1] : vector<2x32xf32> to vector<2xf32>
    %cst_136 = arith.constant 0xFF800000 : f32
    %594 = vector.broadcast %cst_136 : f32 to vector<2xf32>
    %595 = arith.maximumf %594, %593 : vector<2xf32>
    %596 = vector.shape_cast %595 : vector<2xf32> to vector<2x1xf32>
    %597 = tpu.weird %596 : vector<2x1xf32> -> vector<2x1xi1>
    %cst_137 = arith.constant dense<true> : vector<2x1xi1>
    %598 = arith.xori %597, %cst_137 : vector<2x1xi1>
    %cst_138 = arith.constant 0.000000e+00 : f32
    %599 = vector.broadcast %cst_138 : f32 to vector<2x1xf32>
    %600 = arith.select %598, %596, %599 : vector<2x1xi1>, vector<2x1xf32>
    %601 = vector.broadcast %600 : vector<2x1xf32> to vector<2x32xf32>
    %602 = arith.subf %592, %601 : vector<2x32xf32>
    %603 = math.exp %602 : vector<2x32xf32>
    %cst_139 = arith.constant dense<0.000000e+00> : vector<2xf32>
    %604 = vector.multi_reduction <add>, %603, %cst_139 [1] : vector<2x32xf32> to vector<2xf32>
    %605 = vector.shape_cast %604 : vector<2xf32> to vector<2x1xf32>
    %606 = math.absf %605 : vector<2x1xf32>
    %607 = math.log %606 : vector<2x1xf32>
    %608 = arith.addf %607, %600 : vector<2x1xf32>
    %609 = vector.broadcast %608 : vector<2x1xf32> to vector<2x32xf32>
    %610 = arith.subf %592, %609 : vector<2x32xf32>
    %cst_140 = arith.constant dense<0xFF800000> : vector<2xf32>
    %611 = vector.multi_reduction <maximumf>, %610, %cst_140 [1] : vector<2x32xf32> to vector<2xf32>
    %612 = vector.shape_cast %611 : vector<2xf32> to vector<2x1xf32>
    %613 = vector.broadcast %612 : vector<2x1xf32> to vector<2x32xf32>
    %614 = arith.cmpf oeq, %610, %613 : vector<2x32xf32>
    %c32_i32_141 = arith.constant 32 : i32
    %615 = vector.broadcast %c32_i32_141 : i32 to vector<2x32xi32>
    %616 = arith.select %614, %329, %615 : vector<2x32xi1>, vector<2x32xi32>
    %cst_142 = arith.constant dense<2147483647> : vector<2xi32>
    %617 = vector.multi_reduction <minsi>, %616, %cst_142 [1] : vector<2x32xi32> to vector<2xi32>
    %618 = vector.shape_cast %617 : vector<2xi32> to vector<2x1xi32>
    %619 = vector.broadcast %618 : vector<2x1xi32> to vector<2x32xi32>
    %620 = arith.cmpi eq, %329, %619 : vector<2x32xi32>
    %621 = arith.extui %620 : vector<2x32xi1> to vector<2x32xi32>
    %622 = arith.sitofp %621 : vector<2x32xi32> to vector<2x32xf32>
    %cst_143 = arith.constant dense<0.000000e+00> : vector<2x32xf32>
    %623 = tpu.matmul %622, %319, %cst_143 {dimension_numbers = #tpu.dot_dimension_numbers<[1], [0], [0], [1], [0, 0, 1, 1], [], []>} : vector<2x32xf32>, vector<32x32xf32>, vector<2x32xf32> -> vector<2x32xf32>
    %cst_144 = arith.constant 0.000000e+00 : f32
    %624 = vector.broadcast %cst_144 : f32 to vector<2x32xf32>
    %625 = arith.maximumf %623, %624 : vector<2x32xf32>
    %cst_145 = arith.constant dense<0.000000e+00> : vector<2x96xf32>
    %626 = tpu.matmul %625, %320, %cst_145 {dimension_numbers = #tpu.dot_dimension_numbers<[1], [0], [0], [1], [0, 0, 1, 1], [], []>} : vector<2x32xf32>, vector<32x96xf32>, vector<2x96xf32> -> vector<2x96xf32>
    %cst_146 = arith.constant dense<0.000000e+00> : vector<2x96xf32>
    %627 = tpu.matmul %589, %321, %cst_146 {dimension_numbers = #tpu.dot_dimension_numbers<[1], [0], [0], [1], [0, 0, 1, 1], [], []>} : vector<2x32xf32>, vector<32x96xf32>, vector<2x96xf32> -> vector<2x96xf32>
    %628 = vector.extract_strided_slice %626 {offsets = [0, 0], sizes = [2, 32], strides = [1, 1]} : vector<2x96xf32> to vector<2x32xf32>
    %629 = vector.extract_strided_slice %627 {offsets = [0, 0], sizes = [2, 32], strides = [1, 1]} : vector<2x96xf32> to vector<2x32xf32>
    %630 = arith.addf %628, %629 : vector<2x32xf32>
    %631 = vector.broadcast %323 : vector<1x32xf32> to vector<2x32xf32>
    %632 = arith.addf %630, %631 : vector<2x32xf32>
    %633 = arith.negf %632 : vector<2x32xf32>
    %634 = math.exp %633 : vector<2x32xf32>
    %cst_147 = arith.constant 1.000000e+00 : f32
    %635 = vector.broadcast %cst_147 : f32 to vector<2x32xf32>
    %636 = arith.addf %635, %634 : vector<2x32xf32>
    %637 = arith.divf %635, %636 : vector<2x32xf32>
    %638 = vector.extract_strided_slice %626 {offsets = [0, 32], sizes = [2, 32], strides = [1, 1]} : vector<2x96xf32> to vector<2x32xf32>
    %639 = vector.extract_strided_slice %627 {offsets = [0, 32], sizes = [2, 32], strides = [1, 1]} : vector<2x96xf32> to vector<2x32xf32>
    %640 = arith.addf %638, %639 : vector<2x32xf32>
    %641 = vector.broadcast %324 : vector<1x32xf32> to vector<2x32xf32>
    %642 = arith.addf %640, %641 : vector<2x32xf32>
    %643 = arith.negf %642 : vector<2x32xf32>
    %644 = math.exp %643 : vector<2x32xf32>
    %cst_148 = arith.constant 1.000000e+00 : f32
    %645 = vector.broadcast %cst_148 : f32 to vector<2x32xf32>
    %646 = arith.addf %645, %644 : vector<2x32xf32>
    %647 = arith.divf %645, %646 : vector<2x32xf32>
    %648 = vector.extract_strided_slice %626 {offsets = [0, 64], sizes = [2, 32], strides = [1, 1]} : vector<2x96xf32> to vector<2x32xf32>
    %649 = vector.broadcast %325 : vector<1x32xf32> to vector<2x32xf32>
    %650 = arith.addf %648, %649 : vector<2x32xf32>
    %651 = vector.extract_strided_slice %627 {offsets = [0, 64], sizes = [2, 32], strides = [1, 1]} : vector<2x96xf32> to vector<2x32xf32>
    %652 = vector.broadcast %326 : vector<1x32xf32> to vector<2x32xf32>
    %653 = arith.addf %651, %652 : vector<2x32xf32>
    %654 = arith.mulf %637, %653 : vector<2x32xf32>
    %655 = arith.addf %650, %654 : vector<2x32xf32>
    %656 = math.tanh %655 : vector<2x32xf32>
    %cst_149 = arith.constant 1.000000e+00 : f32
    %657 = vector.broadcast %cst_149 : f32 to vector<2x32xf32>
    %658 = arith.subf %657, %647 : vector<2x32xf32>
    %659 = arith.mulf %658, %656 : vector<2x32xf32>
    %660 = arith.mulf %647, %589 : vector<2x32xf32>
    %661 = arith.addf %659, %660 : vector<2x32xf32>
    %cst_150 = arith.constant dense<0.000000e+00> : vector<2x32xf32>
    %662 = tpu.matmul %661, %327, %cst_150 {dimension_numbers = #tpu.dot_dimension_numbers<[1], [0], [0], [1], [0, 0, 1, 1], [], []>} : vector<2x32xf32>, vector<32x32xf32>, vector<2x32xf32> -> vector<2x32xf32>
    %663 = vector.broadcast %328 : vector<1x32xf32> to vector<2x32xf32>
    %664 = arith.addf %662, %663 : vector<2x32xf32>
    %cst_151 = arith.constant dense<0xFF800000> : vector<2xf32>
    %665 = vector.multi_reduction <maximumf>, %664, %cst_151 [1] : vector<2x32xf32> to vector<2xf32>
    %cst_152 = arith.constant 0xFF800000 : f32
    %666 = vector.broadcast %cst_152 : f32 to vector<2xf32>
    %667 = arith.maximumf %666, %665 : vector<2xf32>
    %668 = vector.shape_cast %667 : vector<2xf32> to vector<2x1xf32>
    %669 = tpu.weird %668 : vector<2x1xf32> -> vector<2x1xi1>
    %cst_153 = arith.constant dense<true> : vector<2x1xi1>
    %670 = arith.xori %669, %cst_153 : vector<2x1xi1>
    %cst_154 = arith.constant 0.000000e+00 : f32
    %671 = vector.broadcast %cst_154 : f32 to vector<2x1xf32>
    %672 = arith.select %670, %668, %671 : vector<2x1xi1>, vector<2x1xf32>
    %673 = vector.broadcast %672 : vector<2x1xf32> to vector<2x32xf32>
    %674 = arith.subf %664, %673 : vector<2x32xf32>
    %675 = math.exp %674 : vector<2x32xf32>
    %cst_155 = arith.constant dense<0.000000e+00> : vector<2xf32>
    %676 = vector.multi_reduction <add>, %675, %cst_155 [1] : vector<2x32xf32> to vector<2xf32>
    %677 = vector.shape_cast %676 : vector<2xf32> to vector<2x1xf32>
    %678 = math.absf %677 : vector<2x1xf32>
    %679 = math.log %678 : vector<2x1xf32>
    %680 = arith.addf %679, %672 : vector<2x1xf32>
    %681 = vector.broadcast %680 : vector<2x1xf32> to vector<2x32xf32>
    %682 = arith.subf %664, %681 : vector<2x32xf32>
    %cst_156 = arith.constant dense<0xFF800000> : vector<2xf32>
    %683 = vector.multi_reduction <maximumf>, %682, %cst_156 [1] : vector<2x32xf32> to vector<2xf32>
    %684 = vector.shape_cast %683 : vector<2xf32> to vector<2x1xf32>
    %685 = vector.broadcast %684 : vector<2x1xf32> to vector<2x32xf32>
    %686 = arith.cmpf oeq, %682, %685 : vector<2x32xf32>
    %c32_i32_157 = arith.constant 32 : i32
    %687 = vector.broadcast %c32_i32_157 : i32 to vector<2x32xi32>
    %688 = arith.select %686, %329, %687 : vector<2x32xi1>, vector<2x32xi32>
    %cst_158 = arith.constant dense<2147483647> : vector<2xi32>
    %689 = vector.multi_reduction <minsi>, %688, %cst_158 [1] : vector<2x32xi32> to vector<2xi32>
    %690 = vector.shape_cast %689 : vector<2xi32> to vector<2x1xi32>
    %691 = vector.broadcast %690 : vector<2x1xi32> to vector<2x32xi32>
    %692 = arith.cmpi eq, %329, %691 : vector<2x32xi32>
    %693 = arith.extui %692 : vector<2x32xi1> to vector<2x32xi32>
    %694 = arith.sitofp %693 : vector<2x32xi32> to vector<2x32xf32>
    %cst_159 = arith.constant dense<0.000000e+00> : vector<2x32xf32>
    %695 = tpu.matmul %694, %319, %cst_159 {dimension_numbers = #tpu.dot_dimension_numbers<[1], [0], [0], [1], [0, 0, 1, 1], [], []>} : vector<2x32xf32>, vector<32x32xf32>, vector<2x32xf32> -> vector<2x32xf32>
    %cst_160 = arith.constant 0.000000e+00 : f32
    %696 = vector.broadcast %cst_160 : f32 to vector<2x32xf32>
    %697 = arith.maximumf %695, %696 : vector<2x32xf32>
    %cst_161 = arith.constant dense<0.000000e+00> : vector<2x96xf32>
    %698 = tpu.matmul %697, %320, %cst_161 {dimension_numbers = #tpu.dot_dimension_numbers<[1], [0], [0], [1], [0, 0, 1, 1], [], []>} : vector<2x32xf32>, vector<32x96xf32>, vector<2x96xf32> -> vector<2x96xf32>
    %cst_162 = arith.constant dense<0.000000e+00> : vector<2x96xf32>
    %699 = tpu.matmul %661, %321, %cst_162 {dimension_numbers = #tpu.dot_dimension_numbers<[1], [0], [0], [1], [0, 0, 1, 1], [], []>} : vector<2x32xf32>, vector<32x96xf32>, vector<2x96xf32> -> vector<2x96xf32>
    %700 = vector.extract_strided_slice %698 {offsets = [0, 0], sizes = [2, 32], strides = [1, 1]} : vector<2x96xf32> to vector<2x32xf32>
    %701 = vector.extract_strided_slice %699 {offsets = [0, 0], sizes = [2, 32], strides = [1, 1]} : vector<2x96xf32> to vector<2x32xf32>
    %702 = arith.addf %700, %701 : vector<2x32xf32>
    %703 = vector.broadcast %323 : vector<1x32xf32> to vector<2x32xf32>
    %704 = arith.addf %702, %703 : vector<2x32xf32>
    %705 = arith.negf %704 : vector<2x32xf32>
    %706 = math.exp %705 : vector<2x32xf32>
    %cst_163 = arith.constant 1.000000e+00 : f32
    %707 = vector.broadcast %cst_163 : f32 to vector<2x32xf32>
    %708 = arith.addf %707, %706 : vector<2x32xf32>
    %709 = arith.divf %707, %708 : vector<2x32xf32>
    %710 = vector.extract_strided_slice %698 {offsets = [0, 32], sizes = [2, 32], strides = [1, 1]} : vector<2x96xf32> to vector<2x32xf32>
    %711 = vector.extract_strided_slice %699 {offsets = [0, 32], sizes = [2, 32], strides = [1, 1]} : vector<2x96xf32> to vector<2x32xf32>
    %712 = arith.addf %710, %711 : vector<2x32xf32>
    %713 = vector.broadcast %324 : vector<1x32xf32> to vector<2x32xf32>
    %714 = arith.addf %712, %713 : vector<2x32xf32>
    %715 = arith.negf %714 : vector<2x32xf32>
    %716 = math.exp %715 : vector<2x32xf32>
    %cst_164 = arith.constant 1.000000e+00 : f32
    %717 = vector.broadcast %cst_164 : f32 to vector<2x32xf32>
    %718 = arith.addf %717, %716 : vector<2x32xf32>
    %719 = arith.divf %717, %718 : vector<2x32xf32>
    %720 = vector.extract_strided_slice %698 {offsets = [0, 64], sizes = [2, 32], strides = [1, 1]} : vector<2x96xf32> to vector<2x32xf32>
    %721 = vector.broadcast %325 : vector<1x32xf32> to vector<2x32xf32>
    %722 = arith.addf %720, %721 : vector<2x32xf32>
    %723 = vector.extract_strided_slice %699 {offsets = [0, 64], sizes = [2, 32], strides = [1, 1]} : vector<2x96xf32> to vector<2x32xf32>
    %724 = vector.broadcast %326 : vector<1x32xf32> to vector<2x32xf32>
    %725 = arith.addf %723, %724 : vector<2x32xf32>
    %726 = arith.mulf %709, %725 : vector<2x32xf32>
    %727 = arith.addf %722, %726 : vector<2x32xf32>
    %728 = math.tanh %727 : vector<2x32xf32>
    %cst_165 = arith.constant 1.000000e+00 : f32
    %729 = vector.broadcast %cst_165 : f32 to vector<2x32xf32>
    %730 = arith.subf %729, %719 : vector<2x32xf32>
    %731 = arith.mulf %730, %728 : vector<2x32xf32>
    %732 = arith.mulf %719, %661 : vector<2x32xf32>
    %733 = arith.addf %731, %732 : vector<2x32xf32>
    %cst_166 = arith.constant dense<0.000000e+00> : vector<2x32xf32>
    %734 = tpu.matmul %733, %327, %cst_166 {dimension_numbers = #tpu.dot_dimension_numbers<[1], [0], [0], [1], [0, 0, 1, 1], [], []>} : vector<2x32xf32>, vector<32x32xf32>, vector<2x32xf32> -> vector<2x32xf32>
    %735 = vector.broadcast %328 : vector<1x32xf32> to vector<2x32xf32>
    %736 = arith.addf %734, %735 : vector<2x32xf32>
    %cst_167 = arith.constant dense<0xFF800000> : vector<2xf32>
    %737 = vector.multi_reduction <maximumf>, %736, %cst_167 [1] : vector<2x32xf32> to vector<2xf32>
    %cst_168 = arith.constant 0xFF800000 : f32
    %738 = vector.broadcast %cst_168 : f32 to vector<2xf32>
    %739 = arith.maximumf %738, %737 : vector<2xf32>
    %740 = vector.shape_cast %739 : vector<2xf32> to vector<2x1xf32>
    %741 = tpu.weird %740 : vector<2x1xf32> -> vector<2x1xi1>
    %cst_169 = arith.constant dense<true> : vector<2x1xi1>
    %742 = arith.xori %741, %cst_169 : vector<2x1xi1>
    %cst_170 = arith.constant 0.000000e+00 : f32
    %743 = vector.broadcast %cst_170 : f32 to vector<2x1xf32>
    %744 = arith.select %742, %740, %743 : vector<2x1xi1>, vector<2x1xf32>
    %745 = vector.broadcast %744 : vector<2x1xf32> to vector<2x32xf32>
    %746 = arith.subf %736, %745 : vector<2x32xf32>
    %747 = math.exp %746 : vector<2x32xf32>
    %cst_171 = arith.constant dense<0.000000e+00> : vector<2xf32>
    %748 = vector.multi_reduction <add>, %747, %cst_171 [1] : vector<2x32xf32> to vector<2xf32>
    %749 = vector.shape_cast %748 : vector<2xf32> to vector<2x1xf32>
    %750 = math.absf %749 : vector<2x1xf32>
    %751 = math.log %750 : vector<2x1xf32>
    %752 = arith.addf %751, %744 : vector<2x1xf32>
    %753 = vector.broadcast %752 : vector<2x1xf32> to vector<2x32xf32>
    %754 = arith.subf %736, %753 : vector<2x32xf32>
    %cst_172 = arith.constant dense<0xFF800000> : vector<2xf32>
    %755 = vector.multi_reduction <maximumf>, %754, %cst_172 [1] : vector<2x32xf32> to vector<2xf32>
    %756 = vector.shape_cast %755 : vector<2xf32> to vector<2x1xf32>
    %757 = vector.broadcast %756 : vector<2x1xf32> to vector<2x32xf32>
    %758 = arith.cmpf oeq, %754, %757 : vector<2x32xf32>
    %c32_i32_173 = arith.constant 32 : i32
    %759 = vector.broadcast %c32_i32_173 : i32 to vector<2x32xi32>
    %760 = arith.select %758, %329, %759 : vector<2x32xi1>, vector<2x32xi32>
    %cst_174 = arith.constant dense<2147483647> : vector<2xi32>
    %761 = vector.multi_reduction <minsi>, %760, %cst_174 [1] : vector<2x32xi32> to vector<2xi32>
    %762 = vector.shape_cast %761 : vector<2xi32> to vector<2x1xi32>
    %763 = vector.broadcast %762 : vector<2x1xi32> to vector<2x32xi32>
    %764 = arith.cmpi eq, %329, %763 : vector<2x32xi32>
    %765 = arith.extui %764 : vector<2x32xi1> to vector<2x32xi32>
    %766 = arith.sitofp %765 : vector<2x32xi32> to vector<2x32xf32>
    %cst_175 = arith.constant dense<0.000000e+00> : vector<2x32xf32>
    %767 = tpu.matmul %766, %319, %cst_175 {dimension_numbers = #tpu.dot_dimension_numbers<[1], [0], [0], [1], [0, 0, 1, 1], [], []>} : vector<2x32xf32>, vector<32x32xf32>, vector<2x32xf32> -> vector<2x32xf32>
    %cst_176 = arith.constant 0.000000e+00 : f32
    %768 = vector.broadcast %cst_176 : f32 to vector<2x32xf32>
    %769 = arith.maximumf %767, %768 : vector<2x32xf32>
    %cst_177 = arith.constant dense<0.000000e+00> : vector<2x96xf32>
    %770 = tpu.matmul %769, %320, %cst_177 {dimension_numbers = #tpu.dot_dimension_numbers<[1], [0], [0], [1], [0, 0, 1, 1], [], []>} : vector<2x32xf32>, vector<32x96xf32>, vector<2x96xf32> -> vector<2x96xf32>
    %cst_178 = arith.constant dense<0.000000e+00> : vector<2x96xf32>
    %771 = tpu.matmul %733, %321, %cst_178 {dimension_numbers = #tpu.dot_dimension_numbers<[1], [0], [0], [1], [0, 0, 1, 1], [], []>} : vector<2x32xf32>, vector<32x96xf32>, vector<2x96xf32> -> vector<2x96xf32>
    %772 = vector.extract_strided_slice %770 {offsets = [0, 0], sizes = [2, 32], strides = [1, 1]} : vector<2x96xf32> to vector<2x32xf32>
    %773 = vector.extract_strided_slice %771 {offsets = [0, 0], sizes = [2, 32], strides = [1, 1]} : vector<2x96xf32> to vector<2x32xf32>
    %774 = arith.addf %772, %773 : vector<2x32xf32>
    %775 = vector.broadcast %323 : vector<1x32xf32> to vector<2x32xf32>
    %776 = arith.addf %774, %775 : vector<2x32xf32>
    %777 = arith.negf %776 : vector<2x32xf32>
    %778 = math.exp %777 : vector<2x32xf32>
    %cst_179 = arith.constant 1.000000e+00 : f32
    %779 = vector.broadcast %cst_179 : f32 to vector<2x32xf32>
    %780 = arith.addf %779, %778 : vector<2x32xf32>
    %781 = arith.divf %779, %780 : vector<2x32xf32>
    %782 = vector.extract_strided_slice %770 {offsets = [0, 32], sizes = [2, 32], strides = [1, 1]} : vector<2x96xf32> to vector<2x32xf32>
    %783 = vector.extract_strided_slice %771 {offsets = [0, 32], sizes = [2, 32], strides = [1, 1]} : vector<2x96xf32> to vector<2x32xf32>
    %784 = arith.addf %782, %783 : vector<2x32xf32>
    %785 = vector.broadcast %324 : vector<1x32xf32> to vector<2x32xf32>
    %786 = arith.addf %784, %785 : vector<2x32xf32>
    %787 = arith.negf %786 : vector<2x32xf32>
    %788 = math.exp %787 : vector<2x32xf32>
    %cst_180 = arith.constant 1.000000e+00 : f32
    %789 = vector.broadcast %cst_180 : f32 to vector<2x32xf32>
    %790 = arith.addf %789, %788 : vector<2x32xf32>
    %791 = arith.divf %789, %790 : vector<2x32xf32>
    %792 = vector.extract_strided_slice %770 {offsets = [0, 64], sizes = [2, 32], strides = [1, 1]} : vector<2x96xf32> to vector<2x32xf32>
    %793 = vector.broadcast %325 : vector<1x32xf32> to vector<2x32xf32>
    %794 = arith.addf %792, %793 : vector<2x32xf32>
    %795 = vector.extract_strided_slice %771 {offsets = [0, 64], sizes = [2, 32], strides = [1, 1]} : vector<2x96xf32> to vector<2x32xf32>
    %796 = vector.broadcast %326 : vector<1x32xf32> to vector<2x32xf32>
    %797 = arith.addf %795, %796 : vector<2x32xf32>
    %798 = arith.mulf %781, %797 : vector<2x32xf32>
    %799 = arith.addf %794, %798 : vector<2x32xf32>
    %800 = math.tanh %799 : vector<2x32xf32>
    %cst_181 = arith.constant 1.000000e+00 : f32
    %801 = vector.broadcast %cst_181 : f32 to vector<2x32xf32>
    %802 = arith.subf %801, %791 : vector<2x32xf32>
    %803 = arith.mulf %802, %800 : vector<2x32xf32>
    %804 = arith.mulf %791, %733 : vector<2x32xf32>
    %805 = arith.addf %803, %804 : vector<2x32xf32>
    %cst_182 = arith.constant dense<0.000000e+00> : vector<2x32xf32>
    %806 = tpu.matmul %805, %327, %cst_182 {dimension_numbers = #tpu.dot_dimension_numbers<[1], [0], [0], [1], [0, 0, 1, 1], [], []>} : vector<2x32xf32>, vector<32x32xf32>, vector<2x32xf32> -> vector<2x32xf32>
    %807 = vector.broadcast %328 : vector<1x32xf32> to vector<2x32xf32>
    %808 = arith.addf %806, %807 : vector<2x32xf32>
    %cst_183 = arith.constant dense<0xFF800000> : vector<2xf32>
    %809 = vector.multi_reduction <maximumf>, %808, %cst_183 [1] : vector<2x32xf32> to vector<2xf32>
    %cst_184 = arith.constant 0xFF800000 : f32
    %810 = vector.broadcast %cst_184 : f32 to vector<2xf32>
    %811 = arith.maximumf %810, %809 : vector<2xf32>
    %812 = vector.shape_cast %811 : vector<2xf32> to vector<2x1xf32>
    %813 = tpu.weird %812 : vector<2x1xf32> -> vector<2x1xi1>
    %cst_185 = arith.constant dense<true> : vector<2x1xi1>
    %814 = arith.xori %813, %cst_185 : vector<2x1xi1>
    %cst_186 = arith.constant 0.000000e+00 : f32
    %815 = vector.broadcast %cst_186 : f32 to vector<2x1xf32>
    %816 = arith.select %814, %812, %815 : vector<2x1xi1>, vector<2x1xf32>
    %817 = vector.broadcast %816 : vector<2x1xf32> to vector<2x32xf32>
    %818 = arith.subf %808, %817 : vector<2x32xf32>
    %819 = math.exp %818 : vector<2x32xf32>
    %cst_187 = arith.constant dense<0.000000e+00> : vector<2xf32>
    %820 = vector.multi_reduction <add>, %819, %cst_187 [1] : vector<2x32xf32> to vector<2xf32>
    %821 = vector.shape_cast %820 : vector<2xf32> to vector<2x1xf32>
    %822 = math.absf %821 : vector<2x1xf32>
    %823 = math.log %822 : vector<2x1xf32>
    %824 = arith.addf %823, %816 : vector<2x1xf32>
    %825 = vector.broadcast %824 : vector<2x1xf32> to vector<2x32xf32>
    %826 = arith.subf %808, %825 : vector<2x32xf32>
    %cst_188 = arith.constant dense<0xFF800000> : vector<2xf32>
    %827 = vector.multi_reduction <maximumf>, %826, %cst_188 [1] : vector<2x32xf32> to vector<2xf32>
    %828 = vector.shape_cast %827 : vector<2xf32> to vector<2x1xf32>
    %829 = vector.broadcast %828 : vector<2x1xf32> to vector<2x32xf32>
    %830 = arith.cmpf oeq, %826, %829 : vector<2x32xf32>
    %c32_i32_189 = arith.constant 32 : i32
    %831 = vector.broadcast %c32_i32_189 : i32 to vector<2x32xi32>
    %832 = arith.select %830, %329, %831 : vector<2x32xi1>, vector<2x32xi32>
    %cst_190 = arith.constant dense<2147483647> : vector<2xi32>
    %833 = vector.multi_reduction <minsi>, %832, %cst_190 [1] : vector<2x32xi32> to vector<2xi32>
    %834 = vector.shape_cast %833 : vector<2xi32> to vector<2x1xi32>
    %835 = vector.broadcast %834 : vector<2x1xi32> to vector<2x32xi32>
    %836 = arith.cmpi eq, %329, %835 : vector<2x32xi32>
    %837 = arith.extui %836 : vector<2x32xi1> to vector<2x32xi32>
    %838 = arith.sitofp %837 : vector<2x32xi32> to vector<2x32xf32>
    %cst_191 = arith.constant dense<0.000000e+00> : vector<2x32xf32>
    %839 = tpu.matmul %838, %319, %cst_191 {dimension_numbers = #tpu.dot_dimension_numbers<[1], [0], [0], [1], [0, 0, 1, 1], [], []>} : vector<2x32xf32>, vector<32x32xf32>, vector<2x32xf32> -> vector<2x32xf32>
    %cst_192 = arith.constant 0.000000e+00 : f32
    %840 = vector.broadcast %cst_192 : f32 to vector<2x32xf32>
    %841 = arith.maximumf %839, %840 : vector<2x32xf32>
    %cst_193 = arith.constant dense<0.000000e+00> : vector<2x96xf32>
    %842 = tpu.matmul %841, %320, %cst_193 {dimension_numbers = #tpu.dot_dimension_numbers<[1], [0], [0], [1], [0, 0, 1, 1], [], []>} : vector<2x32xf32>, vector<32x96xf32>, vector<2x96xf32> -> vector<2x96xf32>
    %cst_194 = arith.constant dense<0.000000e+00> : vector<2x96xf32>
    %843 = tpu.matmul %805, %321, %cst_194 {dimension_numbers = #tpu.dot_dimension_numbers<[1], [0], [0], [1], [0, 0, 1, 1], [], []>} : vector<2x32xf32>, vector<32x96xf32>, vector<2x96xf32> -> vector<2x96xf32>
    %844 = vector.extract_strided_slice %842 {offsets = [0, 0], sizes = [2, 32], strides = [1, 1]} : vector<2x96xf32> to vector<2x32xf32>
    %845 = vector.extract_strided_slice %843 {offsets = [0, 0], sizes = [2, 32], strides = [1, 1]} : vector<2x96xf32> to vector<2x32xf32>
    %846 = arith.addf %844, %845 : vector<2x32xf32>
    %847 = vector.broadcast %323 : vector<1x32xf32> to vector<2x32xf32>
    %848 = arith.addf %846, %847 : vector<2x32xf32>
    %849 = arith.negf %848 : vector<2x32xf32>
    %850 = math.exp %849 : vector<2x32xf32>
    %cst_195 = arith.constant 1.000000e+00 : f32
    %851 = vector.broadcast %cst_195 : f32 to vector<2x32xf32>
    %852 = arith.addf %851, %850 : vector<2x32xf32>
    %853 = arith.divf %851, %852 : vector<2x32xf32>
    %854 = vector.extract_strided_slice %842 {offsets = [0, 32], sizes = [2, 32], strides = [1, 1]} : vector<2x96xf32> to vector<2x32xf32>
    %855 = vector.extract_strided_slice %843 {offsets = [0, 32], sizes = [2, 32], strides = [1, 1]} : vector<2x96xf32> to vector<2x32xf32>
    %856 = arith.addf %854, %855 : vector<2x32xf32>
    %857 = vector.broadcast %324 : vector<1x32xf32> to vector<2x32xf32>
    %858 = arith.addf %856, %857 : vector<2x32xf32>
    %859 = arith.negf %858 : vector<2x32xf32>
    %860 = math.exp %859 : vector<2x32xf32>
    %cst_196 = arith.constant 1.000000e+00 : f32
    %861 = vector.broadcast %cst_196 : f32 to vector<2x32xf32>
    %862 = arith.addf %861, %860 : vector<2x32xf32>
    %863 = arith.divf %861, %862 : vector<2x32xf32>
    %864 = vector.extract_strided_slice %842 {offsets = [0, 64], sizes = [2, 32], strides = [1, 1]} : vector<2x96xf32> to vector<2x32xf32>
    %865 = vector.broadcast %325 : vector<1x32xf32> to vector<2x32xf32>
    %866 = arith.addf %864, %865 : vector<2x32xf32>
    %867 = vector.extract_strided_slice %843 {offsets = [0, 64], sizes = [2, 32], strides = [1, 1]} : vector<2x96xf32> to vector<2x32xf32>
    %868 = vector.broadcast %326 : vector<1x32xf32> to vector<2x32xf32>
    %869 = arith.addf %867, %868 : vector<2x32xf32>
    %870 = arith.mulf %853, %869 : vector<2x32xf32>
    %871 = arith.addf %866, %870 : vector<2x32xf32>
    %872 = math.tanh %871 : vector<2x32xf32>
    %cst_197 = arith.constant 1.000000e+00 : f32
    %873 = vector.broadcast %cst_197 : f32 to vector<2x32xf32>
    %874 = arith.subf %873, %863 : vector<2x32xf32>
    %875 = arith.mulf %874, %872 : vector<2x32xf32>
    %876 = arith.mulf %863, %805 : vector<2x32xf32>
    %877 = arith.addf %875, %876 : vector<2x32xf32>
    %cst_198 = arith.constant dense<0.000000e+00> : vector<2x32xf32>
    %878 = tpu.matmul %877, %327, %cst_198 {dimension_numbers = #tpu.dot_dimension_numbers<[1], [0], [0], [1], [0, 0, 1, 1], [], []>} : vector<2x32xf32>, vector<32x32xf32>, vector<2x32xf32> -> vector<2x32xf32>
    %879 = vector.broadcast %328 : vector<1x32xf32> to vector<2x32xf32>
    %880 = arith.addf %878, %879 : vector<2x32xf32>
    %cst_199 = arith.constant dense<0xFF800000> : vector<2xf32>
    %881 = vector.multi_reduction <maximumf>, %880, %cst_199 [1] : vector<2x32xf32> to vector<2xf32>
    %cst_200 = arith.constant 0xFF800000 : f32
    %882 = vector.broadcast %cst_200 : f32 to vector<2xf32>
    %883 = arith.maximumf %882, %881 : vector<2xf32>
    %884 = vector.shape_cast %883 : vector<2xf32> to vector<2x1xf32>
    %885 = tpu.weird %884 : vector<2x1xf32> -> vector<2x1xi1>
    %cst_201 = arith.constant dense<true> : vector<2x1xi1>
    %886 = arith.xori %885, %cst_201 : vector<2x1xi1>
    %cst_202 = arith.constant 0.000000e+00 : f32
    %887 = vector.broadcast %cst_202 : f32 to vector<2x1xf32>
    %888 = arith.select %886, %884, %887 : vector<2x1xi1>, vector<2x1xf32>
    %889 = vector.broadcast %888 : vector<2x1xf32> to vector<2x32xf32>
    %890 = arith.subf %880, %889 : vector<2x32xf32>
    %891 = math.exp %890 : vector<2x32xf32>
    %cst_203 = arith.constant dense<0.000000e+00> : vector<2xf32>
    %892 = vector.multi_reduction <add>, %891, %cst_203 [1] : vector<2x32xf32> to vector<2xf32>
    %893 = vector.shape_cast %892 : vector<2xf32> to vector<2x1xf32>
    %894 = math.absf %893 : vector<2x1xf32>
    %895 = math.log %894 : vector<2x1xf32>
    %896 = arith.addf %895, %888 : vector<2x1xf32>
    %897 = vector.broadcast %896 : vector<2x1xf32> to vector<2x32xf32>
    %898 = arith.subf %880, %897 : vector<2x32xf32>
    %cst_204 = arith.constant dense<0xFF800000> : vector<2xf32>
    %899 = vector.multi_reduction <maximumf>, %898, %cst_204 [1] : vector<2x32xf32> to vector<2xf32>
    %900 = vector.shape_cast %899 : vector<2xf32> to vector<2x1xf32>
    %901 = vector.broadcast %900 : vector<2x1xf32> to vector<2x32xf32>
    %902 = arith.cmpf oeq, %898, %901 : vector<2x32xf32>
    %c32_i32_205 = arith.constant 32 : i32
    %903 = vector.broadcast %c32_i32_205 : i32 to vector<2x32xi32>
    %904 = arith.select %902, %329, %903 : vector<2x32xi1>, vector<2x32xi32>
    %cst_206 = arith.constant dense<2147483647> : vector<2xi32>
    %905 = vector.multi_reduction <minsi>, %904, %cst_206 [1] : vector<2x32xi32> to vector<2xi32>
    %906 = vector.shape_cast %905 : vector<2xi32> to vector<2x1xi32>
    %907 = tpu.concatenate %394, %466, %538, %610, %682, %754, %826, %898 in 1 : vector<2x32xf32>, vector<2x32xf32>, vector<2x32xf32>, vector<2x32xf32>, vector<2x32xf32>, vector<2x32xf32>, vector<2x32xf32>, vector<2x32xf32> -> vector<2x256xf32>
    %c0_207 = arith.constant 0 : index
    %c0_208 = arith.constant 0 : index
    %908 = vector.load %arg12[%c0_207, %c0_208] : memref<2x256xf32, #tpu.memory_space<vmem>>, vector<2x256xf32>
    tpu.vector_store %arg12[%c0_207, %c0_208], %907 {strides = array<i32>} : memref<2x256xf32, #tpu.memory_space<vmem>>, vector<2x256xf32>,
    %909 = tpu.concatenate %402, %474, %546, %618, %690, %762, %834, %906 in 1 : vector<2x1xi32>, vector<2x1xi32>, vector<2x1xi32>, vector<2x1xi32>, vector<2x1xi32>, vector<2x1xi32>, vector<2x1xi32>, vector<2x1xi32> -> vector<2x8xi32>
    %c0_209 = arith.constant 0 : index
    %c0_210 = arith.constant 0 : index
    %910 = vector.load %arg13[%c0_209, %c0_210] : memref<2x8xi32, #tpu.memory_space<vmem>>, vector<2x8xi32>
    tpu.vector_store %arg13[%c0_209, %c0_210], %909 {strides = array<i32>} : memref<2x8xi32, #tpu.memory_space<vmem>>, vector<2x8xi32>,
    return
  }
}

</mosaic_0001>

<llo_original>
// kernel: seq2seq_forward.1
$region0: #{seq2seq_forward.1}
  #allocation0 [shape = 'u32[]', space=smem, size = 0x4, offset = 0x4, fixed_abs, tag = 'smem constant byte address 0x4 - core index']
  #allocation1 [shape = 'u32[144,128]{1,0:T(1,128)}', space=vmem, size = 0x12000, scoped, tag = 'internal scratch']
  %s0 = inlined_call_operand.vmem [shape: f32[2,8,16], index: 0, kind: input, shape index: {}]
  %s1 = inlined_call_operand.vmem [shape: f32[16,96], index: 1, kind: input, shape index: {}]
  %s2 = inlined_call_operand.vmem [shape: f32[32,96], index: 2, kind: input, shape index: {}]
  %s3 = inlined_call_operand.hbm [shape: f32[1,128], index: 3, kind: input, shape index: {}]
  %s4 = inlined_call_operand.vmem [shape: f32[32,32], index: 4, kind: input, shape index: {}]
  %s5 = inlined_call_operand.hbm [shape: f32[1,32], index: 5, kind: input, shape index: {}]
  %s6 = inlined_call_operand.vmem [shape: f32[32,32], index: 6, kind: input, shape index: {}]
  %s7 = inlined_call_operand.vmem [shape: f32[32,96], index: 7, kind: input, shape index: {}]
  %s8 = inlined_call_operand.vmem [shape: f32[32,96], index: 8, kind: input, shape index: {}]
  %s9 = inlined_call_operand.hbm [shape: f32[1,128], index: 9, kind: input, shape index: {}]
  %s10 = inlined_call_operand.vmem [shape: f32[32,32], index: 10, kind: input, shape index: {}]
  %s11 = inlined_call_operand.hbm [shape: f32[1,32], index: 11, kind: input, shape index: {}]
  %s12 = inlined_call_operand.vmem [shape: f32[2,256], index: 12, kind: output, shape index: {0}]
  %s13 = inlined_call_operand.hbm [shape: s32[2,8], index: 13, kind: output, shape index: {1}]
  %14 = xla_tuple %s12, %s13
  %s15 = sld [smem:[#allocation0]]
  $region82: #{seq2seq_forward.1} parent=0
    _
  %s17 = ssub.s32 1, %s15
  %s18 = scalar_select 0, %s17, %s15
  $region1: #{seq2seq_forward.1} parent=0
    #allocation2 [shape = 'u8[512]{0}', space=vmem, size = 0x400, scoped, tag = 'input window, operand 3, single buffered']
    #allocation3 [shape = 's32[1]{0}', space=sflag, size = 0x4, scoped, tag = 'scoped memory for seq2seq_forward.1']
    #allocation4 [shape = 's32[1]{0}', space=sflag, size = 0x4, scoped, tag = 'scoped memory for seq2seq_forward.1']
    #allocation5 [shape = 'u8[512]{0}', space=vmem, size = 0x400, scoped, tag = 'input window, operand 5, single buffered']
    #allocation6 [shape = 's32[1]{0}', space=sflag, size = 0x4, scoped, tag = 'scoped memory for seq2seq_forward.1']
    #allocation7 [shape = 'u8[512]{0}', space=vmem, size = 0x400, scoped, tag = 'input window, operand 9, single buffered']
    #allocation8 [shape = 'u8[512]{0}', space=vmem, size = 0x400, scoped, tag = 'input window, operand 11, single buffered']
    #allocation9 [shape = 's32[1]{0}', space=sflag, size = 0x4, scoped, tag = 'scoped memory for seq2seq_forward.1']
    #allocation10 [shape = 'u8[1024]{0}', space=vmem, size = 0x400, scoped, tag = 'output window, operand 1, single buffered']
    %19 = vsyncpa [#allocation3], 0
    %20 = vsyncpa [#allocation6], 0
    %21 = vsyncpa [#allocation9], 0
    %22 = vsyncpa [#allocation4], 0
    // Predicated region
    $region2: #{seq2seq_forward.1} parent=1 // pred_check
      _
    $region3: #{seq2seq_forward.1} parent=1 // pred_check_branch
      %24 = sbr.rel (0) target = $region5
    $region4: #{seq2seq_forward.1} parent=1 // pred_region
      _
    $region5: #{seq2seq_forward.1} parent=1 // pred_fallthru
      _
    // Predicated region
    $region6: #{seq2seq_forward.1} parent=1 // pred_check
      _
    $region7: #{seq2seq_forward.1} parent=1 // pred_check_branch
      %26 = sbr.rel (0) target = $region9
    $region8: #{seq2seq_forward.1} parent=1 // pred_region
      _
    $region9: #{seq2seq_forward.1} parent=1 // pred_fallthru
      _
    // Predicated region
    $region10: #{seq2seq_forward.1} parent=1 // pred_check
      _
    $region11: #{seq2seq_forward.1} parent=1 // pred_check_branch
      %28 = sbr.rel (0) target = $region13
    $region12: #{seq2seq_forward.1} parent=1 // pred_region
      _
    $region13: #{seq2seq_forward.1} parent=1 // pred_fallthru
      _
    // Predicated region
    $region14: #{seq2seq_forward.1} parent=1 // pred_check
      _
    $region15: #{seq2seq_forward.1} parent=1 // pred_check_branch
      %30 = sbr.rel (0) target = $region17
    $region16: #{seq2seq_forward.1} parent=1 // pred_region
      %s32 = ssub.s32 16, 16
      %33 = vsyncadd [#allocation3], %s32
      %s35 = sshll.u32 [#allocation2], 4
      %s36 = int_to_ptr.vmem [resolvable:$true] %s35
      %38 = dma.hbm_to_vmem [thread:$0]  %s3, 16, %s36, [#allocation3]
    $region17: #{seq2seq_forward.1} parent=1 // pred_fallthru
      _
    // Predicated region
    $region18: #{seq2seq_forward.1} parent=1 // pred_check
      _
    $region19: #{seq2seq_forward.1} parent=1 // pred_check_branch
      %40 = sbr.rel (0) target = $region21
    $region20: #{seq2seq_forward.1} parent=1 // pred_region
      _
    $region21: #{seq2seq_forward.1} parent=1 // pred_fallthru
      _
    // Predicated region
    $region22: #{seq2seq_forward.1} parent=1 // pred_check
      _
    $region23: #{seq2seq_forward.1} parent=1 // pred_check_branch
      %42 = sbr.rel (0) target = $region25
    $region24: #{seq2seq_forward.1} parent=1 // pred_region
      %s44 = ssub.s32 16, 16
      %45 = vsyncadd [#allocation6], %s44
      %s47 = sshll.u32 [#allocation5], 4
      %s48 = int_to_ptr.vmem [resolvable:$true] %s47
      %50 = dma.hbm_to_vmem [thread:$0]  %s5, 16, %s48, [#allocation6]
    $region25: #{seq2seq_forward.1} parent=1 // pred_fallthru
      _
    // Predicated region
    $region26: #{seq2seq_forward.1} parent=1 // pred_check
      _
    $region27: #{seq2seq_forward.1} parent=1 // pred_check_branch
      %52 = sbr.rel (0) target = $region29
    $region28: #{seq2seq_forward.1} parent=1 // pred_region
      _
    $region29: #{seq2seq_forward.1} parent=1 // pred_fallthru
      _
    // Predicated region
    $region30: #{seq2seq_forward.1} parent=1 // pred_check
      _
    $region31: #{seq2seq_forward.1} parent=1 // pred_check_branch
      %54 = sbr.rel (0) target = $region33
    $region32: #{seq2seq_forward.1} parent=1 // pred_region
      _
    $region33: #{seq2seq_forward.1} parent=1 // pred_fallthru
      _
    // Predicated region
    $region34: #{seq2seq_forward.1} parent=1 // pred_check
      _
    $region35: #{seq2seq_forward.1} parent=1 // pred_check_branch
      %56 = sbr.rel (0) target = $region37
    $region36: #{seq2seq_forward.1} parent=1 // pred_region
      _
    $region37: #{seq2seq_forward.1} parent=1 // pred_fallthru
      _
    // Predicated region
    $region38: #{seq2seq_forward.1} parent=1 // pred_check
      _
    $region39: #{seq2seq_forward.1} parent=1 // pred_check_branch
      %58 = sbr.rel (0) target = $region41
    $region40: #{seq2seq_forward.1} parent=1 // pred_region
      %s60 = ssub.s32 16, 16
      %61 = vsyncadd [#allocation6], %s60
      %s63 = sshll.u32 [#allocation7], 4
      %s64 = int_to_ptr.vmem [resolvable:$true] %s63
      %66 = dma.hbm_to_vmem [thread:$0]  %s9, 16, %s64, [#allocation6]
    $region41: #{seq2seq_forward.1} parent=1 // pred_fallthru
      _
    // Predicated region
    $region42: #{seq2seq_forward.1} parent=1 // pred_check
      _
    $region43: #{seq2seq_forward.1} parent=1 // pred_check_branch
      %68 = sbr.rel (0) target = $region45
    $region44: #{seq2seq_forward.1} parent=1 // pred_region
      _
    $region45: #{seq2seq_forward.1} parent=1 // pred_fallthru
      _
    // Predicated region
    $region46: #{seq2seq_forward.1} parent=1 // pred_check
      _
    $region47: #{seq2seq_forward.1} parent=1 // pred_check_branch
      %70 = sbr.rel (0) target = $region49
    $region48: #{seq2seq_forward.1} parent=1 // pred_region
      %s72 = ssub.s32 16, 16
      %73 = vsyncadd [#allocation9], %s72
      %s75 = sshll.u32 [#allocation8], 4
      %s76 = int_to_ptr.vmem [resolvable:$true] %s75
      %78 = dma.hbm_to_vmem [thread:$0]  %s11, 16, %s76, [#allocation9]
    $region49: #{seq2seq_forward.1} parent=1 // pred_fallthru
      _
    // Predicated region
    $region50: #{seq2seq_forward.1} parent=1 // pred_check
      _
    $region51: #{seq2seq_forward.1} parent=1 // pred_check_branch
      %80 = sbr.rel (0) target = $region53
    $region52: #{seq2seq_forward.1} parent=1 // pred_region
      %81 = dma.done [#allocation3], 16
    $region53: #{seq2seq_forward.1} parent=1 // pred_fallthru
      _
    // Predicated region
    $region54: #{seq2seq_forward.1} parent=1 // pred_check
      _
    $region55: #{seq2seq_forward.1} parent=1 // pred_check_branch
      %83 = sbr.rel (0) target = $region57
    $region56: #{seq2seq_forward.1} parent=1 // pred_region
      %84 = dma.done [#allocation6], 16
    $region57: #{seq2seq_forward.1} parent=1 // pred_fallthru
      _
    // Predicated region
    $region58: #{seq2seq_forward.1} parent=1 // pred_check
      _
    $region59: #{seq2seq_forward.1} parent=1 // pred_check_branch
      %86 = sbr.rel (0) target = $region61
    $region60: #{seq2seq_forward.1} parent=1 // pred_region
      %87 = dma.done [#allocation6], 16
    $region61: #{seq2seq_forward.1} parent=1 // pred_fallthru
      _
    // Predicated region
    $region62: #{seq2seq_forward.1} parent=1 // pred_check
      _
    $region63: #{seq2seq_forward.1} parent=1 // pred_check_branch
      %89 = sbr.rel (0) target = $region65
    $region64: #{seq2seq_forward.1} parent=1 // pred_region
      %90 = dma.done [#allocation9], 16
    $region65: #{seq2seq_forward.1} parent=1 // pred_fallthru
      _
    %v91 = vld [vmem:[%s1] sm:$0xff]
    %v92 = vld [vmem:[%s1 + $0x8] sm:$0xff]
    %v93 = vld [vmem:[%s2] sm:$0xff]
    %v94 = vld [vmem:[%s2 + $0x8] sm:$0xff]
    %v95 = vld [vmem:[%s2 + $0x10] sm:$0xff]
    %v96 = vld [vmem:[%s2 + $0x18] sm:$0xff]
    %v97 = vld [vmem:[#allocation2] sm:$0x1]
    %v98 = vld [vmem:[%s0] sm:$0x1]
    %v99 = vld [vmem:[%s0 + $0x8] sm:$0x1]
    %v102 = vrot.slane %v99, 7
    %vm103 = vcmask 1041409
    %v104 = vsel %vm103, %v102, %v98
    %vm105 = vcmask 130048
    %v106 = vsel %vm105, %v104, 0
    %108 = vmatprep.subr.mxu0 0.0
    %109 = vmatpush1.msra.mxu0 0.0
    %110 = vmatprep.subr.mxu0 0.0
    %111 = vmatpush1.msra.mxu0 0.0
    %112 = vmatprep.subr.mxu0 0.0
    %113 = vmatpush1.msra.mxu0 0.0
    %114 = vmatprep.subr.mxu0 0.0
    %115 = vmatpush1.msra.mxu0 0.0
    %116 = vmatprep.subr.mxu0 0.0
    %117 = vmatpush1.msra.mxu0 0.0
    %118 = vmatprep.subr.mxu0 0.0
    %119 = vmatpush1.msra.mxu0 0.0
    %120 = vmatprep.subr.mxu0 0.0
    %121 = vmatpush1.msra.mxu0 0.0
    %122 = vmatprep.subr.mxu0 0.0
    %123 = vmatpush1.msra.mxu0 0.0
    %124 = vmatprep.subr.mxu0 0.0
    %125 = vmatpush1.msra.mxu0 0.0
    %126 = vmatprep.subr.mxu0 0.0
    %127 = vmatpush1.msra.mxu0 0.0
    %128 = vmatprep.subr.mxu0 0.0
    %129 = vmatpush1.msra.mxu0 0.0
    %130 = vmatprep.subr.mxu0 0.0
    %131 = vmatpush1.msra.mxu0 0.0
    %132 = vmatprep.subr.mxu0 0.0
    %133 = vmatpush1.msra.mxu0 0.0
    %134 = vmatprep.subr.mxu0 0.0
    %135 = vmatpush1.msra.mxu0 0.0
    %136 = vmatprep.subr.mxu0 0.0
    %137 = vmatpush1.msra.mxu0 %v92
    %138 = vmatprep.subr.mxu0 0.0
    %139 = vmatpush1.msra.mxu0 %v91
    %140 = vmatprep.subr.mxu0 0.0
    %141 = vmatpush2.msra.mxu0 0.0
    %142 = vmatprep.subr.mxu0 0.0
    %143 = vmatpush2.msra.mxu0 0.0
    %144 = vmatprep.subr.mxu0 0.0
    %145 = vmatpush2.msra.mxu0 0.0
    %146 = vmatprep.subr.mxu0 0.0
    %147 = vmatpush2.msra.mxu0 0.0
    %148 = vmatprep.subr.mxu0 0.0
    %149 = vmatpush2.msra.mxu0 0.0
    %150 = vmatprep.subr.mxu0 0.0
    %151 = vmatpush2.msra.mxu0 0.0
    %152 = vmatprep.subr.mxu0 0.0
    %153 = vmatpush2.msra.mxu0 0.0
    %154 = vmatprep.subr.mxu0 0.0
    %155 = vmatpush2.msra.mxu0 0.0
    %156 = vmatprep.subr.mxu0 0.0
    %157 = vmatpush2.msra.mxu0 0.0
    %158 = vmatprep.subr.mxu0 0.0
    %159 = vmatpush2.msra.mxu0 0.0
    %160 = vmatprep.subr.mxu0 0.0
    %161 = vmatpush2.msra.mxu0 0.0
    %162 = vmatprep.subr.mxu0 0.0
    %163 = vmatpush2.msra.mxu0 0.0
    %164 = vmatprep.subr.mxu0 0.0
    %165 = vmatpush2.msra.mxu0 0.0
    %166 = vmatprep.subr.mxu0 0.0
    %167 = vmatpush2.msra.mxu0 0.0
    %168 = vmatprep.subr.mxu0 0.0
    %169 = vmatpush2.msra.mxu0 0.0
    %170 = vmatprep.subr.mxu0 0.0
    %171 = vmatpush2.msra.mxu0 0.0
    %172 = vmatprep.mubr.f32.mxu0 0.0
    %173 = vmatmul.mubr.f32.gmra.mxu0 %v106
    %v174 = vpop.f32.mrf.mxu0
    %v175 = vadd.f32 0.0, %v174
    %v176 = vpop.f32.mrf.mxu0
    %177 = vdwg.mxu0
    %vm178 = vcmask 261120
    %v180 = vsel %vm178, 0.0, 0
    %182 = vmatprep.subr.mxu0 0.0
    %183 = vmatpush1.msra.mxu0 0.0
    %184 = vmatprep.subr.mxu0 0.0
    %185 = vmatpush1.msra.mxu0 0.0
    %186 = vmatprep.subr.mxu0 0.0
    %187 = vmatpush1.msra.mxu0 0.0
    %188 = vmatprep.subr.mxu0 0.0
    %189 = vmatpush1.msra.mxu0 0.0
    %190 = vmatprep.subr.mxu0 0.0
    %191 = vmatpush1.msra.mxu0 0.0
    %192 = vmatprep.subr.mxu0 0.0
    %193 = vmatpush1.msra.mxu0 0.0
    %194 = vmatprep.subr.mxu0 0.0
    %195 = vmatpush1.msra.mxu0 0.0
    %196 = vmatprep.subr.mxu0 0.0
    %197 = vmatpush1.msra.mxu0 0.0
    %198 = vmatprep.subr.mxu0 0.0
    %199 = vmatpush1.msra.mxu0 0.0
    %200 = vmatprep.subr.mxu0 0.0
    %201 = vmatpush1.msra.mxu0 0.0
    %202 = vmatprep.subr.mxu0 0.0
    %203 = vmatpush1.msra.mxu0 0.0
    %204 = vmatprep.subr.mxu0 0.0
    %205 = vmatpush1.msra.mxu0 0.0
    %206 = vmatprep.subr.mxu0 0.0
    %207 = vmatpush1.msra.mxu0 %v96
    %208 = vmatprep.subr.mxu0 0.0
    %209 = vmatpush1.msra.mxu0 %v95
    %210 = vmatprep.subr.mxu0 0.0
    %211 = vmatpush1.msra.mxu0 %v94
    %212 = vmatprep.subr.mxu0 0.0
    %213 = vmatpush1.msra.mxu0 %v93
    %214 = vmatprep.subr.mxu0 0.0
    %215 = vmatpush2.msra.mxu0 0.0
    %216 = vmatprep.subr.mxu0 0.0
    %217 = vmatpush2.msra.mxu0 0.0
    %218 = vmatprep.subr.mxu0 0.0
    %219 = vmatpush2.msra.mxu0 0.0
    %220 = vmatprep.subr.mxu0 0.0
    %221 = vmatpush2.msra.mxu0 0.0
    %222 = vmatprep.subr.mxu0 0.0
    %223 = vmatpush2.msra.mxu0 0.0
    %224 = vmatprep.subr.mxu0 0.0
    %225 = vmatpush2.msra.mxu0 0.0
    %226 = vmatprep.subr.mxu0 0.0
    %227 = vmatpush2.msra.mxu0 0.0
    %228 = vmatprep.subr.mxu0 0.0
    %229 = vmatpush2.msra.mxu0 0.0
    %230 = vmatprep.subr.mxu0 0.0
    %231 = vmatpush2.msra.mxu0 0.0
    %232 = vmatprep.subr.mxu0 0.0
    %233 = vmatpush2.msra.mxu0 0.0
    %234 = vmatprep.subr.mxu0 0.0
    %235 = vmatpush2.msra.mxu0 0.0
    %236 = vmatprep.subr.mxu0 0.0
    %237 = vmatpush2.msra.mxu0 0.0
    %238 = vmatprep.subr.mxu0 0.0
    %239 = vmatpush2.msra.mxu0 0.0
    %240 = vmatprep.subr.mxu0 0.0
    %241 = vmatpush2.msra.mxu0 0.0
    %242 = vmatprep.subr.mxu0 0.0
    %243 = vmatpush2.msra.mxu0 0.0
    %244 = vmatprep.subr.mxu0 0.0
    %245 = vmatpush2.msra.mxu0 0.0
    %246 = vmatprep.mubr.f32.mxu0 0.0
    %247 = vmatmul.mubr.f32.gmra.mxu0 %v180
    %v248 = vpop.f32.mrf.mxu0
    %v249 = vadd.f32 0.0, %v248
    %v250 = vpop.f32.mrf.mxu0
    %251 = vdwg.mxu0
    %v252 = vadd.f32 %v175, %v249
    %v254 = vlaneseq
    %v255 = vshrl.u32 %v254, 7
    %v256 = vsub.s32 0, %v255
    %v257 = vrot.slane %v97, %v256
    %v259 = vadd.f32 %v252, %v257
    %v260 = vxor.u32 %v259, 2147483648
    %v261 = vmul.f32 %v260, 1.442695
    %v262 = vpow.pop %v261
    %v263 = vadd.f32 %v262, 1.0
    %v264 = vrcp.pop %v263
    %v265 = vmul.f32 1.0, %v264
    %v266 = vadd.f32 %v175, %v257
    %267 = vrot.lane.b32.xlu0 %v257, 96
    %v268 = vpop.permute.xlu0 %267
    %v270 = vadd.f32 %v249, %v268
    %272 = vrot.lane.b32.xlu0 %v270, 64
    %v273 = vpop.permute.xlu0 %272
    %v275 = vmul.f32 %v265, %v273
    %277 = vrot.lane.b32.xlu0 %v275, 64
    %v278 = vpop.permute.xlu0 %277
    %v280 = vadd.f32 %v266, %v278
    %v281 = vtanh.pop %v280
    %v282 = vsub.f32 1.0, %v265
    %284 = vrot.lane.b32.xlu0 %v281, 96
    %v285 = vpop.permute.xlu0 %284
    %v287 = vmul.f32 %v282, %v285
    %v288 = vmul.f32 %v265, 0.0
    %v289 = vadd.f32 %v287, %v288
    %v290 = vld [vmem:[%s0 + $0x1] sm:$0x1]
    %v291 = vld [vmem:[%s0 + $0x9] sm:$0x1]
    %v294 = vrot.slane %v291, 7
    %v295 = vsel %vm103, %v294, %v290
    %v296 = vsel %vm105, %v295, 0
    %298 = vmatprep.subr.mxu0 0.0
    %299 = vmatpush1.msra.mxu0 0.0
    %300 = vmatprep.subr.mxu0 0.0
    %301 = vmatpush1.msra.mxu0 0.0
    %302 = vmatprep.subr.mxu0 0.0
    %303 = vmatpush1.msra.mxu0 0.0
    %304 = vmatprep.subr.mxu0 0.0
    %305 = vmatpush1.msra.mxu0 0.0
    %306 = vmatprep.subr.mxu0 0.0
    %307 = vmatpush1.msra.mxu0 0.0
    %308 = vmatprep.subr.mxu0 0.0
    %309 = vmatpush1.msra.mxu0 0.0
    %310 = vmatprep.subr.mxu0 0.0
    %311 = vmatpush1.msra.mxu0 0.0
    %312 = vmatprep.subr.mxu0 0.0
    %313 = vmatpush1.msra.mxu0 0.0
    %314 = vmatprep.subr.mxu0 0.0
    %315 = vmatpush1.msra.mxu0 0.0
    %316 = vmatprep.subr.mxu0 0.0
    %317 = vmatpush1.msra.mxu0 0.0
    %318 = vmatprep.subr.mxu0 0.0
    %319 = vmatpush1.msra.mxu0 0.0
    %320 = vmatprep.subr.mxu0 0.0
    %321 = vmatpush1.msra.mxu0 0.0
    %322 = vmatprep.subr.mxu0 0.0
    %323 = vmatpush1.msra.mxu0 0.0
    %324 = vmatprep.subr.mxu0 0.0
    %325 = vmatpush1.msra.mxu0 0.0
    %326 = vmatprep.subr.mxu0 0.0
    %327 = vmatpush1.msra.mxu0 %v92
    %328 = vmatprep.subr.mxu0 0.0
    %329 = vmatpush1.msra.mxu0 %v91
    %330 = vmatprep.subr.mxu0 0.0
    %331 = vmatpush2.msra.mxu0 0.0
    %332 = vmatprep.subr.mxu0 0.0
    %333 = vmatpush2.msra.mxu0 0.0
    %334 = vmatprep.subr.mxu0 0.0
    %335 = vmatpush2.msra.mxu0 0.0
    %336 = vmatprep.subr.mxu0 0.0
    %337 = vmatpush2.msra.mxu0 0.0
    %338 = vmatprep.subr.mxu0 0.0
    %339 = vmatpush2.msra.mxu0 0.0
    %340 = vmatprep.subr.mxu0 0.0
    %341 = vmatpush2.msra.mxu0 0.0
    %342 = vmatprep.subr.mxu0 0.0
    %343 = vmatpush2.msra.mxu0 0.0
    %344 = vmatprep.subr.mxu0 0.0
    %345 = vmatpush2.msra.mxu0 0.0
    %346 = vmatprep.subr.mxu0 0.0
    %347 = vmatpush2.msra.mxu0 0.0
    %348 = vmatprep.subr.mxu0 0.0
    %349 = vmatpush2.msra.mxu0 0.0
    %350 = vmatprep.subr.mxu0 0.0
    %351 = vmatpush2.msra.mxu0 0.0
    %352 = vmatprep.subr.mxu0 0.0
    %353 = vmatpush2.msra.mxu0 0.0
    %354 = vmatprep.subr.mxu0 0.0
    %355 = vmatpush2.msra.mxu0 0.0
    %356 = vmatprep.subr.mxu0 0.0
    %357 = vmatpush2.msra.mxu0 0.0
    %358 = vmatprep.subr.mxu0 0.0
    %359 = vmatpush2.msra.mxu0 0.0
    %360 = vmatprep.subr.mxu0 0.0
    %361 = vmatpush2.msra.mxu0 0.0
    %362 = vmatprep.mubr.f32.mxu0 0.0
    %363 = vmatmul.mubr.f32.gmra.mxu0 %v296
    %v364 = vpop.f32.mrf.mxu0
    %v365 = vadd.f32 0.0, %v364
    %v366 = vpop.f32.mrf.mxu0
    %367 = vdwg.mxu0
    %369 = vrot.lane.b32.xlu0 %v289, 96
    %v370 = vpop.permute.xlu0 %369
    %v371 = vsel %vm178, %v370, 0
    %373 = vmatprep.subr.mxu0 0.0
    %374 = vmatpush1.msra.mxu0 0.0
    %375 = vmatprep.subr.mxu0 0.0
    %376 = vmatpush1.msra.mxu0 0.0
    %377 = vmatprep.subr.mxu0 0.0
    %378 = vmatpush1.msra.mxu0 0.0
    %379 = vmatprep.subr.mxu0 0.0
    %380 = vmatpush1.msra.mxu0 0.0
    %381 = vmatprep.subr.mxu0 0.0
    %382 = vmatpush1.msra.mxu0 0.0
    %383 = vmatprep.subr.mxu0 0.0
    %384 = vmatpush1.msra.mxu0 0.0
    %385 = vmatprep.subr.mxu0 0.0
    %386 = vmatpush1.msra.mxu0 0.0
    %387 = vmatprep.subr.mxu0 0.0
    %388 = vmatpush1.msra.mxu0 0.0
    %389 = vmatprep.subr.mxu0 0.0
    %390 = vmatpush1.msra.mxu0 0.0
    %391 = vmatprep.subr.mxu0 0.0
    %392 = vmatpush1.msra.mxu0 0.0
    %393 = vmatprep.subr.mxu0 0.0
    %394 = vmatpush1.msra.mxu0 0.0
    %395 = vmatprep.subr.mxu0 0.0
    %396 = vmatpush1.msra.mxu0 0.0
    %397 = vmatprep.subr.mxu0 0.0
    %398 = vmatpush1.msra.mxu0 %v96
    %399 = vmatprep.subr.mxu0 0.0
    %400 = vmatpush1.msra.mxu0 %v95
    %401 = vmatprep.subr.mxu0 0.0
    %402 = vmatpush1.msra.mxu0 %v94
    %403 = vmatprep.subr.mxu0 0.0
    %404 = vmatpush1.msra.mxu0 %v93
    %405 = vmatprep.subr.mxu0 0.0
    %406 = vmatpush2.msra.mxu0 0.0
    %407 = vmatprep.subr.mxu0 0.0
    %408 = vmatpush2.msra.mxu0 0.0
    %409 = vmatprep.subr.mxu0 0.0
    %410 = vmatpush2.msra.mxu0 0.0
    %411 = vmatprep.subr.mxu0 0.0
    %412 = vmatpush2.msra.mxu0 0.0
    %413 = vmatprep.subr.mxu0 0.0
    %414 = vmatpush2.msra.mxu0 0.0
    %415 = vmatprep.subr.mxu0 0.0
    %416 = vmatpush2.msra.mxu0 0.0
    %417 = vmatprep.subr.mxu0 0.0
    %418 = vmatpush2.msra.mxu0 0.0
    %419 = vmatprep.subr.mxu0 0.0
    %420 = vmatpush2.msra.mxu0 0.0
    %421 = vmatprep.subr.mxu0 0.0
    %422 = vmatpush2.msra.mxu0 0.0
    %423 = vmatprep.subr.mxu0 0.0
    %424 = vmatpush2.msra.mxu0 0.0
    %425 = vmatprep.subr.mxu0 0.0
    %426 = vmatpush2.msra.mxu0 0.0
    %427 = vmatprep.subr.mxu0 0.0
    %428 = vmatpush2.msra.mxu0 0.0
    %429 = vmatprep.subr.mxu0 0.0
    %430 = vmatpush2.msra.mxu0 0.0
    %431 = vmatprep.subr.mxu0 0.0
    %432 = vmatpush2.msra.mxu0 0.0
    %433 = vmatprep.subr.mxu0 0.0
    %434 = vmatpush2.msra.mxu0 0.0
    %435 = vmatprep.subr.mxu0 0.0
    %436 = vmatpush2.msra.mxu0 0.0
    %437 = vmatprep.mubr.f32.mxu0 0.0
    %438 = vmatmul.mubr.f32.gmra.mxu0 %v371
    %v439 = vpop.f32.mrf.mxu0
    %v440 = vadd.f32 0.0, %v439
    %v441 = vpop.f32.mrf.mxu0
    %442 = vdwg.mxu0
    %v443 = vadd.f32 %v365, %v440
    %v444 = vadd.f32 %v443, %v257
    %v445 = vxor.u32 %v444, 2147483648
    %v446 = vmul.f32 %v445, 1.442695
    %v447 = vpow.pop %v446
    %v448 = vadd.f32 %v447, 1.0
    %v449 = vrcp.pop %v448
    %v450 = vmul.f32 1.0, %v449
    %v451 = vadd.f32 %v365, %v257
    %v452 = vadd.f32 %v440, %v268
    %454 = vrot.lane.b32.xlu0 %v452, 64
    %v455 = vpop.permute.xlu0 %454
    %v457 = vmul.f32 %v450, %v455
    %459 = vrot.lane.b32.xlu0 %v457, 64
    %v460 = vpop.permute.xlu0 %459
    %v462 = vadd.f32 %v451, %v460
    %v463 = vtanh.pop %v462
    %v464 = vsub.f32 1.0, %v450
    %466 = vrot.lane.b32.xlu0 %v463, 96
    %v467 = vpop.permute.xlu0 %466
    %v469 = vmul.f32 %v464, %v467
    %v470 = vmul.f32 %v450, %v289
    %v471 = vadd.f32 %v469, %v470
    %v472 = vld [vmem:[%s0 + $0x2] sm:$0x1]
    %v473 = vld [vmem:[%s0 + $0xa] sm:$0x1]
    %v476 = vrot.slane %v473, 7
    %v477 = vsel %vm103, %v476, %v472
    %v478 = vsel %vm105, %v477, 0
    %480 = vmatprep.subr.mxu0 0.0
    %481 = vmatpush1.msra.mxu0 0.0
    %482 = vmatprep.subr.mxu0 0.0
    %483 = vmatpush1.msra.mxu0 0.0
    %484 = vmatprep.subr.mxu0 0.0
    %485 = vmatpush1.msra.mxu0 0.0
    %486 = vmatprep.subr.mxu0 0.0
    %487 = vmatpush1.msra.mxu0 0.0
    %488 = vmatprep.subr.mxu0 0.0
    %489 = vmatpush1.msra.mxu0 0.0
    %490 = vmatprep.subr.mxu0 0.0
    %491 = vmatpush1.msra.mxu0 0.0
    %492 = vmatprep.subr.mxu0 0.0
    %493 = vmatpush1.msra.mxu0 0.0
    %494 = vmatprep.subr.mxu0 0.0
    %495 = vmatpush1.msra.mxu0 0.0
    %496 = vmatprep.subr.mxu0 0.0
    %497 = vmatpush1.msra.mxu0 0.0
    %498 = vmatprep.subr.mxu0 0.0
    %499 = vmatpush1.msra.mxu0 0.0
    %500 = vmatprep.subr.mxu0 0.0
    %501 = vmatpush1.msra.mxu0 0.0
    %502 = vmatprep.subr.mxu0 0.0
    %503 = vmatpush1.msra.mxu0 0.0
    %504 = vmatprep.subr.mxu0 0.0
    %505 = vmatpush1.msra.mxu0 0.0
    %506 = vmatprep.subr.mxu0 0.0
    %507 = vmatpush1.msra.mxu0 0.0
    %508 = vmatprep.subr.mxu0 0.0
    %509 = vmatpush1.msra.mxu0 %v92
    %510 = vmatprep.subr.mxu0 0.0
    %511 = vmatpush1.msra.mxu0 %v91
    %512 = vmatprep.subr.mxu0 0.0
    %513 = vmatpush2.msra.mxu0 0.0
    %514 = vmatprep.subr.mxu0 0.0
    %515 = vmatpush2.msra.mxu0 0.0
    %516 = vmatprep.subr.mxu0 0.0
    %517 = vmatpush2.msra.mxu0 0.0
    %518 = vmatprep.subr.mxu0 0.0
    %519 = vmatpush2.msra.mxu0 0.0
    %520 = vmatprep.subr.mxu0 0.0
    %521 = vmatpush2.msra.mxu0 0.0
    %522 = vmatprep.subr.mxu0 0.0
    %523 = vmatpush2.msra.mxu0 0.0
    %524 = vmatprep.subr.mxu0 0.0
    %525 = vmatpush2.msra.mxu0 0.0
    %526 = vmatprep.subr.mxu0 0.0
    %527 = vmatpush2.msra.mxu0 0.0
    %528 = vmatprep.subr.mxu0 0.0
    %529 = vmatpush2.msra.mxu0 0.0
    %530 = vmatprep.subr.mxu0 0.0
    %531 = vmatpush2.msra.mxu0 0.0
    %532 = vmatprep.subr.mxu0 0.0
    %533 = vmatpush2.msra.mxu0 0.0
    %534 = vmatprep.subr.mxu0 0.0
    %535 = vmatpush2.msra.mxu0 0.0
    %536 = vmatprep.subr.mxu0 0.0
    %537 = vmatpush2.msra.mxu0 0.0
    %538 = vmatprep.subr.mxu0 0.0
    %539 = vmatpush2.msra.mxu0 0.0
    %540 = vmatprep.subr.mxu0 0.0
    %541 = vmatpush2.msra.mxu0 0.0
    %542 = vmatprep.subr.mxu0 0.0
    %543 = vmatpush2.msra.mxu0 0.0
    %544 = vmatprep.mubr.f32.mxu0 0.0
    %545 = vmatmul.mubr.f32.gmra.mxu0 %v478
    %v546 = vpop.f32.mrf.mxu0
    %v547 = vadd.f32 0.0, %v546
    %v548 = vpop.f32.mrf.mxu0
    %549 = vdwg.mxu0
    %551 = vrot.lane.b32.xlu0 %v471, 96
    %v552 = vpop.permute.xlu0 %551
    %v553 = vsel %vm178, %v552, 0
    %555 = vmatprep.subr.mxu0 0.0
    %556 = vmatpush1.msra.mxu0 0.0
    %557 = vmatprep.subr.mxu0 0.0
    %558 = vmatpush1.msra.mxu0 0.0
    %559 = vmatprep.subr.mxu0 0.0
    %560 = vmatpush1.msra.mxu0 0.0
    %561 = vmatprep.subr.mxu0 0.0
    %562 = vmatpush1.msra.mxu0 0.0
    %563 = vmatprep.subr.mxu0 0.0
    %564 = vmatpush1.msra.mxu0 0.0
    %565 = vmatprep.subr.mxu0 0.0
    %566 = vmatpush1.msra.mxu0 0.0
    %567 = vmatprep.subr.mxu0 0.0
    %568 = vmatpush1.msra.mxu0 0.0
    %569 = vmatprep.subr.mxu0 0.0
    %570 = vmatpush1.msra.mxu0 0.0
    %571 = vmatprep.subr.mxu0 0.0
    %572 = vmatpush1.msra.mxu0 0.0
    %573 = vmatprep.subr.mxu0 0.0
    %574 = vmatpush1.msra.mxu0 0.0
    %575 = vmatprep.subr.mxu0 0.0
    %576 = vmatpush1.msra.mxu0 0.0
    %577 = vmatprep.subr.mxu0 0.0
    %578 = vmatpush1.msra.mxu0 0.0
    %579 = vmatprep.subr.mxu0 0.0
    %580 = vmatpush1.msra.mxu0 %v96
    %581 = vmatprep.subr.mxu0 0.0
    %582 = vmatpush1.msra.mxu0 %v95
    %583 = vmatprep.subr.mxu0 0.0
    %584 = vmatpush1.msra.mxu0 %v94
    %585 = vmatprep.subr.mxu0 0.0
    %586 = vmatpush1.msra.mxu0 %v93
    %587 = vmatprep.subr.mxu0 0.0
    %588 = vmatpush2.msra.mxu0 0.0
    %589 = vmatprep.subr.mxu0 0.0
    %590 = vmatpush2.msra.mxu0 0.0
    %591 = vmatprep.subr.mxu0 0.0
    %592 = vmatpush2.msra.mxu0 0.0
    %593 = vmatprep.subr.mxu0 0.0
    %594 = vmatpush2.msra.mxu0 0.0
    %595 = vmatprep.subr.mxu0 0.0
    %596 = vmatpush2.msra.mxu0 0.0
    %597 = vmatprep.subr.mxu0 0.0
    %598 = vmatpush2.msra.mxu0 0.0
    %599 = vmatprep.subr.mxu0 0.0
    %600 = vmatpush2.msra.mxu0 0.0
    %601 = vmatprep.subr.mxu0 0.0
    %602 = vmatpush2.msra.mxu0 0.0
    %603 = vmatprep.subr.mxu0 0.0
    %604 = vmatpush2.msra.mxu0 0.0
    %605 = vmatprep.subr.mxu0 0.0
    %606 = vmatpush2.msra.mxu0 0.0
    %607 = vmatprep.subr.mxu0 0.0
    %608 = vmatpush2.msra.mxu0 0.0
    %609 = vmatprep.subr.mxu0 0.0
    %610 = vmatpush2.msra.mxu0 0.0
    %611 = vmatprep.subr.mxu0 0.0
    %612 = vmatpush2.msra.mxu0 0.0
    %613 = vmatprep.subr.mxu0 0.0
    %614 = vmatpush2.msra.mxu0 0.0
    %615 = vmatprep.subr.mxu0 0.0
    %616 = vmatpush2.msra.mxu0 0.0
    %617 = vmatprep.subr.mxu0 0.0
    %618 = vmatpush2.msra.mxu0 0.0
    %619 = vmatprep.mubr.f32.mxu0 0.0
    %620 = vmatmul.mubr.f32.gmra.mxu0 %v553
    %v621 = vpop.f32.mrf.mxu0
    %v622 = vadd.f32 0.0, %v621
    %v623 = vpop.f32.mrf.mxu0
    %624 = vdwg.mxu0
    %v625 = vadd.f32 %v547, %v622
    %v626 = vadd.f32 %v625, %v257
    %v627 = vxor.u32 %v626, 2147483648
    %v628 = vmul.f32 %v627, 1.442695
    %v629 = vpow.pop %v628
    %v630 = vadd.f32 %v629, 1.0
    %v631 = vrcp.pop %v630
    %v632 = vmul.f32 1.0, %v631
    %v633 = vadd.f32 %v547, %v257
    %v634 = vadd.f32 %v622, %v268
    %636 = vrot.lane.b32.xlu0 %v634, 64
    %v637 = vpop.permute.xlu0 %636
    %v639 = vmul.f32 %v632, %v637
    %641 = vrot.lane.b32.xlu0 %v639, 64
    %v642 = vpop.permute.xlu0 %641
    %v644 = vadd.f32 %v633, %v642
    %v645 = vtanh.pop %v644
    %v646 = vsub.f32 1.0, %v632
    %648 = vrot.lane.b32.xlu0 %v645, 96
    %v649 = vpop.permute.xlu0 %648
    %v651 = vmul.f32 %v646, %v649
    %v652 = vmul.f32 %v632, %v471
    %v653 = vadd.f32 %v651, %v652
    %v654 = vld [vmem:[%s0 + $0x3] sm:$0x1]
    %v655 = vld [vmem:[%s0 + $0xb] sm:$0x1]
    %v658 = vrot.slane %v655, 7
    %v659 = vsel %vm103, %v658, %v654
    %v660 = vsel %vm105, %v659, 0
    %662 = vmatprep.subr.mxu0 0.0
    %663 = vmatpush1.msra.mxu0 0.0
    %664 = vmatprep.subr.mxu0 0.0
    %665 = vmatpush1.msra.mxu0 0.0
    %666 = vmatprep.subr.mxu0 0.0
    %667 = vmatpush1.msra.mxu0 0.0
    %668 = vmatprep.subr.mxu0 0.0
    %669 = vmatpush1.msra.mxu0 0.0
    %670 = vmatprep.subr.mxu0 0.0
    %671 = vmatpush1.msra.mxu0 0.0
    %672 = vmatprep.subr.mxu0 0.0
    %673 = vmatpush1.msra.mxu0 0.0
    %674 = vmatprep.subr.mxu0 0.0
    %675 = vmatpush1.msra.mxu0 0.0
    %676 = vmatprep.subr.mxu0 0.0
    %677 = vmatpush1.msra.mxu0 0.0
    %678 = vmatprep.subr.mxu0 0.0
    %679 = vmatpush1.msra.mxu0 0.0
    %680 = vmatprep.subr.mxu0 0.0
    %681 = vmatpush1.msra.mxu0 0.0
    %682 = vmatprep.subr.mxu0 0.0
    %683 = vmatpush1.msra.mxu0 0.0
    %684 = vmatprep.subr.mxu0 0.0
    %685 = vmatpush1.msra.mxu0 0.0
    %686 = vmatprep.subr.mxu0 0.0
    %687 = vmatpush1.msra.mxu0 0.0
    %688 = vmatprep.subr.mxu0 0.0
    %689 = vmatpush1.msra.mxu0 0.0
    %690 = vmatprep.subr.mxu0 0.0
    %691 = vmatpush1.msra.mxu0 %v92
    %692 = vmatprep.subr.mxu0 0.0
    %693 = vmatpush1.msra.mxu0 %v91
    %694 = vmatprep.subr.mxu0 0.0
    %695 = vmatpush2.msra.mxu0 0.0
    %696 = vmatprep.subr.mxu0 0.0
    %697 = vmatpush2.msra.mxu0 0.0
    %698 = vmatprep.subr.mxu0 0.0
    %699 = vmatpush2.msra.mxu0 0.0
    %700 = vmatprep.subr.mxu0 0.0
    %701 = vmatpush2.msra.mxu0 0.0
    %702 = vmatprep.subr.mxu0 0.0
    %703 = vmatpush2.msra.mxu0 0.0
    %704 = vmatprep.subr.mxu0 0.0
    %705 = vmatpush2.msra.mxu0 0.0
    %706 = vmatprep.subr.mxu0 0.0
    %707 = vmatpush2.msra.mxu0 0.0
    %708 = vmatprep.subr.mxu0 0.0
    %709 = vmatpush2.msra.mxu0 0.0
    %710 = vmatprep.subr.mxu0 0.0
    %711 = vmatpush2.msra.mxu0 0.0
    %712 = vmatprep.subr.mxu0 0.0
    %713 = vmatpush2.msra.mxu0 0.0
    %714 = vmatprep.subr.mxu0 0.0
    %715 = vmatpush2.msra.mxu0 0.0
    %716 = vmatprep.subr.mxu0 0.0
    %717 = vmatpush2.msra.mxu0 0.0
    %718 = vmatprep.subr.mxu0 0.0
    %719 = vmatpush2.msra.mxu0 0.0
    %720 = vmatprep.subr.mxu0 0.0
    %721 = vmatpush2.msra.mxu0 0.0
    %722 = vmatprep.subr.mxu0 0.0
    %723 = vmatpush2.msra.mxu0 0.0
    %724 = vmatprep.subr.mxu0 0.0
    %725 = vmatpush2.msra.mxu0 0.0
    %726 = vmatprep.mubr.f32.mxu0 0.0
    %727 = vmatmul.mubr.f32.gmra.mxu0 %v660
    %v728 = vpop.f32.mrf.mxu0
    %v729 = vadd.f32 0.0, %v728
    %v730 = vpop.f32.mrf.mxu0
    %731 = vdwg.mxu0
    %733 = vrot.lane.b32.xlu0 %v653, 96
    %v734 = vpop.permute.xlu0 %733
    %v735 = vsel %vm178, %v734, 0
    %737 = vmatprep.subr.mxu0 0.0
    %738 = vmatpush1.msra.mxu0 0.0
    %739 = vmatprep.subr.mxu0 0.0
    %740 = vmatpush1.msra.mxu0 0.0
    %741 = vmatprep.subr.mxu0 0.0
    %742 = vmatpush1.msra.mxu0 0.0
    %743 = vmatprep.subr.mxu0 0.0
    %744 = vmatpush1.msra.mxu0 0.0
    %745 = vmatprep.subr.mxu0 0.0
    %746 = vmatpush1.msra.mxu0 0.0
    %747 = vmatprep.subr.mxu0 0.0
    %748 = vmatpush1.msra.mxu0 0.0
    %749 = vmatprep.subr.mxu0 0.0
    %750 = vmatpush1.msra.mxu0 0.0
    %751 = vmatprep.subr.mxu0 0.0
    %752 = vmatpush1.msra.mxu0 0.0
    %753 = vmatprep.subr.mxu0 0.0
    %754 = vmatpush1.msra.mxu0 0.0
    %755 = vmatprep.subr.mxu0 0.0
    %756 = vmatpush1.msra.mxu0 0.0
    %757 = vmatprep.subr.mxu0 0.0
    %758 = vmatpush1.msra.mxu0 0.0
    %759 = vmatprep.subr.mxu0 0.0
    %760 = vmatpush1.msra.mxu0 0.0
    %761 = vmatprep.subr.mxu0 0.0
    %762 = vmatpush1.msra.mxu0 %v96
    %763 = vmatprep.subr.mxu0 0.0
    %764 = vmatpush1.msra.mxu0 %v95
    %765 = vmatprep.subr.mxu0 0.0
    %766 = vmatpush1.msra.mxu0 %v94
    %767 = vmatprep.subr.mxu0 0.0
    %768 = vmatpush1.msra.mxu0 %v93
    %769 = vmatprep.subr.mxu0 0.0
    %770 = vmatpush2.msra.mxu0 0.0
    %771 = vmatprep.subr.mxu0 0.0
    %772 = vmatpush2.msra.mxu0 0.0
    %773 = vmatprep.subr.mxu0 0.0
    %774 = vmatpush2.msra.mxu0 0.0
    %775 = vmatprep.subr.mxu0 0.0
    %776 = vmatpush2.msra.mxu0 0.0
    %777 = vmatprep.subr.mxu0 0.0
    %778 = vmatpush2.msra.mxu0 0.0
    %779 = vmatprep.subr.mxu0 0.0
    %780 = vmatpush2.msra.mxu0 0.0
    %781 = vmatprep.subr.mxu0 0.0
    %782 = vmatpush2.msra.mxu0 0.0
    %783 = vmatprep.subr.mxu0 0.0
    %784 = vmatpush2.msra.mxu0 0.0
    %785 = vmatprep.subr.mxu0 0.0
    %786 = vmatpush2.msra.mxu0 0.0
    %787 = vmatprep.subr.mxu0 0.0
    %788 = vmatpush2.msra.mxu0 0.0
    %789 = vmatprep.subr.mxu0 0.0
    %790 = vmatpush2.msra.mxu0 0.0
    %791 = vmatprep.subr.mxu0 0.0
    %792 = vmatpush2.msra.mxu0 0.0
    %793 = vmatprep.subr.mxu0 0.0
    %794 = vmatpush2.msra.mxu0 0.0
    %795 = vmatprep.subr.mxu0 0.0
    %796 = vmatpush2.msra.mxu0 0.0
    %797 = vmatprep.subr.mxu0 0.0
    %798 = vmatpush2.msra.mxu0 0.0
    %799 = vmatprep.subr.mxu0 0.0
    %800 = vmatpush2.msra.mxu0 0.0
    %801 = vmatprep.mubr.f32.mxu0 0.0
    %802 = vmatmul.mubr.f32.gmra.mxu0 %v735
    %v803 = vpop.f32.mrf.mxu0
    %v804 = vadd.f32 0.0, %v803
    %v805 = vpop.f32.mrf.mxu0
    %806 = vdwg.mxu0
    %v807 = vadd.f32 %v729, %v804
    %v808 = vadd.f32 %v807, %v257
    %v809 = vxor.u32 %v808, 2147483648
    %v810 = vmul.f32 %v809, 1.442695
    %v811 = vpow.pop %v810
    %v812 = vadd.f32 %v811, 1.0
    %v813 = vrcp.pop %v812
    %v814 = vmul.f32 1.0, %v813
    %v815 = vadd.f32 %v729, %v257
    %v816 = vadd.f32 %v804, %v268
    %818 = vrot.lane.b32.xlu0 %v816, 64
    %v819 = vpop.permute.xlu0 %818
    %v821 = vmul.f32 %v814, %v819
    %823 = vrot.lane.b32.xlu0 %v821, 64
    %v824 = vpop.permute.xlu0 %823
    %v826 = vadd.f32 %v815, %v824
    %v827 = vtanh.pop %v826
    %v828 = vsub.f32 1.0, %v814
    %830 = vrot.lane.b32.xlu0 %v827, 96
    %v831 = vpop.permute.xlu0 %830
    %v833 = vmul.f32 %v828, %v831
    %v834 = vmul.f32 %v814, %v653
    %v835 = vadd.f32 %v833, %v834
    %v836 = vld [vmem:[%s0 + $0x4] sm:$0x1]
    %v837 = vld [vmem:[%s0 + $0xc] sm:$0x1]
    %v840 = vrot.slane %v837, 7
    %v841 = vsel %vm103, %v840, %v836
    %v842 = vsel %vm105, %v841, 0
    %844 = vmatprep.subr.mxu0 0.0
    %845 = vmatpush1.msra.mxu0 0.0
    %846 = vmatprep.subr.mxu0 0.0
    %847 = vmatpush1.msra.mxu0 0.0
    %848 = vmatprep.subr.mxu0 0.0
    %849 = vmatpush1.msra.mxu0 0.0
    %850 = vmatprep.subr.mxu0 0.0
    %851 = vmatpush1.msra.mxu0 0.0
    %852 = vmatprep.subr.mxu0 0.0
    %853 = vmatpush1.msra.mxu0 0.0
    %854 = vmatprep.subr.mxu0 0.0
    %855 = vmatpush1.msra.mxu0 0.0
    %856 = vmatprep.subr.mxu0 0.0
    %857 = vmatpush1.msra.mxu0 0.0
    %858 = vmatprep.subr.mxu0 0.0
    %859 = vmatpush1.msra.mxu0 0.0
    %860 = vmatprep.subr.mxu0 0.0
    %861 = vmatpush1.msra.mxu0 0.0
    %862 = vmatprep.subr.mxu0 0.0
    %863 = vmatpush1.msra.mxu0 0.0
    %864 = vmatprep.subr.mxu0 0.0
    %865 = vmatpush1.msra.mxu0 0.0
    %866 = vmatprep.subr.mxu0 0.0
    %867 = vmatpush1.msra.mxu0 0.0
    %868 = vmatprep.subr.mxu0 0.0
    %869 = vmatpush1.msra.mxu0 0.0
    %870 = vmatprep.subr.mxu0 0.0
    %871 = vmatpush1.msra.mxu0 0.0
    %872 = vmatprep.subr.mxu0 0.0
    %873 = vmatpush1.msra.mxu0 %v92
    %874 = vmatprep.subr.mxu0 0.0
    %875 = vmatpush1.msra.mxu0 %v91
    %876 = vmatprep.subr.mxu0 0.0
    %877 = vmatpush2.msra.mxu0 0.0
    %878 = vmatprep.subr.mxu0 0.0
    %879 = vmatpush2.msra.mxu0 0.0
    %880 = vmatprep.subr.mxu0 0.0
    %881 = vmatpush2.msra.mxu0 0.0
    %882 = vmatprep.subr.mxu0 0.0
    %883 = vmatpush2.msra.mxu0 0.0
    %884 = vmatprep.subr.mxu0 0.0
    %885 = vmatpush2.msra.mxu0 0.0
    %886 = vmatprep.subr.mxu0 0.0
    %887 = vmatpush2.msra.mxu0 0.0
    %888 = vmatprep.subr.mxu0 0.0
    %889 = vmatpush2.msra.mxu0 0.0
    %890 = vmatprep.subr.mxu0 0.0
    %891 = vmatpush2.msra.mxu0 0.0
    %892 = vmatprep.subr.mxu0 0.0
    %893 = vmatpush2.msra.mxu0 0.0
    %894 = vmatprep.subr.mxu0 0.0
    %895 = vmatpush2.msra.mxu0 0.0
    %896 = vmatprep.subr.mxu0 0.0
    %897 = vmatpush2.msra.mxu0 0.0
    %898 = vmatprep.subr.mxu0 0.0
    %899 = vmatpush2.msra.mxu0 0.0
    %900 = vmatprep.subr.mxu0 0.0
    %901 = vmatpush2.msra.mxu0 0.0
    %902 = vmatprep.subr.mxu0 0.0
    %903 = vmatpush2.msra.mxu0 0.0
    %904 = vmatprep.subr.mxu0 0.0
    %905 = vmatpush2.msra.mxu0 0.0
    %906 = vmatprep.subr.mxu0 0.0
    %907 = vmatpush2.msra.mxu0 0.0
    %908 = vmatprep.mubr.f32.mxu0 0.0
    %909 = vmatmul.mubr.f32.gmra.mxu0 %v842
    %v910 = vpop.f32.mrf.mxu0
    %v911 = vadd.f32 0.0, %v910
    %v912 = vpop.f32.mrf.mxu0
    %913 = vdwg.mxu0
    %915 = vrot.lane.b32.xlu0 %v835, 96
    %v916 = vpop.permute.xlu0 %915
    %v917 = vsel %vm178, %v916, 0
    %919 = vmatprep.subr.mxu0 0.0
    %920 = vmatpush1.msra.mxu0 0.0
    %921 = vmatprep.subr.mxu0 0.0
    %922 = vmatpush1.msra.mxu0 0.0
    %923 = vmatprep.subr.mxu0 0.0
    %924 = vmatpush1.msra.mxu0 0.0
    %925 = vmatprep.subr.mxu0 0.0
    %926 = vmatpush1.msra.mxu0 0.0
    %927 = vmatprep.subr.mxu0 0.0
    %928 = vmatpush1.msra.mxu0 0.0
    %929 = vmatprep.subr.mxu0 0.0
    %930 = vmatpush1.msra.mxu0 0.0
    %931 = vmatprep.subr.mxu0 0.0
    %932 = vmatpush1.msra.mxu0 0.0
    %933 = vmatprep.subr.mxu0 0.0
    %934 = vmatpush1.msra.mxu0 0.0
    %935 = vmatprep.subr.mxu0 0.0
    %936 = vmatpush1.msra.mxu0 0.0
    %937 = vmatprep.subr.mxu0 0.0
    %938 = vmatpush1.msra.mxu0 0.0
    %939 = vmatprep.subr.mxu0 0.0
    %940 = vmatpush1.msra.mxu0 0.0
    %941 = vmatprep.subr.mxu0 0.0
    %942 = vmatpush1.msra.mxu0 0.0
    %943 = vmatprep.subr.mxu0 0.0
    %944 = vmatpush1.msra.mxu0 %v96
    %945 = vmatprep.subr.mxu0 0.0
    %946 = vmatpush1.msra.mxu0 %v95
    %947 = vmatprep.subr.mxu0 0.0
    %948 = vmatpush1.msra.mxu0 %v94
    %949 = vmatprep.subr.mxu0 0.0
    %950 = vmatpush1.msra.mxu0 %v93
    %951 = vmatprep.subr.mxu0 0.0
    %952 = vmatpush2.msra.mxu0 0.0
    %953 = vmatprep.subr.mxu0 0.0
    %954 = vmatpush2.msra.mxu0 0.0
    %955 = vmatprep.subr.mxu0 0.0
    %956 = vmatpush2.msra.mxu0 0.0
    %957 = vmatprep.subr.mxu0 0.0
    %958 = vmatpush2.msra.mxu0 0.0
    %959 = vmatprep.subr.mxu0 0.0
    %960 = vmatpush2.msra.mxu0 0.0
    %961 = vmatprep.subr.mxu0 0.0
    %962 = vmatpush2.msra.mxu0 0.0
    %963 = vmatprep.subr.mxu0 0.0
    %964 = vmatpush2.msra.mxu0 0.0
    %965 = vmatprep.subr.mxu0 0.0
    %966 = vmatpush2.msra.mxu0 0.0
    %967 = vmatprep.subr.mxu0 0.0
    %968 = vmatpush2.msra.mxu0 0.0
    %969 = vmatprep.subr.mxu0 0.0
    %970 = vmatpush2.msra.mxu0 0.0
    %971 = vmatprep.subr.mxu0 0.0
    %972 = vmatpush2.msra.mxu0 0.0
    %973 = vmatprep.subr.mxu0 0.0
    %974 = vmatpush2.msra.mxu0 0.0
    %975 = vmatprep.subr.mxu0 0.0
    %976 = vmatpush2.msra.mxu0 0.0
    %977 = vmatprep.subr.mxu0 0.0
    %978 = vmatpush2.msra.mxu0 0.0
    %979 = vmatprep.subr.mxu0 0.0
    %980 = vmatpush2.msra.mxu0 0.0
    %981 = vmatprep.subr.mxu0 0.0
    %982 = vmatpush2.msra.mxu0 0.0
    %983 = vmatprep.mubr.f32.mxu0 0.0
    %984 = vmatmul.mubr.f32.gmra.mxu0 %v917
    %v985 = vpop.f32.mrf.mxu0
    %v986 = vadd.f32 0.0, %v985
    %v987 = vpop.f32.mrf.mxu0
    %988 = vdwg.mxu0
    %v989 = vadd.f32 %v911, %v986
    %v990 = vadd.f32 %v989, %v257
    %v991 = vxor.u32 %v990, 2147483648
    %v992 = vmul.f32 %v991, 1.442695
    %v993 = vpow.pop %v992
    %v994 = vadd.f32 %v993, 1.0
    %v995 = vrcp.pop %v994
    %v996 = vmul.f32 1.0, %v995
    %v997 = vadd.f32 %v911, %v257
    %v998 = vadd.f32 %v986, %v268
    %1000 = vrot.lane.b32.xlu0 %v998, 64
    %v1001 = vpop.permute.xlu0 %1000
    %v1003 = vmul.f32 %v996, %v1001
    %1005 = vrot.lane.b32.xlu0 %v1003, 64
    %v1006 = vpop.permute.xlu0 %1005
    %v1008 = vadd.f32 %v997, %v1006
    %v1009 = vtanh.pop %v1008
    %v1010 = vsub.f32 1.0, %v996
    %1012 = vrot.lane.b32.xlu0 %v1009, 96
    %v1013 = vpop.permute.xlu0 %1012
    %v1015 = vmul.f32 %v1010, %v1013
    %v1016 = vmul.f32 %v996, %v835
    %v1017 = vadd.f32 %v1015, %v1016
    %v1018 = vld [vmem:[%s0 + $0x5] sm:$0x1]
    %v1019 = vld [vmem:[%s0 + $0xd] sm:$0x1]
    %v1022 = vrot.slane %v1019, 7
    %v1023 = vsel %vm103, %v1022, %v1018
    %v1024 = vsel %vm105, %v1023, 0
    %1026 = vmatprep.subr.mxu0 0.0
    %1027 = vmatpush1.msra.mxu0 0.0
    %1028 = vmatprep.subr.mxu0 0.0
    %1029 = vmatpush1.msra.mxu0 0.0
    %1030 = vmatprep.subr.mxu0 0.0
    %1031 = vmatpush1.msra.mxu0 0.0
    %1032 = vmatprep.subr.mxu0 0.0
    %1033 = vmatpush1.msra.mxu0 0.0
    %1034 = vmatprep.subr.mxu0 0.0
    %1035 = vmatpush1.msra.mxu0 0.0
    %1036 = vmatprep.subr.mxu0 0.0
    %1037 = vmatpush1.msra.mxu0 0.0
    %1038 = vmatprep.subr.mxu0 0.0
    %1039 = vmatpush1.msra.mxu0 0.0
    %1040 = vmatprep.subr.mxu0 0.0
    %1041 = vmatpush1.msra.mxu0 0.0
    %1042 = vmatprep.subr.mxu0 0.0
    %1043 = vmatpush1.msra.mxu0 0.0
    %1044 = vmatprep.subr.mxu0 0.0
    %1045 = vmatpush1.msra.mxu0 0.0
    %1046 = vmatprep.subr.mxu0 0.0
    %1047 = vmatpush1.msra.mxu0 0.0
    %1048 = vmatprep.subr.mxu0 0.0
    %1049 = vmatpush1.msra.mxu0 0.0
    %1050 = vmatprep.subr.mxu0 0.0
    %1051 = vmatpush1.msra.mxu0 0.0
    %1052 = vmatprep.subr.mxu0 0.0
    %1053 = vmatpush1.msra.mxu0 0.0
    %1054 = vmatprep.subr.mxu0 0.0
    %1055 = vmatpush1.msra.mxu0 %v92
    %1056 = vmatprep.subr.mxu0 0.0
    %1057 = vmatpush1.msra.mxu0 %v91
    %1058 = vmatprep.subr.mxu0 0.0
    %1059 = vmatpush2.msra.mxu0 0.0
    %1060 = vmatprep.subr.mxu0 0.0
    %1061 = vmatpush2.msra.mxu0 0.0
    %1062 = vmatprep.subr.mxu0 0.0
    %1063 = vmatpush2.msra.mxu0 0.0
    %1064 = vmatprep.subr.mxu0 0.0
    %1065 = vmatpush2.msra.mxu0 0.0
    %1066 = vmatprep.subr.mxu0 0.0
    %1067 = vmatpush2.msra.mxu0 0.0
    %1068 = vmatprep.subr.mxu0 0.0
    %1069 = vmatpush2.msra.mxu0 0.0
    %1070 = vmatprep.subr.mxu0 0.0
    %1071 = vmatpush2.msra.mxu0 0.0
    %1072 = vmatprep.subr.mxu0 0.0
    %1073 = vmatpush2.msra.mxu0 0.0
    %1074 = vmatprep.subr.mxu0 0.0
    %1075 = vmatpush2.msra.mxu0 0.0
    %1076 = vmatprep.subr.mxu0 0.0
    %1077 = vmatpush2.msra.mxu0 0.0
    %1078 = vmatprep.subr.mxu0 0.0
    %1079 = vmatpush2.msra.mxu0 0.0
    %1080 = vmatprep.subr.mxu0 0.0
    %1081 = vmatpush2.msra.mxu0 0.0
    %1082 = vmatprep.subr.mxu0 0.0
    %1083 = vmatpush2.msra.mxu0 0.0
    %1084 = vmatprep.subr.mxu0 0.0
    %1085 = vmatpush2.msra.mxu0 0.0
    %1086 = vmatprep.subr.mxu0 0.0
    %1087 = vmatpush2.msra.mxu0 0.0
    %1088 = vmatprep.subr.mxu0 0.0
    %1089 = vmatpush2.msra.mxu0 0.0
    %1090 = vmatprep.mubr.f32.mxu0 0.0
    %1091 = vmatmul.mubr.f32.gmra.mxu0 %v1024
    %v1092 = vpop.f32.mrf.mxu0
    %v1093 = vadd.f32 0.0, %v1092
    %v1094 = vpop.f32.mrf.mxu0
    %1095 = vdwg.mxu0
    %1097 = vrot.lane.b32.xlu0 %v1017, 96
    %v1098 = vpop.permute.xlu0 %1097
    %v1099 = vsel %vm178, %v1098, 0
    %1101 = vmatprep.subr.mxu0 0.0
    %1102 = vmatpush1.msra.mxu0 0.0
    %1103 = vmatprep.subr.mxu0 0.0
    %1104 = vmatpush1.msra.mxu0 0.0
    %1105 = vmatprep.subr.mxu0 0.0
    %1106 = vmatpush1.msra.mxu0 0.0
    %1107 = vmatprep.subr.mxu0 0.0
    %1108 = vmatpush1.msra.mxu0 0.0
    %1109 = vmatprep.subr.mxu0 0.0
    %1110 = vmatpush1.msra.mxu0 0.0
    %1111 = vmatprep.subr.mxu0 0.0
    %1112 = vmatpush1.msra.mxu0 0.0
    %1113 = vmatprep.subr.mxu0 0.0
    %1114 = vmatpush1.msra.mxu0 0.0
    %1115 = vmatprep.subr.mxu0 0.0
    %1116 = vmatpush1.msra.mxu0 0.0
    %1117 = vmatprep.subr.mxu0 0.0
    %1118 = vmatpush1.msra.mxu0 0.0
    %1119 = vmatprep.subr.mxu0 0.0
    %1120 = vmatpush1.msra.mxu0 0.0
    %1121 = vmatprep.subr.mxu0 0.0
    %1122 = vmatpush1.msra.mxu0 0.0
    %1123 = vmatprep.subr.mxu0 0.0
    %1124 = vmatpush1.msra.mxu0 0.0
    %1125 = vmatprep.subr.mxu0 0.0
    %1126 = vmatpush1.msra.mxu0 %v96
    %1127 = vmatprep.subr.mxu0 0.0
    %1128 = vmatpush1.msra.mxu0 %v95
    %1129 = vmatprep.subr.mxu0 0.0
    %1130 = vmatpush1.msra.mxu0 %v94
    %1131 = vmatprep.subr.mxu0 0.0
    %1132 = vmatpush1.msra.mxu0 %v93
    %1133 = vmatprep.subr.mxu0 0.0
    %1134 = vmatpush2.msra.mxu0 0.0
    %1135 = vmatprep.subr.mxu0 0.0
    %1136 = vmatpush2.msra.mxu0 0.0
    %1137 = vmatprep.subr.mxu0 0.0
    %1138 = vmatpush2.msra.mxu0 0.0
    %1139 = vmatprep.subr.mxu0 0.0
    %1140 = vmatpush2.msra.mxu0 0.0
    %1141 = vmatprep.subr.mxu0 0.0
    %1142 = vmatpush2.msra.mxu0 0.0
    %1143 = vmatprep.subr.mxu0 0.0
    %1144 = vmatpush2.msra.mxu0 0.0
    %1145 = vmatprep.subr.mxu0 0.0
    %1146 = vmatpush2.msra.mxu0 0.0
    %1147 = vmatprep.subr.mxu0 0.0
    %1148 = vmatpush2.msra.mxu0 0.0
    %1149 = vmatprep.subr.mxu0 0.0
    %1150 = vmatpush2.msra.mxu0 0.0
    %1151 = vmatprep.subr.mxu0 0.0
    %1152 = vmatpush2.msra.mxu0 0.0
    %1153 = vmatprep.subr.mxu0 0.0
    %1154 = vmatpush2.msra.mxu0 0.0
    %1155 = vmatprep.subr.mxu0 0.0
    %1156 = vmatpush2.msra.mxu0 0.0
    %1157 = vmatprep.subr.mxu0 0.0
    %1158 = vmatpush2.msra.mxu0 0.0
    %1159 = vmatprep.subr.mxu0 0.0
    %1160 = vmatpush2.msra.mxu0 0.0
    %1161 = vmatprep.subr.mxu0 0.0
    %1162 = vmatpush2.msra.mxu0 0.0
    %1163 = vmatprep.subr.mxu0 0.0
    %1164 = vmatpush2.msra.mxu0 0.0
    %1165 = vmatprep.mubr.f32.mxu0 0.0
    %1166 = vmatmul.mubr.f32.gmra.mxu0 %v1099
    %v1167 = vpop.f32.mrf.mxu0
    %v1168 = vadd.f32 0.0, %v1167
    %v1169 = vpop.f32.mrf.mxu0
    %1170 = vdwg.mxu0
    %v1171 = vadd.f32 %v1093, %v1168
    %v1172 = vadd.f32 %v1171, %v257
    %v1173 = vxor.u32 %v1172, 2147483648
    %v1174 = vmul.f32 %v1173, 1.442695
    %v1175 = vpow.pop %v1174
    %v1176 = vadd.f32 %v1175, 1.0
    %v1177 = vrcp.pop %v1176
    %v1178 = vmul.f32 1.0, %v1177
    %v1179 = vadd.f32 %v1093, %v257
    %v1180 = vadd.f32 %v1168, %v268
    %1182 = vrot.lane.b32.xlu0 %v1180, 64
    %v1183 = vpop.permute.xlu0 %1182
    %v1185 = vmul.f32 %v1178, %v1183
    %1187 = vrot.lane.b32.xlu0 %v1185, 64
    %v1188 = vpop.permute.xlu0 %1187
    %v1190 = vadd.f32 %v1179, %v1188
    %v1191 = vtanh.pop %v1190
    %v1192 = vsub.f32 1.0, %v1178
    %1194 = vrot.lane.b32.xlu0 %v1191, 96
    %v1195 = vpop.permute.xlu0 %1194
    %v1197 = vmul.f32 %v1192, %v1195
    %v1198 = vmul.f32 %v1178, %v1017
    %v1199 = vadd.f32 %v1197, %v1198
    %v1200 = vld [vmem:[%s0 + $0x6] sm:$0x1]
    %v1201 = vld [vmem:[%s0 + $0xe] sm:$0x1]
    %v1204 = vrot.slane %v1201, 7
    %v1205 = vsel %vm103, %v1204, %v1200
    %v1206 = vsel %vm105, %v1205, 0
    %1208 = vmatprep.subr.mxu0 0.0
    %1209 = vmatpush1.msra.mxu0 0.0
    %1210 = vmatprep.subr.mxu0 0.0
    %1211 = vmatpush1.msra.mxu0 0.0
    %1212 = vmatprep.subr.mxu0 0.0
    %1213 = vmatpush1.msra.mxu0 0.0
    %1214 = vmatprep.subr.mxu0 0.0
    %1215 = vmatpush1.msra.mxu0 0.0
    %1216 = vmatprep.subr.mxu0 0.0
    %1217 = vmatpush1.msra.mxu0 0.0
    %1218 = vmatprep.subr.mxu0 0.0
    %1219 = vmatpush1.msra.mxu0 0.0
    %1220 = vmatprep.subr.mxu0 0.0
    %1221 = vmatpush1.msra.mxu0 0.0
    %1222 = vmatprep.subr.mxu0 0.0
    %1223 = vmatpush1.msra.mxu0 0.0
    %1224 = vmatprep.subr.mxu0 0.0
    %1225 = vmatpush1.msra.mxu0 0.0
    %1226 = vmatprep.subr.mxu0 0.0
    %1227 = vmatpush1.msra.mxu0 0.0
    %1228 = vmatprep.subr.mxu0 0.0
    %1229 = vmatpush1.msra.mxu0 0.0
    %1230 = vmatprep.subr.mxu0 0.0
    %1231 = vmatpush1.msra.mxu0 0.0
    %1232 = vmatprep.subr.mxu0 0.0
    %1233 = vmatpush1.msra.mxu0 0.0
    %1234 = vmatprep.subr.mxu0 0.0
    %1235 = vmatpush1.msra.mxu0 0.0
    %1236 = vmatprep.subr.mxu0 0.0
    %1237 = vmatpush1.msra.mxu0 %v92
    %1238 = vmatprep.subr.mxu0 0.0
    %1239 = vmatpush1.msra.mxu0 %v91
    %1240 = vmatprep.subr.mxu0 0.0
    %1241 = vmatpush2.msra.mxu0 0.0
    %1242 = vmatprep.subr.mxu0 0.0
    %1243 = vmatpush2.msra.mxu0 0.0
    %1244 = vmatprep.subr.mxu0 0.0
    %1245 = vmatpush2.msra.mxu0 0.0
    %1246 = vmatprep.subr.mxu0 0.0
    %1247 = vmatpush2.msra.mxu0 0.0
    %1248 = vmatprep.subr.mxu0 0.0
    %1249 = vmatpush2.msra.mxu0 0.0
    %1250 = vmatprep.subr.mxu0 0.0
    %1251 = vmatpush2.msra.mxu0 0.0
    %1252 = vmatprep.subr.mxu0 0.0
    %1253 = vmatpush2.msra.mxu0 0.0
    %1254 = vmatprep.subr.mxu0 0.0
    %1255 = vmatpush2.msra.mxu0 0.0
    %1256 = vmatprep.subr.mxu0 0.0
    %1257 = vmatpush2.msra.mxu0 0.0
    %1258 = vmatprep.subr.mxu0 0.0
    %1259 = vmatpush2.msra.mxu0 0.0
    %1260 = vmatprep.subr.mxu0 0.0
    %1261 = vmatpush2.msra.mxu0 0.0
    %1262 = vmatprep.subr.mxu0 0.0
    %1263 = vmatpush2.msra.mxu0 0.0
    %1264 = vmatprep.subr.mxu0 0.0
    %1265 = vmatpush2.msra.mxu0 0.0
    %1266 = vmatprep.subr.mxu0 0.0
    %1267 = vmatpush2.msra.mxu0 0.0
    %1268 = vmatprep.subr.mxu0 0.0
    %1269 = vmatpush2.msra.mxu0 0.0
    %1270 = vmatprep.subr.mxu0 0.0
    %1271 = vmatpush2.msra.mxu0 0.0
    %1272 = vmatprep.mubr.f32.mxu0 0.0
    %1273 = vmatmul.mubr.f32.gmra.mxu0 %v1206
    %v1274 = vpop.f32.mrf.mxu0
    %v1275 = vadd.f32 0.0, %v1274
    %v1276 = vpop.f32.mrf.mxu0
    %1277 = vdwg.mxu0
    %1279 = vrot.lane.b32.xlu0 %v1199, 96
    %v1280 = vpop.permute.xlu0 %1279
    %v1281 = vsel %vm178, %v1280, 0
    %1283 = vmatprep.subr.mxu0 0.0
    %1284 = vmatpush1.msra.mxu0 0.0
    %1285 = vmatprep.subr.mxu0 0.0
    %1286 = vmatpush1.msra.mxu0 0.0
    %1287 = vmatprep.subr.mxu0 0.0
    %1288 = vmatpush1.msra.mxu0 0.0
    %1289 = vmatprep.subr.mxu0 0.0
    %1290 = vmatpush1.msra.mxu0 0.0
    %1291 = vmatprep.subr.mxu0 0.0
    %1292 = vmatpush1.msra.mxu0 0.0
    %1293 = vmatprep.subr.mxu0 0.0
    %1294 = vmatpush1.msra.mxu0 0.0
    %1295 = vmatprep.subr.mxu0 0.0
    %1296 = vmatpush1.msra.mxu0 0.0
    %1297 = vmatprep.subr.mxu0 0.0
    %1298 = vmatpush1.msra.mxu0 0.0
    %1299 = vmatprep.subr.mxu0 0.0
    %1300 = vmatpush1.msra.mxu0 0.0
    %1301 = vmatprep.subr.mxu0 0.0
    %1302 = vmatpush1.msra.mxu0 0.0
    %1303 = vmatprep.subr.mxu0 0.0
    %1304 = vmatpush1.msra.mxu0 0.0
    %1305 = vmatprep.subr.mxu0 0.0
    %1306 = vmatpush1.msra.mxu0 0.0
    %1307 = vmatprep.subr.mxu0 0.0
    %1308 = vmatpush1.msra.mxu0 %v96
    %1309 = vmatprep.subr.mxu0 0.0
    %1310 = vmatpush1.msra.mxu0 %v95
    %1311 = vmatprep.subr.mxu0 0.0
    %1312 = vmatpush1.msra.mxu0 %v94
    %1313 = vmatprep.subr.mxu0 0.0
    %1314 = vmatpush1.msra.mxu0 %v93
    %1315 = vmatprep.subr.mxu0 0.0
    %1316 = vmatpush2.msra.mxu0 0.0
    %1317 = vmatprep.subr.mxu0 0.0
    %1318 = vmatpush2.msra.mxu0 0.0
    %1319 = vmatprep.subr.mxu0 0.0
    %1320 = vmatpush2.msra.mxu0 0.0
    %1321 = vmatprep.subr.mxu0 0.0
    %1322 = vmatpush2.msra.mxu0 0.0
    %1323 = vmatprep.subr.mxu0 0.0
    %1324 = vmatpush2.msra.mxu0 0.0
    %1325 = vmatprep.subr.mxu0 0.0
    %1326 = vmatpush2.msra.mxu0 0.0
    %1327 = vmatprep.subr.mxu0 0.0
    %1328 = vmatpush2.msra.mxu0 0.0
    %1329 = vmatprep.subr.mxu0 0.0
    %1330 = vmatpush2.msra.mxu0 0.0
    %1331 = vmatprep.subr.mxu0 0.0
    %1332 = vmatpush2.msra.mxu0 0.0
    %1333 = vmatprep.subr.mxu0 0.0
    %1334 = vmatpush2.msra.mxu0 0.0
    %1335 = vmatprep.subr.mxu0 0.0
    %1336 = vmatpush2.msra.mxu0 0.0
    %1337 = vmatprep.subr.mxu0 0.0
    %1338 = vmatpush2.msra.mxu0 0.0
    %1339 = vmatprep.subr.mxu0 0.0
    %1340 = vmatpush2.msra.mxu0 0.0
    %1341 = vmatprep.subr.mxu0 0.0
    %1342 = vmatpush2.msra.mxu0 0.0
    %1343 = vmatprep.subr.mxu0 0.0
    %1344 = vmatpush2.msra.mxu0 0.0
    %1345 = vmatprep.subr.mxu0 0.0
    %1346 = vmatpush2.msra.mxu0 0.0
    %1347 = vmatprep.mubr.f32.mxu0 0.0
    %1348 = vmatmul.mubr.f32.gmra.mxu0 %v1281
    %v1349 = vpop.f32.mrf.mxu0
    %v1350 = vadd.f32 0.0, %v1349
    %v1351 = vpop.f32.mrf.mxu0
    %1352 = vdwg.mxu0
    %v1353 = vadd.f32 %v1275, %v1350
    %v1354 = vadd.f32 %v1353, %v257
    %v1355 = vxor.u32 %v1354, 2147483648
    %v1356 = vmul.f32 %v1355, 1.442695
    %v1357 = vpow.pop %v1356
    %v1358 = vadd.f32 %v1357, 1.0
    %v1359 = vrcp.pop %v1358
    %v1360 = vmul.f32 1.0, %v1359
    %v1361 = vadd.f32 %v1275, %v257
    %v1362 = vadd.f32 %v1350, %v268
    %1364 = vrot.lane.b32.xlu0 %v1362, 64
    %v1365 = vpop.permute.xlu0 %1364
    %v1367 = vmul.f32 %v1360, %v1365
    %1369 = vrot.lane.b32.xlu0 %v1367, 64
    %v1370 = vpop.permute.xlu0 %1369
    %v1372 = vadd.f32 %v1361, %v1370
    %v1373 = vtanh.pop %v1372
    %v1374 = vsub.f32 1.0, %v1360
    %1376 = vrot.lane.b32.xlu0 %v1373, 96
    %v1377 = vpop.permute.xlu0 %1376
    %v1379 = vmul.f32 %v1374, %v1377
    %v1380 = vmul.f32 %v1360, %v1199
    %v1381 = vadd.f32 %v1379, %v1380
    %v1382 = vld [vmem:[%s0 + $0x7] sm:$0x1]
    %v1383 = vld [vmem:[%s0 + $0xf] sm:$0x1]
    %v1386 = vrot.slane %v1383, 7
    %v1387 = vsel %vm103, %v1386, %v1382
    %v1388 = vsel %vm105, %v1387, 0
    %1390 = vmatprep.subr.mxu0 0.0
    %1391 = vmatpush1.msra.mxu0 0.0
    %1392 = vmatprep.subr.mxu0 0.0
    %1393 = vmatpush1.msra.mxu0 0.0
    %1394 = vmatprep.subr.mxu0 0.0
    %1395 = vmatpush1.msra.mxu0 0.0
    %1396 = vmatprep.subr.mxu0 0.0
    %1397 = vmatpush1.msra.mxu0 0.0
    %1398 = vmatprep.subr.mxu0 0.0
    %1399 = vmatpush1.msra.mxu0 0.0
    %1400 = vmatprep.subr.mxu0 0.0
    %1401 = vmatpush1.msra.mxu0 0.0
    %1402 = vmatprep.subr.mxu0 0.0
    %1403 = vmatpush1.msra.mxu0 0.0
    %1404 = vmatprep.subr.mxu0 0.0
    %1405 = vmatpush1.msra.mxu0 0.0
    %1406 = vmatprep.subr.mxu0 0.0
    %1407 = vmatpush1.msra.mxu0 0.0
    %1408 = vmatprep.subr.mxu0 0.0
    %1409 = vmatpush1.msra.mxu0 0.0
    %1410 = vmatprep.subr.mxu0 0.0
    %1411 = vmatpush1.msra.mxu0 0.0
    %1412 = vmatprep.subr.mxu0 0.0
    %1413 = vmatpush1.msra.mxu0 0.0
    %1414 = vmatprep.subr.mxu0 0.0
    %1415 = vmatpush1.msra.mxu0 0.0
    %1416 = vmatprep.subr.mxu0 0.0
    %1417 = vmatpush1.msra.mxu0 0.0
    %1418 = vmatprep.subr.mxu0 0.0
    %1419 = vmatpush1.msra.mxu0 %v92
    %1420 = vmatprep.subr.mxu0 0.0
    %1421 = vmatpush1.msra.mxu0 %v91
    %1422 = vmatprep.subr.mxu0 0.0
    %1423 = vmatpush2.msra.mxu0 0.0
    %1424 = vmatprep.subr.mxu0 0.0
    %1425 = vmatpush2.msra.mxu0 0.0
    %1426 = vmatprep.subr.mxu0 0.0
    %1427 = vmatpush2.msra.mxu0 0.0
    %1428 = vmatprep.subr.mxu0 0.0
    %1429 = vmatpush2.msra.mxu0 0.0
    %1430 = vmatprep.subr.mxu0 0.0
    %1431 = vmatpush2.msra.mxu0 0.0
    %1432 = vmatprep.subr.mxu0 0.0
    %1433 = vmatpush2.msra.mxu0 0.0
    %1434 = vmatprep.subr.mxu0 0.0
    %1435 = vmatpush2.msra.mxu0 0.0
    %1436 = vmatprep.subr.mxu0 0.0
    %1437 = vmatpush2.msra.mxu0 0.0
    %1438 = vmatprep.subr.mxu0 0.0
    %1439 = vmatpush2.msra.mxu0 0.0
    %1440 = vmatprep.subr.mxu0 0.0
    %1441 = vmatpush2.msra.mxu0 0.0
    %1442 = vmatprep.subr.mxu0 0.0
    %1443 = vmatpush2.msra.mxu0 0.0
    %1444 = vmatprep.subr.mxu0 0.0
    %1445 = vmatpush2.msra.mxu0 0.0
    %1446 = vmatprep.subr.mxu0 0.0
    %1447 = vmatpush2.msra.mxu0 0.0
    %1448 = vmatprep.subr.mxu0 0.0
    %1449 = vmatpush2.msra.mxu0 0.0
    %1450 = vmatprep.subr.mxu0 0.0
    %1451 = vmatpush2.msra.mxu0 0.0
    %1452 = vmatprep.subr.mxu0 0.0
    %1453 = vmatpush2.msra.mxu0 0.0
    %1454 = vmatprep.mubr.f32.mxu0 0.0
    %1455 = vmatmul.mubr.f32.gmra.mxu0 %v1388
    %v1456 = vpop.f32.mrf.mxu0
    %v1457 = vadd.f32 0.0, %v1456
    %v1458 = vpop.f32.mrf.mxu0
    %1459 = vdwg.mxu0
    %1461 = vrot.lane.b32.xlu0 %v1381, 96
    %v1462 = vpop.permute.xlu0 %1461
    %v1463 = vsel %vm178, %v1462, 0
    %1465 = vmatprep.subr.mxu0 0.0
    %1466 = vmatpush1.msra.mxu0 0.0
    %1467 = vmatprep.subr.mxu0 0.0
    %1468 = vmatpush1.msra.mxu0 0.0
    %1469 = vmatprep.subr.mxu0 0.0
    %1470 = vmatpush1.msra.mxu0 0.0
    %1471 = vmatprep.subr.mxu0 0.0
    %1472 = vmatpush1.msra.mxu0 0.0
    %1473 = vmatprep.subr.mxu0 0.0
    %1474 = vmatpush1.msra.mxu0 0.0
    %1475 = vmatprep.subr.mxu0 0.0
    %1476 = vmatpush1.msra.mxu0 0.0
    %1477 = vmatprep.subr.mxu0 0.0
    %1478 = vmatpush1.msra.mxu0 0.0
    %1479 = vmatprep.subr.mxu0 0.0
    %1480 = vmatpush1.msra.mxu0 0.0
    %1481 = vmatprep.subr.mxu0 0.0
    %1482 = vmatpush1.msra.mxu0 0.0
    %1483 = vmatprep.subr.mxu0 0.0
    %1484 = vmatpush1.msra.mxu0 0.0
    %1485 = vmatprep.subr.mxu0 0.0
    %1486 = vmatpush1.msra.mxu0 0.0
    %1487 = vmatprep.subr.mxu0 0.0
    %1488 = vmatpush1.msra.mxu0 0.0
    %1489 = vmatprep.subr.mxu0 0.0
    %1490 = vmatpush1.msra.mxu0 %v96
    %1491 = vmatprep.subr.mxu0 0.0
    %1492 = vmatpush1.msra.mxu0 %v95
    %1493 = vmatprep.subr.mxu0 0.0
    %1494 = vmatpush1.msra.mxu0 %v94
    %1495 = vmatprep.subr.mxu0 0.0
    %1496 = vmatpush1.msra.mxu0 %v93
    %1497 = vmatprep.subr.mxu0 0.0
    %1498 = vmatpush2.msra.mxu0 0.0
    %1499 = vmatprep.subr.mxu0 0.0
    %1500 = vmatpush2.msra.mxu0 0.0
    %1501 = vmatprep.subr.mxu0 0.0
    %1502 = vmatpush2.msra.mxu0 0.0
    %1503 = vmatprep.subr.mxu0 0.0
    %1504 = vmatpush2.msra.mxu0 0.0
    %1505 = vmatprep.subr.mxu0 0.0
    %1506 = vmatpush2.msra.mxu0 0.0
    %1507 = vmatprep.subr.mxu0 0.0
    %1508 = vmatpush2.msra.mxu0 0.0
    %1509 = vmatprep.subr.mxu0 0.0
    %1510 = vmatpush2.msra.mxu0 0.0
    %1511 = vmatprep.subr.mxu0 0.0
    %1512 = vmatpush2.msra.mxu0 0.0
    %1513 = vmatprep.subr.mxu0 0.0
    %1514 = vmatpush2.msra.mxu0 0.0
    %1515 = vmatprep.subr.mxu0 0.0
    %1516 = vmatpush2.msra.mxu0 0.0
    %1517 = vmatprep.subr.mxu0 0.0
    %1518 = vmatpush2.msra.mxu0 0.0
    %1519 = vmatprep.subr.mxu0 0.0
    %1520 = vmatpush2.msra.mxu0 0.0
    %1521 = vmatprep.subr.mxu0 0.0
    %1522 = vmatpush2.msra.mxu0 0.0
    %1523 = vmatprep.subr.mxu0 0.0
    %1524 = vmatpush2.msra.mxu0 0.0
    %1525 = vmatprep.subr.mxu0 0.0
    %1526 = vmatpush2.msra.mxu0 0.0
    %1527 = vmatprep.subr.mxu0 0.0
    %1528 = vmatpush2.msra.mxu0 0.0
    %1529 = vmatprep.mubr.f32.mxu0 0.0
    %1530 = vmatmul.mubr.f32.gmra.mxu0 %v1463
    %v1531 = vpop.f32.mrf.mxu0
    %v1532 = vadd.f32 0.0, %v1531
    %v1533 = vpop.f32.mrf.mxu0
    %1534 = vdwg.mxu0
    %v1535 = vadd.f32 %v1457, %v1532
    %v1536 = vadd.f32 %v1535, %v257
    %v1537 = vxor.u32 %v1536, 2147483648
    %v1538 = vmul.f32 %v1537, 1.442695
    %v1539 = vpow.pop %v1538
    %v1540 = vadd.f32 %v1539, 1.0
    %v1541 = vrcp.pop %v1540
    %v1542 = vmul.f32 1.0, %v1541
    %v1543 = vadd.f32 %v1457, %v257
    %v1544 = vadd.f32 %v1532, %v268
    %1546 = vrot.lane.b32.xlu0 %v1544, 64
    %v1547 = vpop.permute.xlu0 %1546
    %v1549 = vmul.f32 %v1542, %v1547
    %1551 = vrot.lane.b32.xlu0 %v1549, 64
    %v1552 = vpop.permute.xlu0 %1551
    %v1554 = vadd.f32 %v1543, %v1552
    %v1555 = vtanh.pop %v1554
    %v1556 = vsub.f32 1.0, %v1542
    %1558 = vrot.lane.b32.xlu0 %v1555, 96
    %v1559 = vpop.permute.xlu0 %1558
    %v1561 = vmul.f32 %v1556, %v1559
    %v1562 = vmul.f32 %v1542, %v1381
    %v1563 = vadd.f32 %v1561, %v1562
    %v1564 = vld [vmem:[%s4] sm:$0xff]
    %v1565 = vld [vmem:[%s4 + $0x8] sm:$0xff]
    %v1566 = vld [vmem:[%s4 + $0x10] sm:$0xff]
    %v1567 = vld [vmem:[%s4 + $0x18] sm:$0xff]
    %v1568 = vld [vmem:[#allocation5] sm:$0x1]
    %v1570 = vlaneseq
    %v1571 = vshrl.u32 %v1570, 7
    %v1572 = vsub.s32 0, %v1571
    %v1573 = vrot.slane %v1568, %v1572
    %1576 = vrot.lane.b32.xlu0 %v1563, 96
    %v1577 = vpop.permute.xlu0 %1576
    %v1578 = vsel %vm178, %v1577, 0
    %1580 = vmatprep.subr.mxu0 0.0
    %1581 = vmatpush1.msra.mxu0 0.0
    %1582 = vmatprep.subr.mxu0 0.0
    %1583 = vmatpush1.msra.mxu0 0.0
    %1584 = vmatprep.subr.mxu0 0.0
    %1585 = vmatpush1.msra.mxu0 0.0
    %1586 = vmatprep.subr.mxu0 0.0
    %1587 = vmatpush1.msra.mxu0 0.0
    %1588 = vmatprep.subr.mxu0 0.0
    %1589 = vmatpush1.msra.mxu0 0.0
    %1590 = vmatprep.subr.mxu0 0.0
    %1591 = vmatpush1.msra.mxu0 0.0
    %1592 = vmatprep.subr.mxu0 0.0
    %1593 = vmatpush1.msra.mxu0 0.0
    %1594 = vmatprep.subr.mxu0 0.0
    %1595 = vmatpush1.msra.mxu0 0.0
    %1596 = vmatprep.subr.mxu0 0.0
    %1597 = vmatpush1.msra.mxu0 0.0
    %1598 = vmatprep.subr.mxu0 0.0
    %1599 = vmatpush1.msra.mxu0 0.0
    %1600 = vmatprep.subr.mxu0 0.0
    %1601 = vmatpush1.msra.mxu0 0.0
    %1602 = vmatprep.subr.mxu0 0.0
    %1603 = vmatpush1.msra.mxu0 0.0
    %1604 = vmatprep.subr.mxu0 0.0
    %1605 = vmatpush1.msra.mxu0 %v1567
    %1606 = vmatprep.subr.mxu0 0.0
    %1607 = vmatpush1.msra.mxu0 %v1566
    %1608 = vmatprep.subr.mxu0 0.0
    %1609 = vmatpush1.msra.mxu0 %v1565
    %1610 = vmatprep.subr.mxu0 0.0
    %1611 = vmatpush1.msra.mxu0 %v1564
    %1612 = vmatprep.subr.mxu0 0.0
    %1613 = vmatpush2.msra.mxu0 0.0
    %1614 = vmatprep.subr.mxu0 0.0
    %1615 = vmatpush2.msra.mxu0 0.0
    %1616 = vmatprep.subr.mxu0 0.0
    %1617 = vmatpush2.msra.mxu0 0.0
    %1618 = vmatprep.subr.mxu0 0.0
    %1619 = vmatpush2.msra.mxu0 0.0
    %1620 = vmatprep.subr.mxu0 0.0
    %1621 = vmatpush2.msra.mxu0 0.0
    %1622 = vmatprep.subr.mxu0 0.0
    %1623 = vmatpush2.msra.mxu0 0.0
    %1624 = vmatprep.subr.mxu0 0.0
    %1625 = vmatpush2.msra.mxu0 0.0
    %1626 = vmatprep.subr.mxu0 0.0
    %1627 = vmatpush2.msra.mxu0 0.0
    %1628 = vmatprep.subr.mxu0 0.0
    %1629 = vmatpush2.msra.mxu0 0.0
    %1630 = vmatprep.subr.mxu0 0.0
    %1631 = vmatpush2.msra.mxu0 0.0
    %1632 = vmatprep.subr.mxu0 0.0
    %1633 = vmatpush2.msra.mxu0 0.0
    %1634 = vmatprep.subr.mxu0 0.0
    %1635 = vmatpush2.msra.mxu0 0.0
    %1636 = vmatprep.subr.mxu0 0.0
    %1637 = vmatpush2.msra.mxu0 0.0
    %1638 = vmatprep.subr.mxu0 0.0
    %1639 = vmatpush2.msra.mxu0 0.0
    %1640 = vmatprep.subr.mxu0 0.0
    %1641 = vmatpush2.msra.mxu0 0.0
    %1642 = vmatprep.subr.mxu0 0.0
    %1643 = vmatpush2.msra.mxu0 0.0
    %1644 = vmatprep.mubr.f32.mxu0 0.0
    %1645 = vmatmul.mubr.f32.gmra.mxu0 %v1578
    %v1646 = vpop.f32.mrf.mxu0
    %v1647 = vadd.f32 %v1573, %v1646
    %v1648 = vpop.f32.mrf.mxu0
    %1649 = vdwg.mxu0
    %v1650 = vmax.f32 %v1647, 0.0
    %v1651 = vld [vmem:[%s6] sm:$0xff]
    %v1652 = vld [vmem:[%s6 + $0x8] sm:$0xff]
    %v1653 = vld [vmem:[%s6 + $0x10] sm:$0xff]
    %v1654 = vld [vmem:[%s6 + $0x18] sm:$0xff]
    %v1655 = vld [vmem:[%s7] sm:$0xff]
    %v1656 = vld [vmem:[%s7 + $0x8] sm:$0xff]
    %v1657 = vld [vmem:[%s7 + $0x10] sm:$0xff]
    %v1658 = vld [vmem:[%s7 + $0x18] sm:$0xff]
    %v1659 = vld [vmem:[%s8] sm:$0xff]
    %v1660 = vld [vmem:[%s8 + $0x8] sm:$0xff]
    %v1661 = vld [vmem:[%s8 + $0x10] sm:$0xff]
    %v1662 = vld [vmem:[%s8 + $0x18] sm:$0xff]
    %v1663 = vld [vmem:[#allocation7] sm:$0x1]
    %v1664 = vld [vmem:[%s10] sm:$0xff]
    %v1665 = vld [vmem:[%s10 + $0x8] sm:$0xff]
    %v1666 = vld [vmem:[%s10 + $0x10] sm:$0xff]
    %v1667 = vld [vmem:[%s10 + $0x18] sm:$0xff]
    %v1668 = vld [vmem:[#allocation8] sm:$0x1]
    %v1669 = vlaneseq
    %v1670 = vand.u32 %v1669, 127
    %vm1671 = vcmp.eq.s32.totalorder %v1670, 1
    %v1672 = vsel %vm1671, 1, 0
    %v1673 = vcvt.s32.f32 %v1672
    %v1675 = vsel %vm178, %v1673, 0
    %1677 = vmatprep.subr.mxu0 0.0
    %1678 = vmatpush1.msra.mxu0 0.0
    %1679 = vmatprep.subr.mxu0 0.0
    %1680 = vmatpush1.msra.mxu0 0.0
    %1681 = vmatprep.subr.mxu0 0.0
    %1682 = vmatpush1.msra.mxu0 0.0
    %1683 = vmatprep.subr.mxu0 0.0
    %1684 = vmatpush1.msra.mxu0 0.0
    %1685 = vmatprep.subr.mxu0 0.0
    %1686 = vmatpush1.msra.mxu0 0.0
    %1687 = vmatprep.subr.mxu0 0.0
    %1688 = vmatpush1.msra.mxu0 0.0
    %1689 = vmatprep.subr.mxu0 0.0
    %1690 = vmatpush1.msra.mxu0 0.0
    %1691 = vmatprep.subr.mxu0 0.0
    %1692 = vmatpush1.msra.mxu0 0.0
    %1693 = vmatprep.subr.mxu0 0.0
    %1694 = vmatpush1.msra.mxu0 0.0
    %1695 = vmatprep.subr.mxu0 0.0
    %1696 = vmatpush1.msra.mxu0 0.0
    %1697 = vmatprep.subr.mxu0 0.0
    %1698 = vmatpush1.msra.mxu0 0.0
    %1699 = vmatprep.subr.mxu0 0.0
    %1700 = vmatpush1.msra.mxu0 0.0
    %1701 = vmatprep.subr.mxu0 0.0
    %1702 = vmatpush1.msra.mxu0 %v1654
    %1703 = vmatprep.subr.mxu0 0.0
    %1704 = vmatpush1.msra.mxu0 %v1653
    %1705 = vmatprep.subr.mxu0 0.0
    %1706 = vmatpush1.msra.mxu0 %v1652
    %1707 = vmatprep.subr.mxu0 0.0
    %1708 = vmatpush1.msra.mxu0 %v1651
    %1709 = vmatprep.subr.mxu0 0.0
    %1710 = vmatpush2.msra.mxu0 0.0
    %1711 = vmatprep.subr.mxu0 0.0
    %1712 = vmatpush2.msra.mxu0 0.0
    %1713 = vmatprep.subr.mxu0 0.0
    %1714 = vmatpush2.msra.mxu0 0.0
    %1715 = vmatprep.subr.mxu0 0.0
    %1716 = vmatpush2.msra.mxu0 0.0
    %1717 = vmatprep.subr.mxu0 0.0
    %1718 = vmatpush2.msra.mxu0 0.0
    %1719 = vmatprep.subr.mxu0 0.0
    %1720 = vmatpush2.msra.mxu0 0.0
    %1721 = vmatprep.subr.mxu0 0.0
    %1722 = vmatpush2.msra.mxu0 0.0
    %1723 = vmatprep.subr.mxu0 0.0
    %1724 = vmatpush2.msra.mxu0 0.0
    %1725 = vmatprep.subr.mxu0 0.0
    %1726 = vmatpush2.msra.mxu0 0.0
    %1727 = vmatprep.subr.mxu0 0.0
    %1728 = vmatpush2.msra.mxu0 0.0
    %1729 = vmatprep.subr.mxu0 0.0
    %1730 = vmatpush2.msra.mxu0 0.0
    %1731 = vmatprep.subr.mxu0 0.0
    %1732 = vmatpush2.msra.mxu0 0.0
    %1733 = vmatprep.subr.mxu0 0.0
    %1734 = vmatpush2.msra.mxu0 0.0
    %1735 = vmatprep.subr.mxu0 0.0
    %1736 = vmatpush2.msra.mxu0 0.0
    %1737 = vmatprep.subr.mxu0 0.0
    %1738 = vmatpush2.msra.mxu0 0.0
    %1739 = vmatprep.subr.mxu0 0.0
    %1740 = vmatpush2.msra.mxu0 0.0
    %1741 = vmatprep.mubr.f32.mxu0 0.0
    %1742 = vmatmul.mubr.f32.gmra.mxu0 %v1675
    %v1743 = vpop.f32.mrf.mxu0
    %v1744 = vadd.f32 0.0, %v1743
    %v1745 = vpop.f32.mrf.mxu0
    %1746 = vdwg.mxu0
    %v1747 = vmax.f32 %v1744, 0.0
    %v1749 = vsel %vm178, %v1747, 0
    %1751 = vmatprep.subr.mxu0 0.0
    %1752 = vmatpush1.msra.mxu0 0.0
    %1753 = vmatprep.subr.mxu0 0.0
    %1754 = vmatpush1.msra.mxu0 0.0
    %1755 = vmatprep.subr.mxu0 0.0
    %1756 = vmatpush1.msra.mxu0 0.0
    %1757 = vmatprep.subr.mxu0 0.0
    %1758 = vmatpush1.msra.mxu0 0.0
    %1759 = vmatprep.subr.mxu0 0.0
    %1760 = vmatpush1.msra.mxu0 0.0
    %1761 = vmatprep.subr.mxu0 0.0
    %1762 = vmatpush1.msra.mxu0 0.0
    %1763 = vmatprep.subr.mxu0 0.0
    %1764 = vmatpush1.msra.mxu0 0.0
    %1765 = vmatprep.subr.mxu0 0.0
    %1766 = vmatpush1.msra.mxu0 0.0
    %1767 = vmatprep.subr.mxu0 0.0
    %1768 = vmatpush1.msra.mxu0 0.0
    %1769 = vmatprep.subr.mxu0 0.0
    %1770 = vmatpush1.msra.mxu0 0.0
    %1771 = vmatprep.subr.mxu0 0.0
    %1772 = vmatpush1.msra.mxu0 0.0
    %1773 = vmatprep.subr.mxu0 0.0
    %1774 = vmatpush1.msra.mxu0 0.0
    %1775 = vmatprep.subr.mxu0 0.0
    %1776 = vmatpush1.msra.mxu0 %v1658
    %1777 = vmatprep.subr.mxu0 0.0
    %1778 = vmatpush1.msra.mxu0 %v1657
    %1779 = vmatprep.subr.mxu0 0.0
    %1780 = vmatpush1.msra.mxu0 %v1656
    %1781 = vmatprep.subr.mxu0 0.0
    %1782 = vmatpush1.msra.mxu0 %v1655
    %1783 = vmatprep.subr.mxu0 0.0
    %1784 = vmatpush2.msra.mxu0 0.0
    %1785 = vmatprep.subr.mxu0 0.0
    %1786 = vmatpush2.msra.mxu0 0.0
    %1787 = vmatprep.subr.mxu0 0.0
    %1788 = vmatpush2.msra.mxu0 0.0
    %1789 = vmatprep.subr.mxu0 0.0
    %1790 = vmatpush2.msra.mxu0 0.0
    %1791 = vmatprep.subr.mxu0 0.0
    %1792 = vmatpush2.msra.mxu0 0.0
    %1793 = vmatprep.subr.mxu0 0.0
    %1794 = vmatpush2.msra.mxu0 0.0
    %1795 = vmatprep.subr.mxu0 0.0
    %1796 = vmatpush2.msra.mxu0 0.0
    %1797 = vmatprep.subr.mxu0 0.0
    %1798 = vmatpush2.msra.mxu0 0.0
    %1799 = vmatprep.subr.mxu0 0.0
    %1800 = vmatpush2.msra.mxu0 0.0
    %1801 = vmatprep.subr.mxu0 0.0
    %1802 = vmatpush2.msra.mxu0 0.0
    %1803 = vmatprep.subr.mxu0 0.0
    %1804 = vmatpush2.msra.mxu0 0.0
    %1805 = vmatprep.subr.mxu0 0.0
    %1806 = vmatpush2.msra.mxu0 0.0
    %1807 = vmatprep.subr.mxu0 0.0
    %1808 = vmatpush2.msra.mxu0 0.0
    %1809 = vmatprep.subr.mxu0 0.0
    %1810 = vmatpush2.msra.mxu0 0.0
    %1811 = vmatprep.subr.mxu0 0.0
    %1812 = vmatpush2.msra.mxu0 0.0
    %1813 = vmatprep.subr.mxu0 0.0
    %1814 = vmatpush2.msra.mxu0 0.0
    %1815 = vmatprep.mubr.f32.mxu0 0.0
    %1816 = vmatmul.mubr.f32.gmra.mxu0 %v1749
    %v1817 = vpop.f32.mrf.mxu0
    %v1818 = vadd.f32 0.0, %v1817
    %v1819 = vpop.f32.mrf.mxu0
    %1820 = vdwg.mxu0
    %v1822 = vsel %vm178, %v1650, 0
    %1824 = vmatprep.subr.mxu0 0.0
    %1825 = vmatpush1.msra.mxu0 0.0
    %1826 = vmatprep.subr.mxu0 0.0
    %1827 = vmatpush1.msra.mxu0 0.0
    %1828 = vmatprep.subr.mxu0 0.0
    %1829 = vmatpush1.msra.mxu0 0.0
    %1830 = vmatprep.subr.mxu0 0.0
    %1831 = vmatpush1.msra.mxu0 0.0
    %1832 = vmatprep.subr.mxu0 0.0
    %1833 = vmatpush1.msra.mxu0 0.0
    %1834 = vmatprep.subr.mxu0 0.0
    %1835 = vmatpush1.msra.mxu0 0.0
    %1836 = vmatprep.subr.mxu0 0.0
    %1837 = vmatpush1.msra.mxu0 0.0
    %1838 = vmatprep.subr.mxu0 0.0
    %1839 = vmatpush1.msra.mxu0 0.0
    %1840 = vmatprep.subr.mxu0 0.0
    %1841 = vmatpush1.msra.mxu0 0.0
    %1842 = vmatprep.subr.mxu0 0.0
    %1843 = vmatpush1.msra.mxu0 0.0
    %1844 = vmatprep.subr.mxu0 0.0
    %1845 = vmatpush1.msra.mxu0 0.0
    %1846 = vmatprep.subr.mxu0 0.0
    %1847 = vmatpush1.msra.mxu0 0.0
    %1848 = vmatprep.subr.mxu0 0.0
    %1849 = vmatpush1.msra.mxu0 %v1662
    %1850 = vmatprep.subr.mxu0 0.0
    %1851 = vmatpush1.msra.mxu0 %v1661
    %1852 = vmatprep.subr.mxu0 0.0
    %1853 = vmatpush1.msra.mxu0 %v1660
    %1854 = vmatprep.subr.mxu0 0.0
    %1855 = vmatpush1.msra.mxu0 %v1659
    %1856 = vmatprep.subr.mxu0 0.0
    %1857 = vmatpush2.msra.mxu0 0.0
    %1858 = vmatprep.subr.mxu0 0.0
    %1859 = vmatpush2.msra.mxu0 0.0
    %1860 = vmatprep.subr.mxu0 0.0
    %1861 = vmatpush2.msra.mxu0 0.0
    %1862 = vmatprep.subr.mxu0 0.0
    %1863 = vmatpush2.msra.mxu0 0.0
    %1864 = vmatprep.subr.mxu0 0.0
    %1865 = vmatpush2.msra.mxu0 0.0
    %1866 = vmatprep.subr.mxu0 0.0
    %1867 = vmatpush2.msra.mxu0 0.0
    %1868 = vmatprep.subr.mxu0 0.0
    %1869 = vmatpush2.msra.mxu0 0.0
    %1870 = vmatprep.subr.mxu0 0.0
    %1871 = vmatpush2.msra.mxu0 0.0
    %1872 = vmatprep.subr.mxu0 0.0
    %1873 = vmatpush2.msra.mxu0 0.0
    %1874 = vmatprep.subr.mxu0 0.0
    %1875 = vmatpush2.msra.mxu0 0.0
    %1876 = vmatprep.subr.mxu0 0.0
    %1877 = vmatpush2.msra.mxu0 0.0
    %1878 = vmatprep.subr.mxu0 0.0
    %1879 = vmatpush2.msra.mxu0 0.0
    %1880 = vmatprep.subr.mxu0 0.0
    %1881 = vmatpush2.msra.mxu0 0.0
    %1882 = vmatprep.subr.mxu0 0.0
    %1883 = vmatpush2.msra.mxu0 0.0
    %1884 = vmatprep.subr.mxu0 0.0
    %1885 = vmatpush2.msra.mxu0 0.0
    %1886 = vmatprep.subr.mxu0 0.0
    %1887 = vmatpush2.msra.mxu0 0.0
    %1888 = vmatprep.mubr.f32.mxu0 0.0
    %1889 = vmatmul.mubr.f32.gmra.mxu0 %v1822
    %v1890 = vpop.f32.mrf.mxu0
    %v1891 = vadd.f32 0.0, %v1890
    %v1892 = vpop.f32.mrf.mxu0
    %1893 = vdwg.mxu0
    %v1894 = vadd.f32 %v1818, %v1891
    %v1896 = vlaneseq
    %v1897 = vshrl.u32 %v1896, 7
    %v1898 = vsub.s32 0, %v1897
    %v1899 = vrot.slane %v1663, %v1898
    %v1901 = vadd.f32 %v1894, %v1899
    %v1902 = vxor.u32 %v1901, 2147483648
    %v1903 = vmul.f32 %v1902, 1.442695
    %v1904 = vpow.pop %v1903
    %v1905 = vadd.f32 %v1904, 1.0
    %v1906 = vrcp.pop %v1905
    %v1907 = vmul.f32 1.0, %v1906
    %v1908 = vadd.f32 %v1818, %v1899
    %1909 = vrot.lane.b32.xlu0 %v1899, 96
    %v1910 = vpop.permute.xlu0 %1909
    %v1912 = vadd.f32 %v1891, %v1910
    %1914 = vrot.lane.b32.xlu0 %v1912, 64
    %v1915 = vpop.permute.xlu0 %1914
    %v1917 = vmul.f32 %v1907, %v1915
    %1919 = vrot.lane.b32.xlu0 %v1917, 64
    %v1920 = vpop.permute.xlu0 %1919
    %v1922 = vadd.f32 %v1908, %v1920
    %v1923 = vtanh.pop %v1922
    %v1924 = vsub.f32 1.0, %v1907
    %1926 = vrot.lane.b32.xlu0 %v1923, 96
    %v1927 = vpop.permute.xlu0 %1926
    %v1929 = vmul.f32 %v1924, %v1927
    %1930 = vrot.lane.b32.xlu0 %v1650, 32
    %v1931 = vpop.permute.xlu0 %1930
    %v1933 = vmul.f32 %v1907, %v1931
    %v1934 = vadd.f32 %v1929, %v1933
    %v1936 = vlaneseq
    %v1937 = vshrl.u32 %v1936, 7
    %v1938 = vsub.s32 0, %v1937
    %v1939 = vrot.slane %v1668, %v1938
    %1942 = vrot.lane.b32.xlu0 %v1934, 96
    %v1943 = vpop.permute.xlu0 %1942
    %v1944 = vsel %vm178, %v1943, 0
    %1946 = vmatprep.subr.mxu0 0.0
    %1947 = vmatpush1.msra.mxu0 0.0
    %1948 = vmatprep.subr.mxu0 0.0
    %1949 = vmatpush1.msra.mxu0 0.0
    %1950 = vmatprep.subr.mxu0 0.0
    %1951 = vmatpush1.msra.mxu0 0.0
    %1952 = vmatprep.subr.mxu0 0.0
    %1953 = vmatpush1.msra.mxu0 0.0
    %1954 = vmatprep.subr.mxu0 0.0
    %1955 = vmatpush1.msra.mxu0 0.0
    %1956 = vmatprep.subr.mxu0 0.0
    %1957 = vmatpush1.msra.mxu0 0.0
    %1958 = vmatprep.subr.mxu0 0.0
    %1959 = vmatpush1.msra.mxu0 0.0
    %1960 = vmatprep.subr.mxu0 0.0
    %1961 = vmatpush1.msra.mxu0 0.0
    %1962 = vmatprep.subr.mxu0 0.0
    %1963 = vmatpush1.msra.mxu0 0.0
    %1964 = vmatprep.subr.mxu0 0.0
    %1965 = vmatpush1.msra.mxu0 0.0
    %1966 = vmatprep.subr.mxu0 0.0
    %1967 = vmatpush1.msra.mxu0 0.0
    %1968 = vmatprep.subr.mxu0 0.0
    %1969 = vmatpush1.msra.mxu0 0.0
    %1970 = vmatprep.subr.mxu0 0.0
    %1971 = vmatpush1.msra.mxu0 %v1667
    %1972 = vmatprep.subr.mxu0 0.0
    %1973 = vmatpush1.msra.mxu0 %v1666
    %1974 = vmatprep.subr.mxu0 0.0
    %1975 = vmatpush1.msra.mxu0 %v1665
    %1976 = vmatprep.subr.mxu0 0.0
    %1977 = vmatpush1.msra.mxu0 %v1664
    %1978 = vmatprep.subr.mxu0 0.0
    %1979 = vmatpush2.msra.mxu0 0.0
    %1980 = vmatprep.subr.mxu0 0.0
    %1981 = vmatpush2.msra.mxu0 0.0
    %1982 = vmatprep.subr.mxu0 0.0
    %1983 = vmatpush2.msra.mxu0 0.0
    %1984 = vmatprep.subr.mxu0 0.0
    %1985 = vmatpush2.msra.mxu0 0.0
    %1986 = vmatprep.subr.mxu0 0.0
    %1987 = vmatpush2.msra.mxu0 0.0
    %1988 = vmatprep.subr.mxu0 0.0
    %1989 = vmatpush2.msra.mxu0 0.0
    %1990 = vmatprep.subr.mxu0 0.0
    %1991 = vmatpush2.msra.mxu0 0.0
    %1992 = vmatprep.subr.mxu0 0.0
    %1993 = vmatpush2.msra.mxu0 0.0
    %1994 = vmatprep.subr.mxu0 0.0
    %1995 = vmatpush2.msra.mxu0 0.0
    %1996 = vmatprep.subr.mxu0 0.0
    %1997 = vmatpush2.msra.mxu0 0.0
    %1998 = vmatprep.subr.mxu0 0.0
    %1999 = vmatpush2.msra.mxu0 0.0
    %2000 = vmatprep.subr.mxu0 0.0
    %2001 = vmatpush2.msra.mxu0 0.0
    %2002 = vmatprep.subr.mxu0 0.0
    %2003 = vmatpush2.msra.mxu0 0.0
    %2004 = vmatprep.subr.mxu0 0.0
    %2005 = vmatpush2.msra.mxu0 0.0
    %2006 = vmatprep.subr.mxu0 0.0
    %2007 = vmatpush2.msra.mxu0 0.0
    %2008 = vmatprep.subr.mxu0 0.0
    %2009 = vmatpush2.msra.mxu0 0.0
    %2010 = vmatprep.mubr.f32.mxu0 0.0
    %2011 = vmatmul.mubr.f32.gmra.mxu0 %v1944
    %v2012 = vpop.f32.mrf.mxu0
    %v2013 = vadd.f32 %v1939, %v2012
    %v2014 = vpop.f32.mrf.mxu0
    %2015 = vdwg.mxu0
    %vm2016 = vcmask 254976
    %v2017 = vsel %vm2016, %v2013, -inf
    %2018 = vmax.xlane.f32.xlu0 %v2017
    %v2019 = vpop.xlane.xlu0 %2018
    %vm2020 = vweird.f32 %v2019
    %vm2021 = vmxor %vm2020, 1
    %v2022 = vsel %vm2021, %v2019, 0.0
    %v2023 = vsub.f32 %v2013, %v2022
    %v2024 = vmul.f32 %v2023, 1.442695
    %v2025 = vpow.pop %v2024
    %v2026 = vsel %vm2016, %v2025, 0.0
    %2027 = vadd.xlane.f32.xlu0 %v2026
    %v2028 = vpop.xlane.xlu0 %2027
    %v2029 = vand.u32 2147483647, %v2028
    %v2030 = vlog2.pop %v2029
    %v2031 = vmul.f32 %v2030, 0.6931472
    %v2032 = vadd.f32 %v2031, %v2022
    %v2033 = vsub.f32 %v2013, %v2032
    %v2034 = vsel %vm2016, %v2033, -inf
    %2035 = vmax.xlane.f32.xlu0 %v2034
    %v2036 = vpop.xlane.xlu0 %2035
    %vm2037 = vcmp.eq.f32.partialorder %v2033, %v2036
    %v2038 = vsel %vm2037, %v1670, 32
    %v2039 = vsel %vm2016, %v2038, 2147483647
    %v2040 = vand.u32 %v2039, 65535
    %v2041 = vshra.s32 %v2039, 16
    %v2042 = vcvt.s32.f32 %v2040
    %v2043 = vcvt.s32.f32 %v2041
    %2044 = vmin.xlane.f32.xlu0 %v2043
    %v2045 = vpop.xlane.xlu0 %2044
    %vm2046 = vcmp.eq.f32.partialorder %v2043, %v2045
    %v2047 = vsel %vm2046, %v2042, inf
    %2048 = vmin.xlane.f32.xlu0 %v2047
    %v2049 = vpop.xlane.xlu0 %2048
    %v2050 = vcvt.f32.s32 %v2049
    %v2051 = vcvt.f32.s32 %v2045
    %v2052 = vshll.u32 %v2051, 16
    %v2053 = vadd.s32 %v2052, %v2050
    %vm2054 = vcmp.eq.s32.totalorder %v1670, %v2053
    %v2055 = vsel %vm2054, 1, 0
    %v2056 = vcvt.s32.f32 %v2055
    %v2058 = vsel %vm178, %v2056, 0
    %2060 = vmatprep.subr.mxu0 0.0
    %2061 = vmatpush1.msra.mxu0 0.0
    %2062 = vmatprep.subr.mxu0 0.0
    %2063 = vmatpush1.msra.mxu0 0.0
    %2064 = vmatprep.subr.mxu0 0.0
    %2065 = vmatpush1.msra.mxu0 0.0
    %2066 = vmatprep.subr.mxu0 0.0
    %2067 = vmatpush1.msra.mxu0 0.0
    %2068 = vmatprep.subr.mxu0 0.0
    %2069 = vmatpush1.msra.mxu0 0.0
    %2070 = vmatprep.subr.mxu0 0.0
    %2071 = vmatpush1.msra.mxu0 0.0
    %2072 = vmatprep.subr.mxu0 0.0
    %2073 = vmatpush1.msra.mxu0 0.0
    %2074 = vmatprep.subr.mxu0 0.0
    %2075 = vmatpush1.msra.mxu0 0.0
    %2076 = vmatprep.subr.mxu0 0.0
    %2077 = vmatpush1.msra.mxu0 0.0
    %2078 = vmatprep.subr.mxu0 0.0
    %2079 = vmatpush1.msra.mxu0 0.0
    %2080 = vmatprep.subr.mxu0 0.0
    %2081 = vmatpush1.msra.mxu0 0.0
    %2082 = vmatprep.subr.mxu0 0.0
    %2083 = vmatpush1.msra.mxu0 0.0
    %2084 = vmatprep.subr.mxu0 0.0
    %2085 = vmatpush1.msra.mxu0 %v1654
    %2086 = vmatprep.subr.mxu0 0.0
    %2087 = vmatpush1.msra.mxu0 %v1653
    %2088 = vmatprep.subr.mxu0 0.0
    %2089 = vmatpush1.msra.mxu0 %v1652
    %2090 = vmatprep.subr.mxu0 0.0
    %2091 = vmatpush1.msra.mxu0 %v1651
    %2092 = vmatprep.subr.mxu0 0.0
    %2093 = vmatpush2.msra.mxu0 0.0
    %2094 = vmatprep.subr.mxu0 0.0
    %2095 = vmatpush2.msra.mxu0 0.0
    %2096 = vmatprep.subr.mxu0 0.0
    %2097 = vmatpush2.msra.mxu0 0.0
    %2098 = vmatprep.subr.mxu0 0.0
    %2099 = vmatpush2.msra.mxu0 0.0
    %2100 = vmatprep.subr.mxu0 0.0
    %2101 = vmatpush2.msra.mxu0 0.0
    %2102 = vmatprep.subr.mxu0 0.0
    %2103 = vmatpush2.msra.mxu0 0.0
    %2104 = vmatprep.subr.mxu0 0.0
    %2105 = vmatpush2.msra.mxu0 0.0
    %2106 = vmatprep.subr.mxu0 0.0
    %2107 = vmatpush2.msra.mxu0 0.0
    %2108 = vmatprep.subr.mxu0 0.0
    %2109 = vmatpush2.msra.mxu0 0.0
    %2110 = vmatprep.subr.mxu0 0.0
    %2111 = vmatpush2.msra.mxu0 0.0
    %2112 = vmatprep.subr.mxu0 0.0
    %2113 = vmatpush2.msra.mxu0 0.0
    %2114 = vmatprep.subr.mxu0 0.0
    %2115 = vmatpush2.msra.mxu0 0.0
    %2116 = vmatprep.subr.mxu0 0.0
    %2117 = vmatpush2.msra.mxu0 0.0
    %2118 = vmatprep.subr.mxu0 0.0
    %2119 = vmatpush2.msra.mxu0 0.0
    %2120 = vmatprep.subr.mxu0 0.0
    %2121 = vmatpush2.msra.mxu0 0.0
    %2122 = vmatprep.subr.mxu0 0.0
    %2123 = vmatpush2.msra.mxu0 0.0
    %2124 = vmatprep.mubr.f32.mxu0 0.0
    %2125 = vmatmul.mubr.f32.gmra.mxu0 %v2058
    %v2126 = vpop.f32.mrf.mxu0
    %v2127 = vadd.f32 0.0, %v2126
    %v2128 = vpop.f32.mrf.mxu0
    %2129 = vdwg.mxu0
    %v2130 = vmax.f32 %v2127, 0.0
    %v2132 = vsel %vm178, %v2130, 0
    %2134 = vmatprep.subr.mxu0 0.0
    %2135 = vmatpush1.msra.mxu0 0.0
    %2136 = vmatprep.subr.mxu0 0.0
    %2137 = vmatpush1.msra.mxu0 0.0
    %2138 = vmatprep.subr.mxu0 0.0
    %2139 = vmatpush1.msra.mxu0 0.0
    %2140 = vmatprep.subr.mxu0 0.0
    %2141 = vmatpush1.msra.mxu0 0.0
    %2142 = vmatprep.subr.mxu0 0.0
    %2143 = vmatpush1.msra.mxu0 0.0
    %2144 = vmatprep.subr.mxu0 0.0
    %2145 = vmatpush1.msra.mxu0 0.0
    %2146 = vmatprep.subr.mxu0 0.0
    %2147 = vmatpush1.msra.mxu0 0.0
    %2148 = vmatprep.subr.mxu0 0.0
    %2149 = vmatpush1.msra.mxu0 0.0
    %2150 = vmatprep.subr.mxu0 0.0
    %2151 = vmatpush1.msra.mxu0 0.0
    %2152 = vmatprep.subr.mxu0 0.0
    %2153 = vmatpush1.msra.mxu0 0.0
    %2154 = vmatprep.subr.mxu0 0.0
    %2155 = vmatpush1.msra.mxu0 0.0
    %2156 = vmatprep.subr.mxu0 0.0
    %2157 = vmatpush1.msra.mxu0 0.0
    %2158 = vmatprep.subr.mxu0 0.0
    %2159 = vmatpush1.msra.mxu0 %v1658
    %2160 = vmatprep.subr.mxu0 0.0
    %2161 = vmatpush1.msra.mxu0 %v1657
    %2162 = vmatprep.subr.mxu0 0.0
    %2163 = vmatpush1.msra.mxu0 %v1656
    %2164 = vmatprep.subr.mxu0 0.0
    %2165 = vmatpush1.msra.mxu0 %v1655
    %2166 = vmatprep.subr.mxu0 0.0
    %2167 = vmatpush2.msra.mxu0 0.0
    %2168 = vmatprep.subr.mxu0 0.0
    %2169 = vmatpush2.msra.mxu0 0.0
    %2170 = vmatprep.subr.mxu0 0.0
    %2171 = vmatpush2.msra.mxu0 0.0
    %2172 = vmatprep.subr.mxu0 0.0
    %2173 = vmatpush2.msra.mxu0 0.0
    %2174 = vmatprep.subr.mxu0 0.0
    %2175 = vmatpush2.msra.mxu0 0.0
    %2176 = vmatprep.subr.mxu0 0.0
    %2177 = vmatpush2.msra.mxu0 0.0
    %2178 = vmatprep.subr.mxu0 0.0
    %2179 = vmatpush2.msra.mxu0 0.0
    %2180 = vmatprep.subr.mxu0 0.0
    %2181 = vmatpush2.msra.mxu0 0.0
    %2182 = vmatprep.subr.mxu0 0.0
    %2183 = vmatpush2.msra.mxu0 0.0
    %2184 = vmatprep.subr.mxu0 0.0
    %2185 = vmatpush2.msra.mxu0 0.0
    %2186 = vmatprep.subr.mxu0 0.0
    %2187 = vmatpush2.msra.mxu0 0.0
    %2188 = vmatprep.subr.mxu0 0.0
    %2189 = vmatpush2.msra.mxu0 0.0
    %2190 = vmatprep.subr.mxu0 0.0
    %2191 = vmatpush2.msra.mxu0 0.0
    %2192 = vmatprep.subr.mxu0 0.0
    %2193 = vmatpush2.msra.mxu0 0.0
    %2194 = vmatprep.subr.mxu0 0.0
    %2195 = vmatpush2.msra.mxu0 0.0
    %2196 = vmatprep.subr.mxu0 0.0
    %2197 = vmatpush2.msra.mxu0 0.0
    %2198 = vmatprep.mubr.f32.mxu0 0.0
    %2199 = vmatmul.mubr.f32.gmra.mxu0 %v2132
    %v2200 = vpop.f32.mrf.mxu0
    %v2201 = vadd.f32 0.0, %v2200
    %v2202 = vpop.f32.mrf.mxu0
    %2203 = vdwg.mxu0
    %2204 = vmatprep.subr.mxu0 0.0
    %2205 = vmatpush1.msra.mxu0 0.0
    %2206 = vmatprep.subr.mxu0 0.0
    %2207 = vmatpush1.msra.mxu0 0.0
    %2208 = vmatprep.subr.mxu0 0.0
    %2209 = vmatpush1.msra.mxu0 0.0
    %2210 = vmatprep.subr.mxu0 0.0
    %2211 = vmatpush1.msra.mxu0 0.0
    %2212 = vmatprep.subr.mxu0 0.0
    %2213 = vmatpush1.msra.mxu0 0.0
    %2214 = vmatprep.subr.mxu0 0.0
    %2215 = vmatpush1.msra.mxu0 0.0
    %2216 = vmatprep.subr.mxu0 0.0
    %2217 = vmatpush1.msra.mxu0 0.0
    %2218 = vmatprep.subr.mxu0 0.0
    %2219 = vmatpush1.msra.mxu0 0.0
    %2220 = vmatprep.subr.mxu0 0.0
    %2221 = vmatpush1.msra.mxu0 0.0
    %2222 = vmatprep.subr.mxu0 0.0
    %2223 = vmatpush1.msra.mxu0 0.0
    %2224 = vmatprep.subr.mxu0 0.0
    %2225 = vmatpush1.msra.mxu0 0.0
    %2226 = vmatprep.subr.mxu0 0.0
    %2227 = vmatpush1.msra.mxu0 0.0
    %2228 = vmatprep.subr.mxu0 0.0
    %2229 = vmatpush1.msra.mxu0 %v1662
    %2230 = vmatprep.subr.mxu0 0.0
    %2231 = vmatpush1.msra.mxu0 %v1661
    %2232 = vmatprep.subr.mxu0 0.0
    %2233 = vmatpush1.msra.mxu0 %v1660
    %2234 = vmatprep.subr.mxu0 0.0
    %2235 = vmatpush1.msra.mxu0 %v1659
    %2236 = vmatprep.subr.mxu0 0.0
    %2237 = vmatpush2.msra.mxu0 0.0
    %2238 = vmatprep.subr.mxu0 0.0
    %2239 = vmatpush2.msra.mxu0 0.0
    %2240 = vmatprep.subr.mxu0 0.0
    %2241 = vmatpush2.msra.mxu0 0.0
    %2242 = vmatprep.subr.mxu0 0.0
    %2243 = vmatpush2.msra.mxu0 0.0
    %2244 = vmatprep.subr.mxu0 0.0
    %2245 = vmatpush2.msra.mxu0 0.0
    %2246 = vmatprep.subr.mxu0 0.0
    %2247 = vmatpush2.msra.mxu0 0.0
    %2248 = vmatprep.subr.mxu0 0.0
    %2249 = vmatpush2.msra.mxu0 0.0
    %2250 = vmatprep.subr.mxu0 0.0
    %2251 = vmatpush2.msra.mxu0 0.0
    %2252 = vmatprep.subr.mxu0 0.0
    %2253 = vmatpush2.msra.mxu0 0.0
    %2254 = vmatprep.subr.mxu0 0.0
    %2255 = vmatpush2.msra.mxu0 0.0
    %2256 = vmatprep.subr.mxu0 0.0
    %2257 = vmatpush2.msra.mxu0 0.0
    %2258 = vmatprep.subr.mxu0 0.0
    %2259 = vmatpush2.msra.mxu0 0.0
    %2260 = vmatprep.subr.mxu0 0.0
    %2261 = vmatpush2.msra.mxu0 0.0
    %2262 = vmatprep.subr.mxu0 0.0
    %2263 = vmatpush2.msra.mxu0 0.0
    %2264 = vmatprep.subr.mxu0 0.0
    %2265 = vmatpush2.msra.mxu0 0.0
    %2266 = vmatprep.subr.mxu0 0.0
    %2267 = vmatpush2.msra.mxu0 0.0
    %2268 = vmatprep.mubr.f32.mxu0 0.0
    %2269 = vmatmul.mubr.f32.gmra.mxu0 %v1944
    %v2270 = vpop.f32.mrf.mxu0
    %v2271 = vadd.f32 0.0, %v2270
    %v2272 = vpop.f32.mrf.mxu0
    %2273 = vdwg.mxu0
    %v2274 = vadd.f32 %v2201, %v2271
    %v2275 = vadd.f32 %v2274, %v1899
    %v2276 = vxor.u32 %v2275, 2147483648
    %v2277 = vmul.f32 %v2276, 1.442695
    %v2278 = vpow.pop %v2277
    %v2279 = vadd.f32 %v2278, 1.0
    %v2280 = vrcp.pop %v2279
    %v2281 = vmul.f32 1.0, %v2280
    %v2282 = vadd.f32 %v2201, %v1899
    %v2283 = vadd.f32 %v2271, %v1910
    %2285 = vrot.lane.b32.xlu0 %v2283, 64
    %v2286 = vpop.permute.xlu0 %2285
    %v2288 = vmul.f32 %v2281, %v2286
    %2290 = vrot.lane.b32.xlu0 %v2288, 64
    %v2291 = vpop.permute.xlu0 %2290
    %v2293 = vadd.f32 %v2282, %v2291
    %v2294 = vtanh.pop %v2293
    %v2295 = vsub.f32 1.0, %v2281
    %2297 = vrot.lane.b32.xlu0 %v2294, 96
    %v2298 = vpop.permute.xlu0 %2297
    %v2300 = vmul.f32 %v2295, %v2298
    %v2301 = vmul.f32 %v2281, %v1934
    %v2302 = vadd.f32 %v2300, %v2301
    %2304 = vrot.lane.b32.xlu0 %v2302, 96
    %v2305 = vpop.permute.xlu0 %2304
    %v2306 = vsel %vm178, %v2305, 0
    %2308 = vmatprep.subr.mxu0 0.0
    %2309 = vmatpush1.msra.mxu0 0.0
    %2310 = vmatprep.subr.mxu0 0.0
    %2311 = vmatpush1.msra.mxu0 0.0
    %2312 = vmatprep.subr.mxu0 0.0
    %2313 = vmatpush1.msra.mxu0 0.0
    %2314 = vmatprep.subr.mxu0 0.0
    %2315 = vmatpush1.msra.mxu0 0.0
    %2316 = vmatprep.subr.mxu0 0.0
    %2317 = vmatpush1.msra.mxu0 0.0
    %2318 = vmatprep.subr.mxu0 0.0
    %2319 = vmatpush1.msra.mxu0 0.0
    %2320 = vmatprep.subr.mxu0 0.0
    %2321 = vmatpush1.msra.mxu0 0.0
    %2322 = vmatprep.subr.mxu0 0.0
    %2323 = vmatpush1.msra.mxu0 0.0
    %2324 = vmatprep.subr.mxu0 0.0
    %2325 = vmatpush1.msra.mxu0 0.0
    %2326 = vmatprep.subr.mxu0 0.0
    %2327 = vmatpush1.msra.mxu0 0.0
    %2328 = vmatprep.subr.mxu0 0.0
    %2329 = vmatpush1.msra.mxu0 0.0
    %2330 = vmatprep.subr.mxu0 0.0
    %2331 = vmatpush1.msra.mxu0 0.0
    %2332 = vmatprep.subr.mxu0 0.0
    %2333 = vmatpush1.msra.mxu0 %v1667
    %2334 = vmatprep.subr.mxu0 0.0
    %2335 = vmatpush1.msra.mxu0 %v1666
    %2336 = vmatprep.subr.mxu0 0.0
    %2337 = vmatpush1.msra.mxu0 %v1665
    %2338 = vmatprep.subr.mxu0 0.0
    %2339 = vmatpush1.msra.mxu0 %v1664
    %2340 = vmatprep.subr.mxu0 0.0
    %2341 = vmatpush2.msra.mxu0 0.0
    %2342 = vmatprep.subr.mxu0 0.0
    %2343 = vmatpush2.msra.mxu0 0.0
    %2344 = vmatprep.subr.mxu0 0.0
    %2345 = vmatpush2.msra.mxu0 0.0
    %2346 = vmatprep.subr.mxu0 0.0
    %2347 = vmatpush2.msra.mxu0 0.0
    %2348 = vmatprep.subr.mxu0 0.0
    %2349 = vmatpush2.msra.mxu0 0.0
    %2350 = vmatprep.subr.mxu0 0.0
    %2351 = vmatpush2.msra.mxu0 0.0
    %2352 = vmatprep.subr.mxu0 0.0
    %2353 = vmatpush2.msra.mxu0 0.0
    %2354 = vmatprep.subr.mxu0 0.0
    %2355 = vmatpush2.msra.mxu0 0.0
    %2356 = vmatprep.subr.mxu0 0.0
    %2357 = vmatpush2.msra.mxu0 0.0
    %2358 = vmatprep.subr.mxu0 0.0
    %2359 = vmatpush2.msra.mxu0 0.0
    %2360 = vmatprep.subr.mxu0 0.0
    %2361 = vmatpush2.msra.mxu0 0.0
    %2362 = vmatprep.subr.mxu0 0.0
    %2363 = vmatpush2.msra.mxu0 0.0
    %2364 = vmatprep.subr.mxu0 0.0
    %2365 = vmatpush2.msra.mxu0 0.0
    %2366 = vmatprep.subr.mxu0 0.0
    %2367 = vmatpush2.msra.mxu0 0.0
    %2368 = vmatprep.subr.mxu0 0.0
    %2369 = vmatpush2.msra.mxu0 0.0
    %2370 = vmatprep.subr.mxu0 0.0
    %2371 = vmatpush2.msra.mxu0 0.0
    %2372 = vmatprep.mubr.f32.mxu0 0.0
    %2373 = vmatmul.mubr.f32.gmra.mxu0 %v2306
    %v2374 = vpop.f32.mrf.mxu0
    %v2375 = vadd.f32 %v1939, %v2374
    %v2376 = vpop.f32.mrf.mxu0
    %2377 = vdwg.mxu0
    %v2378 = vsel %vm2016, %v2375, -inf
    %2379 = vmax.xlane.f32.xlu0 %v2378
    %v2380 = vpop.xlane.xlu0 %2379
    %vm2381 = vweird.f32 %v2380
    %vm2382 = vmxor %vm2381, 1
    %v2383 = vsel %vm2382, %v2380, 0.0
    %v2384 = vsub.f32 %v2375, %v2383
    %v2385 = vmul.f32 %v2384, 1.442695
    %v2386 = vpow.pop %v2385
    %v2387 = vsel %vm2016, %v2386, 0.0
    %2388 = vadd.xlane.f32.xlu0 %v2387
    %v2389 = vpop.xlane.xlu0 %2388
    %v2390 = vand.u32 2147483647, %v2389
    %v2391 = vlog2.pop %v2390
    %v2392 = vmul.f32 %v2391, 0.6931472
    %v2393 = vadd.f32 %v2392, %v2383
    %v2394 = vsub.f32 %v2375, %v2393
    %v2395 = vsel %vm2016, %v2394, -inf
    %2396 = vmax.xlane.f32.xlu0 %v2395
    %v2397 = vpop.xlane.xlu0 %2396
    %vm2398 = vcmp.eq.f32.partialorder %v2394, %v2397
    %v2399 = vsel %vm2398, %v1670, 32
    %v2400 = vsel %vm2016, %v2399, 2147483647
    %v2401 = vand.u32 %v2400, 65535
    %v2402 = vshra.s32 %v2400, 16
    %v2403 = vcvt.s32.f32 %v2401
    %v2404 = vcvt.s32.f32 %v2402
    %2405 = vmin.xlane.f32.xlu0 %v2404
    %v2406 = vpop.xlane.xlu0 %2405
    %vm2407 = vcmp.eq.f32.partialorder %v2404, %v2406
    %v2408 = vsel %vm2407, %v2403, inf
    %2409 = vmin.xlane.f32.xlu0 %v2408
    %v2410 = vpop.xlane.xlu0 %2409
    %v2411 = vcvt.f32.s32 %v2410
    %v2412 = vcvt.f32.s32 %v2406
    %v2413 = vshll.u32 %v2412, 16
    %v2414 = vadd.s32 %v2413, %v2411
    %vm2415 = vcmp.eq.s32.totalorder %v1670, %v2414
    %v2416 = vsel %vm2415, 1, 0
    %v2417 = vcvt.s32.f32 %v2416
    %v2419 = vsel %vm178, %v2417, 0
    %2421 = vmatprep.subr.mxu0 0.0
    %2422 = vmatpush1.msra.mxu0 0.0
    %2423 = vmatprep.subr.mxu0 0.0
    %2424 = vmatpush1.msra.mxu0 0.0
    %2425 = vmatprep.subr.mxu0 0.0
    %2426 = vmatpush1.msra.mxu0 0.0
    %2427 = vmatprep.subr.mxu0 0.0
    %2428 = vmatpush1.msra.mxu0 0.0
    %2429 = vmatprep.subr.mxu0 0.0
    %2430 = vmatpush1.msra.mxu0 0.0
    %2431 = vmatprep.subr.mxu0 0.0
    %2432 = vmatpush1.msra.mxu0 0.0
    %2433 = vmatprep.subr.mxu0 0.0
    %2434 = vmatpush1.msra.mxu0 0.0
    %2435 = vmatprep.subr.mxu0 0.0
    %2436 = vmatpush1.msra.mxu0 0.0
    %2437 = vmatprep.subr.mxu0 0.0
    %2438 = vmatpush1.msra.mxu0 0.0
    %2439 = vmatprep.subr.mxu0 0.0
    %2440 = vmatpush1.msra.mxu0 0.0
    %2441 = vmatprep.subr.mxu0 0.0
    %2442 = vmatpush1.msra.mxu0 0.0
    %2443 = vmatprep.subr.mxu0 0.0
    %2444 = vmatpush1.msra.mxu0 0.0
    %2445 = vmatprep.subr.mxu0 0.0
    %2446 = vmatpush1.msra.mxu0 %v1654
    %2447 = vmatprep.subr.mxu0 0.0
    %2448 = vmatpush1.msra.mxu0 %v1653
    %2449 = vmatprep.subr.mxu0 0.0
    %2450 = vmatpush1.msra.mxu0 %v1652
    %2451 = vmatprep.subr.mxu0 0.0
    %2452 = vmatpush1.msra.mxu0 %v1651
    %2453 = vmatprep.subr.mxu0 0.0
    %2454 = vmatpush2.msra.mxu0 0.0
    %2455 = vmatprep.subr.mxu0 0.0
    %2456 = vmatpush2.msra.mxu0 0.0
    %2457 = vmatprep.subr.mxu0 0.0
    %2458 = vmatpush2.msra.mxu0 0.0
    %2459 = vmatprep.subr.mxu0 0.0
    %2460 = vmatpush2.msra.mxu0 0.0
    %2461 = vmatprep.subr.mxu0 0.0
    %2462 = vmatpush2.msra.mxu0 0.0
    %2463 = vmatprep.subr.mxu0 0.0
    %2464 = vmatpush2.msra.mxu0 0.0
    %2465 = vmatprep.subr.mxu0 0.0
    %2466 = vmatpush2.msra.mxu0 0.0
    %2467 = vmatprep.subr.mxu0 0.0
    %2468 = vmatpush2.msra.mxu0 0.0
    %2469 = vmatprep.subr.mxu0 0.0
    %2470 = vmatpush2.msra.mxu0 0.0
    %2471 = vmatprep.subr.mxu0 0.0
    %2472 = vmatpush2.msra.mxu0 0.0
    %2473 = vmatprep.subr.mxu0 0.0
    %2474 = vmatpush2.msra.mxu0 0.0
    %2475 = vmatprep.subr.mxu0 0.0
    %2476 = vmatpush2.msra.mxu0 0.0
    %2477 = vmatprep.subr.mxu0 0.0
    %2478 = vmatpush2.msra.mxu0 0.0
    %2479 = vmatprep.subr.mxu0 0.0
    %2480 = vmatpush2.msra.mxu0 0.0
    %2481 = vmatprep.subr.mxu0 0.0
    %2482 = vmatpush2.msra.mxu0 0.0
    %2483 = vmatprep.subr.mxu0 0.0
    %2484 = vmatpush2.msra.mxu0 0.0
    %2485 = vmatprep.mubr.f32.mxu0 0.0
    %2486 = vmatmul.mubr.f32.gmra.mxu0 %v2419
    %v2487 = vpop.f32.mrf.mxu0
    %v2488 = vadd.f32 0.0, %v2487
    %v2489 = vpop.f32.mrf.mxu0
    %2490 = vdwg.mxu0
    %v2491 = vmax.f32 %v2488, 0.0
    %v2493 = vsel %vm178, %v2491, 0
    %2495 = vmatprep.subr.mxu0 0.0
    %2496 = vmatpush1.msra.mxu0 0.0
    %2497 = vmatprep.subr.mxu0 0.0
    %2498 = vmatpush1.msra.mxu0 0.0
    %2499 = vmatprep.subr.mxu0 0.0
    %2500 = vmatpush1.msra.mxu0 0.0
    %2501 = vmatprep.subr.mxu0 0.0
    %2502 = vmatpush1.msra.mxu0 0.0
    %2503 = vmatprep.subr.mxu0 0.0
    %2504 = vmatpush1.msra.mxu0 0.0
    %2505 = vmatprep.subr.mxu0 0.0
    %2506 = vmatpush1.msra.mxu0 0.0
    %2507 = vmatprep.subr.mxu0 0.0
    %2508 = vmatpush1.msra.mxu0 0.0
    %2509 = vmatprep.subr.mxu0 0.0
    %2510 = vmatpush1.msra.mxu0 0.0
    %2511 = vmatprep.subr.mxu0 0.0
    %2512 = vmatpush1.msra.mxu0 0.0
    %2513 = vmatprep.subr.mxu0 0.0
    %2514 = vmatpush1.msra.mxu0 0.0
    %2515 = vmatprep.subr.mxu0 0.0
    %2516 = vmatpush1.msra.mxu0 0.0
    %2517 = vmatprep.subr.mxu0 0.0
    %2518 = vmatpush1.msra.mxu0 0.0
    %2519 = vmatprep.subr.mxu0 0.0
    %2520 = vmatpush1.msra.mxu0 %v1658
    %2521 = vmatprep.subr.mxu0 0.0
    %2522 = vmatpush1.msra.mxu0 %v1657
    %2523 = vmatprep.subr.mxu0 0.0
    %2524 = vmatpush1.msra.mxu0 %v1656
    %2525 = vmatprep.subr.mxu0 0.0
    %2526 = vmatpush1.msra.mxu0 %v1655
    %2527 = vmatprep.subr.mxu0 0.0
    %2528 = vmatpush2.msra.mxu0 0.0
    %2529 = vmatprep.subr.mxu0 0.0
    %2530 = vmatpush2.msra.mxu0 0.0
    %2531 = vmatprep.subr.mxu0 0.0
    %2532 = vmatpush2.msra.mxu0 0.0
    %2533 = vmatprep.subr.mxu0 0.0
    %2534 = vmatpush2.msra.mxu0 0.0
    %2535 = vmatprep.subr.mxu0 0.0
    %2536 = vmatpush2.msra.mxu0 0.0
    %2537 = vmatprep.subr.mxu0 0.0
    %2538 = vmatpush2.msra.mxu0 0.0
    %2539 = vmatprep.subr.mxu0 0.0
    %2540 = vmatpush2.msra.mxu0 0.0
    %2541 = vmatprep.subr.mxu0 0.0
    %2542 = vmatpush2.msra.mxu0 0.0
    %2543 = vmatprep.subr.mxu0 0.0
    %2544 = vmatpush2.msra.mxu0 0.0
    %2545 = vmatprep.subr.mxu0 0.0
    %2546 = vmatpush2.msra.mxu0 0.0
    %2547 = vmatprep.subr.mxu0 0.0
    %2548 = vmatpush2.msra.mxu0 0.0
    %2549 = vmatprep.subr.mxu0 0.0
    %2550 = vmatpush2.msra.mxu0 0.0
    %2551 = vmatprep.subr.mxu0 0.0
    %2552 = vmatpush2.msra.mxu0 0.0
    %2553 = vmatprep.subr.mxu0 0.0
    %2554 = vmatpush2.msra.mxu0 0.0
    %2555 = vmatprep.subr.mxu0 0.0
    %2556 = vmatpush2.msra.mxu0 0.0
    %2557 = vmatprep.subr.mxu0 0.0
    %2558 = vmatpush2.msra.mxu0 0.0
    %2559 = vmatprep.mubr.f32.mxu0 0.0
    %2560 = vmatmul.mubr.f32.gmra.mxu0 %v2493
    %v2561 = vpop.f32.mrf.mxu0
    %v2562 = vadd.f32 0.0, %v2561
    %v2563 = vpop.f32.mrf.mxu0
    %2564 = vdwg.mxu0
    %2565 = vmatprep.subr.mxu0 0.0
    %2566 = vmatpush1.msra.mxu0 0.0
    %2567 = vmatprep.subr.mxu0 0.0
    %2568 = vmatpush1.msra.mxu0 0.0
    %2569 = vmatprep.subr.mxu0 0.0
    %2570 = vmatpush1.msra.mxu0 0.0
    %2571 = vmatprep.subr.mxu0 0.0
    %2572 = vmatpush1.msra.mxu0 0.0
    %2573 = vmatprep.subr.mxu0 0.0
    %2574 = vmatpush1.msra.mxu0 0.0
    %2575 = vmatprep.subr.mxu0 0.0
    %2576 = vmatpush1.msra.mxu0 0.0
    %2577 = vmatprep.subr.mxu0 0.0
    %2578 = vmatpush1.msra.mxu0 0.0
    %2579 = vmatprep.subr.mxu0 0.0
    %2580 = vmatpush1.msra.mxu0 0.0
    %2581 = vmatprep.subr.mxu0 0.0
    %2582 = vmatpush1.msra.mxu0 0.0
    %2583 = vmatprep.subr.mxu0 0.0
    %2584 = vmatpush1.msra.mxu0 0.0
    %2585 = vmatprep.subr.mxu0 0.0
    %2586 = vmatpush1.msra.mxu0 0.0
    %2587 = vmatprep.subr.mxu0 0.0
    %2588 = vmatpush1.msra.mxu0 0.0
    %2589 = vmatprep.subr.mxu0 0.0
    %2590 = vmatpush1.msra.mxu0 %v1662
    %2591 = vmatprep.subr.mxu0 0.0
    %2592 = vmatpush1.msra.mxu0 %v1661
    %2593 = vmatprep.subr.mxu0 0.0
    %2594 = vmatpush1.msra.mxu0 %v1660
    %2595 = vmatprep.subr.mxu0 0.0
    %2596 = vmatpush1.msra.mxu0 %v1659
    %2597 = vmatprep.subr.mxu0 0.0
    %2598 = vmatpush2.msra.mxu0 0.0
    %2599 = vmatprep.subr.mxu0 0.0
    %2600 = vmatpush2.msra.mxu0 0.0
    %2601 = vmatprep.subr.mxu0 0.0
    %2602 = vmatpush2.msra.mxu0 0.0
    %2603 = vmatprep.subr.mxu0 0.0
    %2604 = vmatpush2.msra.mxu0 0.0
    %2605 = vmatprep.subr.mxu0 0.0
    %2606 = vmatpush2.msra.mxu0 0.0
    %2607 = vmatprep.subr.mxu0 0.0
    %2608 = vmatpush2.msra.mxu0 0.0
    %2609 = vmatprep.subr.mxu0 0.0
    %2610 = vmatpush2.msra.mxu0 0.0
    %2611 = vmatprep.subr.mxu0 0.0
    %2612 = vmatpush2.msra.mxu0 0.0
    %2613 = vmatprep.subr.mxu0 0.0
    %2614 = vmatpush2.msra.mxu0 0.0
    %2615 = vmatprep.subr.mxu0 0.0
    %2616 = vmatpush2.msra.mxu0 0.0
    %2617 = vmatprep.subr.mxu0 0.0
    %2618 = vmatpush2.msra.mxu0 0.0
    %2619 = vmatprep.subr.mxu0 0.0
    %2620 = vmatpush2.msra.mxu0 0.0
    %2621 = vmatprep.subr.mxu0 0.0
    %2622 = vmatpush2.msra.mxu0 0.0
    %2623 = vmatprep.subr.mxu0 0.0
    %2624 = vmatpush2.msra.mxu0 0.0
    %2625 = vmatprep.subr.mxu0 0.0
    %2626 = vmatpush2.msra.mxu0 0.0
    %2627 = vmatprep.subr.mxu0 0.0
    %2628 = vmatpush2.msra.mxu0 0.0
    %2629 = vmatprep.mubr.f32.mxu0 0.0
    %2630 = vmatmul.mubr.f32.gmra.mxu0 %v2306
    %v2631 = vpop.f32.mrf.mxu0
    %v2632 = vadd.f32 0.0, %v2631
    %v2633 = vpop.f32.mrf.mxu0
    %2634 = vdwg.mxu0
    %v2635 = vadd.f32 %v2562, %v2632
    %v2636 = vadd.f32 %v2635, %v1899
    %v2637 = vxor.u32 %v2636, 2147483648
    %v2638 = vmul.f32 %v2637, 1.442695
    %v2639 = vpow.pop %v2638
    %v2640 = vadd.f32 %v2639, 1.0
    %v2641 = vrcp.pop %v2640
    %v2642 = vmul.f32 1.0, %v2641
    %v2643 = vadd.f32 %v2562, %v1899
    %v2644 = vadd.f32 %v2632, %v1910
    %2646 = vrot.lane.b32.xlu0 %v2644, 64
    %v2647 = vpop.permute.xlu0 %2646
    %v2649 = vmul.f32 %v2642, %v2647
    %2651 = vrot.lane.b32.xlu0 %v2649, 64
    %v2652 = vpop.permute.xlu0 %2651
    %v2654 = vadd.f32 %v2643, %v2652
    %v2655 = vtanh.pop %v2654
    %v2656 = vsub.f32 1.0, %v2642
    %2658 = vrot.lane.b32.xlu0 %v2655, 96
    %v2659 = vpop.permute.xlu0 %2658
    %v2661 = vmul.f32 %v2656, %v2659
    %v2662 = vmul.f32 %v2642, %v2302
    %v2663 = vadd.f32 %v2661, %v2662
    %2665 = vrot.lane.b32.xlu0 %v2663, 96
    %v2666 = vpop.permute.xlu0 %2665
    %v2667 = vsel %vm178, %v2666, 0
    %2669 = vmatprep.subr.mxu0 0.0
    %2670 = vmatpush1.msra.mxu0 0.0
    %2671 = vmatprep.subr.mxu0 0.0
    %2672 = vmatpush1.msra.mxu0 0.0
    %2673 = vmatprep.subr.mxu0 0.0
    %2674 = vmatpush1.msra.mxu0 0.0
    %2675 = vmatprep.subr.mxu0 0.0
    %2676 = vmatpush1.msra.mxu0 0.0
    %2677 = vmatprep.subr.mxu0 0.0
    %2678 = vmatpush1.msra.mxu0 0.0
    %2679 = vmatprep.subr.mxu0 0.0
    %2680 = vmatpush1.msra.mxu0 0.0
    %2681 = vmatprep.subr.mxu0 0.0
    %2682 = vmatpush1.msra.mxu0 0.0
    %2683 = vmatprep.subr.mxu0 0.0
    %2684 = vmatpush1.msra.mxu0 0.0
    %2685 = vmatprep.subr.mxu0 0.0
    %2686 = vmatpush1.msra.mxu0 0.0
    %2687 = vmatprep.subr.mxu0 0.0
    %2688 = vmatpush1.msra.mxu0 0.0
    %2689 = vmatprep.subr.mxu0 0.0
    %2690 = vmatpush1.msra.mxu0 0.0
    %2691 = vmatprep.subr.mxu0 0.0
    %2692 = vmatpush1.msra.mxu0 0.0
    %2693 = vmatprep.subr.mxu0 0.0
    %2694 = vmatpush1.msra.mxu0 %v1667
    %2695 = vmatprep.subr.mxu0 0.0
    %2696 = vmatpush1.msra.mxu0 %v1666
    %2697 = vmatprep.subr.mxu0 0.0
    %2698 = vmatpush1.msra.mxu0 %v1665
    %2699 = vmatprep.subr.mxu0 0.0
    %2700 = vmatpush1.msra.mxu0 %v1664
    %2701 = vmatprep.subr.mxu0 0.0
    %2702 = vmatpush2.msra.mxu0 0.0
    %2703 = vmatprep.subr.mxu0 0.0
    %2704 = vmatpush2.msra.mxu0 0.0
    %2705 = vmatprep.subr.mxu0 0.0
    %2706 = vmatpush2.msra.mxu0 0.0
    %2707 = vmatprep.subr.mxu0 0.0
    %2708 = vmatpush2.msra.mxu0 0.0
    %2709 = vmatprep.subr.mxu0 0.0
    %2710 = vmatpush2.msra.mxu0 0.0
    %2711 = vmatprep.subr.mxu0 0.0
    %2712 = vmatpush2.msra.mxu0 0.0
    %2713 = vmatprep.subr.mxu0 0.0
    %2714 = vmatpush2.msra.mxu0 0.0
    %2715 = vmatprep.subr.mxu0 0.0
    %2716 = vmatpush2.msra.mxu0 0.0
    %2717 = vmatprep.subr.mxu0 0.0
    %2718 = vmatpush2.msra.mxu0 0.0
    %2719 = vmatprep.subr.mxu0 0.0
    %2720 = vmatpush2.msra.mxu0 0.0
    %2721 = vmatprep.subr.mxu0 0.0
    %2722 = vmatpush2.msra.mxu0 0.0
    %2723 = vmatprep.subr.mxu0 0.0
    %2724 = vmatpush2.msra.mxu0 0.0
    %2725 = vmatprep.subr.mxu0 0.0
    %2726 = vmatpush2.msra.mxu0 0.0
    %2727 = vmatprep.subr.mxu0 0.0
    %2728 = vmatpush2.msra.mxu0 0.0
    %2729 = vmatprep.subr.mxu0 0.0
    %2730 = vmatpush2.msra.mxu0 0.0
    %2731 = vmatprep.subr.mxu0 0.0
    %2732 = vmatpush2.msra.mxu0 0.0
    %2733 = vmatprep.mubr.f32.mxu0 0.0
    %2734 = vmatmul.mubr.f32.gmra.mxu0 %v2667
    %v2735 = vpop.f32.mrf.mxu0
    %v2736 = vadd.f32 %v1939, %v2735
    %v2737 = vpop.f32.mrf.mxu0
    %2738 = vdwg.mxu0
    %v2739 = vsel %vm2016, %v2736, -inf
    %2740 = vmax.xlane.f32.xlu0 %v2739
    %v2741 = vpop.xlane.xlu0 %2740
    %vm2742 = vweird.f32 %v2741
    %vm2743 = vmxor %vm2742, 1
    %v2744 = vsel %vm2743, %v2741, 0.0
    %v2745 = vsub.f32 %v2736, %v2744
    %v2746 = vmul.f32 %v2745, 1.442695
    %v2747 = vpow.pop %v2746
    %v2748 = vsel %vm2016, %v2747, 0.0
    %2749 = vadd.xlane.f32.xlu0 %v2748
    %v2750 = vpop.xlane.xlu0 %2749
    %v2751 = vand.u32 2147483647, %v2750
    %v2752 = vlog2.pop %v2751
    %v2753 = vmul.f32 %v2752, 0.6931472
    %v2754 = vadd.f32 %v2753, %v2744
    %v2755 = vsub.f32 %v2736, %v2754
    %v2756 = vsel %vm2016, %v2755, -inf
    %2757 = vmax.xlane.f32.xlu0 %v2756
    %v2758 = vpop.xlane.xlu0 %2757
    %vm2759 = vcmp.eq.f32.partialorder %v2755, %v2758
    %v2760 = vsel %vm2759, %v1670, 32
    %v2761 = vsel %vm2016, %v2760, 2147483647
    %v2762 = vand.u32 %v2761, 65535
    %v2763 = vshra.s32 %v2761, 16
    %v2764 = vcvt.s32.f32 %v2762
    %v2765 = vcvt.s32.f32 %v2763
    %2766 = vmin.xlane.f32.xlu0 %v2765
    %v2767 = vpop.xlane.xlu0 %2766
    %vm2768 = vcmp.eq.f32.partialorder %v2765, %v2767
    %v2769 = vsel %vm2768, %v2764, inf
    %2770 = vmin.xlane.f32.xlu0 %v2769
    %v2771 = vpop.xlane.xlu0 %2770
    %v2772 = vcvt.f32.s32 %v2771
    %v2773 = vcvt.f32.s32 %v2767
    %v2774 = vshll.u32 %v2773, 16
    %v2775 = vadd.s32 %v2774, %v2772
    %vm2776 = vcmp.eq.s32.totalorder %v1670, %v2775
    %v2777 = vsel %vm2776, 1, 0
    %v2778 = vcvt.s32.f32 %v2777
    %v2780 = vsel %vm178, %v2778, 0
    %2782 = vmatprep.subr.mxu0 0.0
    %2783 = vmatpush1.msra.mxu0 0.0
    %2784 = vmatprep.subr.mxu0 0.0
    %2785 = vmatpush1.msra.mxu0 0.0
    %2786 = vmatprep.subr.mxu0 0.0
    %2787 = vmatpush1.msra.mxu0 0.0
    %2788 = vmatprep.subr.mxu0 0.0
    %2789 = vmatpush1.msra.mxu0 0.0
    %2790 = vmatprep.subr.mxu0 0.0
    %2791 = vmatpush1.msra.mxu0 0.0
    %2792 = vmatprep.subr.mxu0 0.0
    %2793 = vmatpush1.msra.mxu0 0.0
    %2794 = vmatprep.subr.mxu0 0.0
    %2795 = vmatpush1.msra.mxu0 0.0
    %2796 = vmatprep.subr.mxu0 0.0
    %2797 = vmatpush1.msra.mxu0 0.0
    %2798 = vmatprep.subr.mxu0 0.0
    %2799 = vmatpush1.msra.mxu0 0.0
    %2800 = vmatprep.subr.mxu0 0.0
    %2801 = vmatpush1.msra.mxu0 0.0
    %2802 = vmatprep.subr.mxu0 0.0
    %2803 = vmatpush1.msra.mxu0 0.0
    %2804 = vmatprep.subr.mxu0 0.0
    %2805 = vmatpush1.msra.mxu0 0.0
    %2806 = vmatprep.subr.mxu0 0.0
    %2807 = vmatpush1.msra.mxu0 %v1654
    %2808 = vmatprep.subr.mxu0 0.0
    %2809 = vmatpush1.msra.mxu0 %v1653
    %2810 = vmatprep.subr.mxu0 0.0
    %2811 = vmatpush1.msra.mxu0 %v1652
    %2812 = vmatprep.subr.mxu0 0.0
    %2813 = vmatpush1.msra.mxu0 %v1651
    %2814 = vmatprep.subr.mxu0 0.0
    %2815 = vmatpush2.msra.mxu0 0.0
    %2816 = vmatprep.subr.mxu0 0.0
    %2817 = vmatpush2.msra.mxu0 0.0
    %2818 = vmatprep.subr.mxu0 0.0
    %2819 = vmatpush2.msra.mxu0 0.0
    %2820 = vmatprep.subr.mxu0 0.0
    %2821 = vmatpush2.msra.mxu0 0.0
    %2822 = vmatprep.subr.mxu0 0.0
    %2823 = vmatpush2.msra.mxu0 0.0
    %2824 = vmatprep.subr.mxu0 0.0
    %2825 = vmatpush2.msra.mxu0 0.0
    %2826 = vmatprep.subr.mxu0 0.0
    %2827 = vmatpush2.msra.mxu0 0.0
    %2828 = vmatprep.subr.mxu0 0.0
    %2829 = vmatpush2.msra.mxu0 0.0
    %2830 = vmatprep.subr.mxu0 0.0
    %2831 = vmatpush2.msra.mxu0 0.0
    %2832 = vmatprep.subr.mxu0 0.0
    %2833 = vmatpush2.msra.mxu0 0.0
    %2834 = vmatprep.subr.mxu0 0.0
    %2835 = vmatpush2.msra.mxu0 0.0
    %2836 = vmatprep.subr.mxu0 0.0
    %2837 = vmatpush2.msra.mxu0 0.0
    %2838 = vmatprep.subr.mxu0 0.0
    %2839 = vmatpush2.msra.mxu0 0.0
    %2840 = vmatprep.subr.mxu0 0.0
    %2841 = vmatpush2.msra.mxu0 0.0
    %2842 = vmatprep.subr.mxu0 0.0
    %2843 = vmatpush2.msra.mxu0 0.0
    %2844 = vmatprep.subr.mxu0 0.0
    %2845 = vmatpush2.msra.mxu0 0.0
    %2846 = vmatprep.mubr.f32.mxu0 0.0
    %2847 = vmatmul.mubr.f32.gmra.mxu0 %v2780
    %v2848 = vpop.f32.mrf.mxu0
    %v2849 = vadd.f32 0.0, %v2848
    %v2850 = vpop.f32.mrf.mxu0
    %2851 = vdwg.mxu0
    %v2852 = vmax.f32 %v2849, 0.0
    %v2854 = vsel %vm178, %v2852, 0
    %2856 = vmatprep.subr.mxu0 0.0
    %2857 = vmatpush1.msra.mxu0 0.0
    %2858 = vmatprep.subr.mxu0 0.0
    %2859 = vmatpush1.msra.mxu0 0.0
    %2860 = vmatprep.subr.mxu0 0.0
    %2861 = vmatpush1.msra.mxu0 0.0
    %2862 = vmatprep.subr.mxu0 0.0
    %2863 = vmatpush1.msra.mxu0 0.0
    %2864 = vmatprep.subr.mxu0 0.0
    %2865 = vmatpush1.msra.mxu0 0.0
    %2866 = vmatprep.subr.mxu0 0.0
    %2867 = vmatpush1.msra.mxu0 0.0
    %2868 = vmatprep.subr.mxu0 0.0
    %2869 = vmatpush1.msra.mxu0 0.0
    %2870 = vmatprep.subr.mxu0 0.0
    %2871 = vmatpush1.msra.mxu0 0.0
    %2872 = vmatprep.subr.mxu0 0.0
    %2873 = vmatpush1.msra.mxu0 0.0
    %2874 = vmatprep.subr.mxu0 0.0
    %2875 = vmatpush1.msra.mxu0 0.0
    %2876 = vmatprep.subr.mxu0 0.0
    %2877 = vmatpush1.msra.mxu0 0.0
    %2878 = vmatprep.subr.mxu0 0.0
    %2879 = vmatpush1.msra.mxu0 0.0
    %2880 = vmatprep.subr.mxu0 0.0
    %2881 = vmatpush1.msra.mxu0 %v1658
    %2882 = vmatprep.subr.mxu0 0.0
    %2883 = vmatpush1.msra.mxu0 %v1657
    %2884 = vmatprep.subr.mxu0 0.0
    %2885 = vmatpush1.msra.mxu0 %v1656
    %2886 = vmatprep.subr.mxu0 0.0
    %2887 = vmatpush1.msra.mxu0 %v1655
    %2888 = vmatprep.subr.mxu0 0.0
    %2889 = vmatpush2.msra.mxu0 0.0
    %2890 = vmatprep.subr.mxu0 0.0
    %2891 = vmatpush2.msra.mxu0 0.0
    %2892 = vmatprep.subr.mxu0 0.0
    %2893 = vmatpush2.msra.mxu0 0.0
    %2894 = vmatprep.subr.mxu0 0.0
    %2895 = vmatpush2.msra.mxu0 0.0
    %2896 = vmatprep.subr.mxu0 0.0
    %2897 = vmatpush2.msra.mxu0 0.0
    %2898 = vmatprep.subr.mxu0 0.0
    %2899 = vmatpush2.msra.mxu0 0.0
    %2900 = vmatprep.subr.mxu0 0.0
    %2901 = vmatpush2.msra.mxu0 0.0
    %2902 = vmatprep.subr.mxu0 0.0
    %2903 = vmatpush2.msra.mxu0 0.0
    %2904 = vmatprep.subr.mxu0 0.0
    %2905 = vmatpush2.msra.mxu0 0.0
    %2906 = vmatprep.subr.mxu0 0.0
    %2907 = vmatpush2.msra.mxu0 0.0
    %2908 = vmatprep.subr.mxu0 0.0
    %2909 = vmatpush2.msra.mxu0 0.0
    %2910 = vmatprep.subr.mxu0 0.0
    %2911 = vmatpush2.msra.mxu0 0.0
    %2912 = vmatprep.subr.mxu0 0.0
    %2913 = vmatpush2.msra.mxu0 0.0
    %2914 = vmatprep.subr.mxu0 0.0
    %2915 = vmatpush2.msra.mxu0 0.0
    %2916 = vmatprep.subr.mxu0 0.0
    %2917 = vmatpush2.msra.mxu0 0.0
    %2918 = vmatprep.subr.mxu0 0.0
    %2919 = vmatpush2.msra.mxu0 0.0
    %2920 = vmatprep.mubr.f32.mxu0 0.0
    %2921 = vmatmul.mubr.f32.gmra.mxu0 %v2854
    %v2922 = vpop.f32.mrf.mxu0
    %v2923 = vadd.f32 0.0, %v2922
    %v2924 = vpop.f32.mrf.mxu0
    %2925 = vdwg.mxu0
    %2926 = vmatprep.subr.mxu0 0.0
    %2927 = vmatpush1.msra.mxu0 0.0
    %2928 = vmatprep.subr.mxu0 0.0
    %2929 = vmatpush1.msra.mxu0 0.0
    %2930 = vmatprep.subr.mxu0 0.0
    %2931 = vmatpush1.msra.mxu0 0.0
    %2932 = vmatprep.subr.mxu0 0.0
    %2933 = vmatpush1.msra.mxu0 0.0
    %2934 = vmatprep.subr.mxu0 0.0
    %2935 = vmatpush1.msra.mxu0 0.0
    %2936 = vmatprep.subr.mxu0 0.0
    %2937 = vmatpush1.msra.mxu0 0.0
    %2938 = vmatprep.subr.mxu0 0.0
    %2939 = vmatpush1.msra.mxu0 0.0
    %2940 = vmatprep.subr.mxu0 0.0
    %2941 = vmatpush1.msra.mxu0 0.0
    %2942 = vmatprep.subr.mxu0 0.0
    %2943 = vmatpush1.msra.mxu0 0.0
    %2944 = vmatprep.subr.mxu0 0.0
    %2945 = vmatpush1.msra.mxu0 0.0
    %2946 = vmatprep.subr.mxu0 0.0
    %2947 = vmatpush1.msra.mxu0 0.0
    %2948 = vmatprep.subr.mxu0 0.0
    %2949 = vmatpush1.msra.mxu0 0.0
    %2950 = vmatprep.subr.mxu0 0.0
    %2951 = vmatpush1.msra.mxu0 %v1662
    %2952 = vmatprep.subr.mxu0 0.0
    %2953 = vmatpush1.msra.mxu0 %v1661
    %2954 = vmatprep.subr.mxu0 0.0
    %2955 = vmatpush1.msra.mxu0 %v1660
    %2956 = vmatprep.subr.mxu0 0.0
    %2957 = vmatpush1.msra.mxu0 %v1659
    %2958 = vmatprep.subr.mxu0 0.0
    %2959 = vmatpush2.msra.mxu0 0.0
    %2960 = vmatprep.subr.mxu0 0.0
    %2961 = vmatpush2.msra.mxu0 0.0
    %2962 = vmatprep.subr.mxu0 0.0
    %2963 = vmatpush2.msra.mxu0 0.0
    %2964 = vmatprep.subr.mxu0 0.0
    %2965 = vmatpush2.msra.mxu0 0.0
    %2966 = vmatprep.subr.mxu0 0.0
    %2967 = vmatpush2.msra.mxu0 0.0
    %2968 = vmatprep.subr.mxu0 0.0
    %2969 = vmatpush2.msra.mxu0 0.0
    %2970 = vmatprep.subr.mxu0 0.0
    %2971 = vmatpush2.msra.mxu0 0.0
    %2972 = vmatprep.subr.mxu0 0.0
    %2973 = vmatpush2.msra.mxu0 0.0
    %2974 = vmatprep.subr.mxu0 0.0
    %2975 = vmatpush2.msra.mxu0 0.0
    %2976 = vmatprep.subr.mxu0 0.0
    %2977 = vmatpush2.msra.mxu0 0.0
    %2978 = vmatprep.subr.mxu0 0.0
    %2979 = vmatpush2.msra.mxu0 0.0
    %2980 = vmatprep.subr.mxu0 0.0
    %2981 = vmatpush2.msra.mxu0 0.0
    %2982 = vmatprep.subr.mxu0 0.0
    %2983 = vmatpush2.msra.mxu0 0.0
    %2984 = vmatprep.subr.mxu0 0.0
    %2985 = vmatpush2.msra.mxu0 0.0
    %2986 = vmatprep.subr.mxu0 0.0
    %2987 = vmatpush2.msra.mxu0 0.0
    %2988 = vmatprep.subr.mxu0 0.0
    %2989 = vmatpush2.msra.mxu0 0.0
    %2990 = vmatprep.mubr.f32.mxu0 0.0
    %2991 = vmatmul.mubr.f32.gmra.mxu0 %v2667
    %v2992 = vpop.f32.mrf.mxu0
    %v2993 = vadd.f32 0.0, %v2992
    %v2994 = vpop.f32.mrf.mxu0
    %2995 = vdwg.mxu0
    %v2996 = vadd.f32 %v2923, %v2993
    %v2997 = vadd.f32 %v2996, %v1899
    %v2998 = vxor.u32 %v2997, 2147483648
    %v2999 = vmul.f32 %v2998, 1.442695
    %v3000 = vpow.pop %v2999
    %v3001 = vadd.f32 %v3000, 1.0
    %v3002 = vrcp.pop %v3001
    %v3003 = vmul.f32 1.0, %v3002
    %v3004 = vadd.f32 %v2923, %v1899
    %v3005 = vadd.f32 %v2993, %v1910
    %3007 = vrot.lane.b32.xlu0 %v3005, 64
    %v3008 = vpop.permute.xlu0 %3007
    %v3010 = vmul.f32 %v3003, %v3008
    %3012 = vrot.lane.b32.xlu0 %v3010, 64
    %v3013 = vpop.permute.xlu0 %3012
    %v3015 = vadd.f32 %v3004, %v3013
    %v3016 = vtanh.pop %v3015
    %v3017 = vsub.f32 1.0, %v3003
    %3019 = vrot.lane.b32.xlu0 %v3016, 96
    %v3020 = vpop.permute.xlu0 %3019
    %v3022 = vmul.f32 %v3017, %v3020
    %v3023 = vmul.f32 %v3003, %v2663
    %v3024 = vadd.f32 %v3022, %v3023
    %3026 = vrot.lane.b32.xlu0 %v3024, 96
    %v3027 = vpop.permute.xlu0 %3026
    %v3028 = vsel %vm178, %v3027, 0
    %3030 = vmatprep.subr.mxu0 0.0
    %3031 = vmatpush1.msra.mxu0 0.0
    %3032 = vmatprep.subr.mxu0 0.0
    %3033 = vmatpush1.msra.mxu0 0.0
    %3034 = vmatprep.subr.mxu0 0.0
    %3035 = vmatpush1.msra.mxu0 0.0
    %3036 = vmatprep.subr.mxu0 0.0
    %3037 = vmatpush1.msra.mxu0 0.0
    %3038 = vmatprep.subr.mxu0 0.0
    %3039 = vmatpush1.msra.mxu0 0.0
    %3040 = vmatprep.subr.mxu0 0.0
    %3041 = vmatpush1.msra.mxu0 0.0
    %3042 = vmatprep.subr.mxu0 0.0
    %3043 = vmatpush1.msra.mxu0 0.0
    %3044 = vmatprep.subr.mxu0 0.0
    %3045 = vmatpush1.msra.mxu0 0.0
    %3046 = vmatprep.subr.mxu0 0.0
    %3047 = vmatpush1.msra.mxu0 0.0
    %3048 = vmatprep.subr.mxu0 0.0
    %3049 = vmatpush1.msra.mxu0 0.0
    %3050 = vmatprep.subr.mxu0 0.0
    %3051 = vmatpush1.msra.mxu0 0.0
    %3052 = vmatprep.subr.mxu0 0.0
    %3053 = vmatpush1.msra.mxu0 0.0
    %3054 = vmatprep.subr.mxu0 0.0
    %3055 = vmatpush1.msra.mxu0 %v1667
    %3056 = vmatprep.subr.mxu0 0.0
    %3057 = vmatpush1.msra.mxu0 %v1666
    %3058 = vmatprep.subr.mxu0 0.0
    %3059 = vmatpush1.msra.mxu0 %v1665
    %3060 = vmatprep.subr.mxu0 0.0
    %3061 = vmatpush1.msra.mxu0 %v1664
    %3062 = vmatprep.subr.mxu0 0.0
    %3063 = vmatpush2.msra.mxu0 0.0
    %3064 = vmatprep.subr.mxu0 0.0
    %3065 = vmatpush2.msra.mxu0 0.0
    %3066 = vmatprep.subr.mxu0 0.0
    %3067 = vmatpush2.msra.mxu0 0.0
    %3068 = vmatprep.subr.mxu0 0.0
    %3069 = vmatpush2.msra.mxu0 0.0
    %3070 = vmatprep.subr.mxu0 0.0
    %3071 = vmatpush2.msra.mxu0 0.0
    %3072 = vmatprep.subr.mxu0 0.0
    %3073 = vmatpush2.msra.mxu0 0.0
    %3074 = vmatprep.subr.mxu0 0.0
    %3075 = vmatpush2.msra.mxu0 0.0
    %3076 = vmatprep.subr.mxu0 0.0
    %3077 = vmatpush2.msra.mxu0 0.0
    %3078 = vmatprep.subr.mxu0 0.0
    %3079 = vmatpush2.msra.mxu0 0.0
    %3080 = vmatprep.subr.mxu0 0.0
    %3081 = vmatpush2.msra.mxu0 0.0
    %3082 = vmatprep.subr.mxu0 0.0
    %3083 = vmatpush2.msra.mxu0 0.0
    %3084 = vmatprep.subr.mxu0 0.0
    %3085 = vmatpush2.msra.mxu0 0.0
    %3086 = vmatprep.subr.mxu0 0.0
    %3087 = vmatpush2.msra.mxu0 0.0
    %3088 = vmatprep.subr.mxu0 0.0
    %3089 = vmatpush2.msra.mxu0 0.0
    %3090 = vmatprep.subr.mxu0 0.0
    %3091 = vmatpush2.msra.mxu0 0.0
    %3092 = vmatprep.subr.mxu0 0.0
    %3093 = vmatpush2.msra.mxu0 0.0
    %3094 = vmatprep.mubr.f32.mxu0 0.0
    %3095 = vmatmul.mubr.f32.gmra.mxu0 %v3028
    %v3096 = vpop.f32.mrf.mxu0
    %v3097 = vadd.f32 %v1939, %v3096
    %v3098 = vpop.f32.mrf.mxu0
    %3099 = vdwg.mxu0
    %v3100 = vsel %vm2016, %v3097, -inf
    %3101 = vmax.xlane.f32.xlu0 %v3100
    %v3102 = vpop.xlane.xlu0 %3101
    %vm3103 = vweird.f32 %v3102
    %vm3104 = vmxor %vm3103, 1
    %v3105 = vsel %vm3104, %v3102, 0.0
    %v3106 = vsub.f32 %v3097, %v3105
    %v3107 = vmul.f32 %v3106, 1.442695
    %v3108 = vpow.pop %v3107
    %v3109 = vsel %vm2016, %v3108, 0.0
    %3110 = vadd.xlane.f32.xlu0 %v3109
    %v3111 = vpop.xlane.xlu0 %3110
    %v3112 = vand.u32 2147483647, %v3111
    %v3113 = vlog2.pop %v3112
    %v3114 = vmul.f32 %v3113, 0.6931472
    %v3115 = vadd.f32 %v3114, %v3105
    %v3116 = vsub.f32 %v3097, %v3115
    %v3117 = vsel %vm2016, %v3116, -inf
    %3118 = vmax.xlane.f32.xlu0 %v3117
    %v3119 = vpop.xlane.xlu0 %3118
    %vm3120 = vcmp.eq.f32.partialorder %v3116, %v3119
    %v3121 = vsel %vm3120, %v1670, 32
    %v3122 = vsel %vm2016, %v3121, 2147483647
    %v3123 = vand.u32 %v3122, 65535
    %v3124 = vshra.s32 %v3122, 16
    %v3125 = vcvt.s32.f32 %v3123
    %v3126 = vcvt.s32.f32 %v3124
    %3127 = vmin.xlane.f32.xlu0 %v3126
    %v3128 = vpop.xlane.xlu0 %3127
    %vm3129 = vcmp.eq.f32.partialorder %v3126, %v3128
    %v3130 = vsel %vm3129, %v3125, inf
    %3131 = vmin.xlane.f32.xlu0 %v3130
    %v3132 = vpop.xlane.xlu0 %3131
    %v3133 = vcvt.f32.s32 %v3132
    %v3134 = vcvt.f32.s32 %v3128
    %v3135 = vshll.u32 %v3134, 16
    %v3136 = vadd.s32 %v3135, %v3133
    %vm3137 = vcmp.eq.s32.totalorder %v1670, %v3136
    %v3138 = vsel %vm3137, 1, 0
    %v3139 = vcvt.s32.f32 %v3138
    %v3141 = vsel %vm178, %v3139, 0
    %3143 = vmatprep.subr.mxu0 0.0
    %3144 = vmatpush1.msra.mxu0 0.0
    %3145 = vmatprep.subr.mxu0 0.0
    %3146 = vmatpush1.msra.mxu0 0.0
    %3147 = vmatprep.subr.mxu0 0.0
    %3148 = vmatpush1.msra.mxu0 0.0
    %3149 = vmatprep.subr.mxu0 0.0
    %3150 = vmatpush1.msra.mxu0 0.0
    %3151 = vmatprep.subr.mxu0 0.0
    %3152 = vmatpush1.msra.mxu0 0.0
    %3153 = vmatprep.subr.mxu0 0.0
    %3154 = vmatpush1.msra.mxu0 0.0
    %3155 = vmatprep.subr.mxu0 0.0
    %3156 = vmatpush1.msra.mxu0 0.0
    %3157 = vmatprep.subr.mxu0 0.0
    %3158 = vmatpush1.msra.mxu0 0.0
    %3159 = vmatprep.subr.mxu0 0.0
    %3160 = vmatpush1.msra.mxu0 0.0
    %3161 = vmatprep.subr.mxu0 0.0
    %3162 = vmatpush1.msra.mxu0 0.0
    %3163 = vmatprep.subr.mxu0 0.0
    %3164 = vmatpush1.msra.mxu0 0.0
    %3165 = vmatprep.subr.mxu0 0.0
    %3166 = vmatpush1.msra.mxu0 0.0
    %3167 = vmatprep.subr.mxu0 0.0
    %3168 = vmatpush1.msra.mxu0 %v1654
    %3169 = vmatprep.subr.mxu0 0.0
    %3170 = vmatpush1.msra.mxu0 %v1653
    %3171 = vmatprep.subr.mxu0 0.0
    %3172 = vmatpush1.msra.mxu0 %v1652
    %3173 = vmatprep.subr.mxu0 0.0
    %3174 = vmatpush1.msra.mxu0 %v1651
    %3175 = vmatprep.subr.mxu0 0.0
    %3176 = vmatpush2.msra.mxu0 0.0
    %3177 = vmatprep.subr.mxu0 0.0
    %3178 = vmatpush2.msra.mxu0 0.0
    %3179 = vmatprep.subr.mxu0 0.0
    %3180 = vmatpush2.msra.mxu0 0.0
    %3181 = vmatprep.subr.mxu0 0.0
    %3182 = vmatpush2.msra.mxu0 0.0
    %3183 = vmatprep.subr.mxu0 0.0
    %3184 = vmatpush2.msra.mxu0 0.0
    %3185 = vmatprep.subr.mxu0 0.0
    %3186 = vmatpush2.msra.mxu0 0.0
    %3187 = vmatprep.subr.mxu0 0.0
    %3188 = vmatpush2.msra.mxu0 0.0
    %3189 = vmatprep.subr.mxu0 0.0
    %3190 = vmatpush2.msra.mxu0 0.0
    %3191 = vmatprep.subr.mxu0 0.0
    %3192 = vmatpush2.msra.mxu0 0.0
    %3193 = vmatprep.subr.mxu0 0.0
    %3194 = vmatpush2.msra.mxu0 0.0
    %3195 = vmatprep.subr.mxu0 0.0
    %3196 = vmatpush2.msra.mxu0 0.0
    %3197 = vmatprep.subr.mxu0 0.0
    %3198 = vmatpush2.msra.mxu0 0.0
    %3199 = vmatprep.subr.mxu0 0.0
    %3200 = vmatpush2.msra.mxu0 0.0
    %3201 = vmatprep.subr.mxu0 0.0
    %3202 = vmatpush2.msra.mxu0 0.0
    %3203 = vmatprep.subr.mxu0 0.0
    %3204 = vmatpush2.msra.mxu0 0.0
    %3205 = vmatprep.subr.mxu0 0.0
    %3206 = vmatpush2.msra.mxu0 0.0
    %3207 = vmatprep.mubr.f32.mxu0 0.0
    %3208 = vmatmul.mubr.f32.gmra.mxu0 %v3141
    %v3209 = vpop.f32.mrf.mxu0
    %v3210 = vadd.f32 0.0, %v3209
    %v3211 = vpop.f32.mrf.mxu0
    %3212 = vdwg.mxu0
    %v3213 = vmax.f32 %v3210, 0.0
    %v3215 = vsel %vm178, %v3213, 0
    %3217 = vmatprep.subr.mxu0 0.0
    %3218 = vmatpush1.msra.mxu0 0.0
    %3219 = vmatprep.subr.mxu0 0.0
    %3220 = vmatpush1.msra.mxu0 0.0
    %3221 = vmatprep.subr.mxu0 0.0
    %3222 = vmatpush1.msra.mxu0 0.0
    %3223 = vmatprep.subr.mxu0 0.0
    %3224 = vmatpush1.msra.mxu0 0.0
    %3225 = vmatprep.subr.mxu0 0.0
    %3226 = vmatpush1.msra.mxu0 0.0
    %3227 = vmatprep.subr.mxu0 0.0
    %3228 = vmatpush1.msra.mxu0 0.0
    %3229 = vmatprep.subr.mxu0 0.0
    %3230 = vmatpush1.msra.mxu0 0.0
    %3231 = vmatprep.subr.mxu0 0.0
    %3232 = vmatpush1.msra.mxu0 0.0
    %3233 = vmatprep.subr.mxu0 0.0
    %3234 = vmatpush1.msra.mxu0 0.0
    %3235 = vmatprep.subr.mxu0 0.0
    %3236 = vmatpush1.msra.mxu0 0.0
    %3237 = vmatprep.subr.mxu0 0.0
    %3238 = vmatpush1.msra.mxu0 0.0
    %3239 = vmatprep.subr.mxu0 0.0
    %3240 = vmatpush1.msra.mxu0 0.0
    %3241 = vmatprep.subr.mxu0 0.0
    %3242 = vmatpush1.msra.mxu0 %v1658
    %3243 = vmatprep.subr.mxu0 0.0
    %3244 = vmatpush1.msra.mxu0 %v1657
    %3245 = vmatprep.subr.mxu0 0.0
    %3246 = vmatpush1.msra.mxu0 %v1656
    %3247 = vmatprep.subr.mxu0 0.0
    %3248 = vmatpush1.msra.mxu0 %v1655
    %3249 = vmatprep.subr.mxu0 0.0
    %3250 = vmatpush2.msra.mxu0 0.0
    %3251 = vmatprep.subr.mxu0 0.0
    %3252 = vmatpush2.msra.mxu0 0.0
    %3253 = vmatprep.subr.mxu0 0.0
    %3254 = vmatpush2.msra.mxu0 0.0
    %3255 = vmatprep.subr.mxu0 0.0
    %3256 = vmatpush2.msra.mxu0 0.0
    %3257 = vmatprep.subr.mxu0 0.0
    %3258 = vmatpush2.msra.mxu0 0.0
    %3259 = vmatprep.subr.mxu0 0.0
    %3260 = vmatpush2.msra.mxu0 0.0
    %3261 = vmatprep.subr.mxu0 0.0
    %3262 = vmatpush2.msra.mxu0 0.0
    %3263 = vmatprep.subr.mxu0 0.0
    %3264 = vmatpush2.msra.mxu0 0.0
    %3265 = vmatprep.subr.mxu0 0.0
    %3266 = vmatpush2.msra.mxu0 0.0
    %3267 = vmatprep.subr.mxu0 0.0
    %3268 = vmatpush2.msra.mxu0 0.0
    %3269 = vmatprep.subr.mxu0 0.0
    %3270 = vmatpush2.msra.mxu0 0.0
    %3271 = vmatprep.subr.mxu0 0.0
    %3272 = vmatpush2.msra.mxu0 0.0
    %3273 = vmatprep.subr.mxu0 0.0
    %3274 = vmatpush2.msra.mxu0 0.0
    %3275 = vmatprep.subr.mxu0 0.0
    %3276 = vmatpush2.msra.mxu0 0.0
    %3277 = vmatprep.subr.mxu0 0.0
    %3278 = vmatpush2.msra.mxu0 0.0
    %3279 = vmatprep.subr.mxu0 0.0
    %3280 = vmatpush2.msra.mxu0 0.0
    %3281 = vmatprep.mubr.f32.mxu0 0.0
    %3282 = vmatmul.mubr.f32.gmra.mxu0 %v3215
    %v3283 = vpop.f32.mrf.mxu0
    %v3284 = vadd.f32 0.0, %v3283
    %v3285 = vpop.f32.mrf.mxu0
    %3286 = vdwg.mxu0
    %3287 = vmatprep.subr.mxu0 0.0
    %3288 = vmatpush1.msra.mxu0 0.0
    %3289 = vmatprep.subr.mxu0 0.0
    %3290 = vmatpush1.msra.mxu0 0.0
    %3291 = vmatprep.subr.mxu0 0.0
    %3292 = vmatpush1.msra.mxu0 0.0
    %3293 = vmatprep.subr.mxu0 0.0
    %3294 = vmatpush1.msra.mxu0 0.0
    %3295 = vmatprep.subr.mxu0 0.0
    %3296 = vmatpush1.msra.mxu0 0.0
    %3297 = vmatprep.subr.mxu0 0.0
    %3298 = vmatpush1.msra.mxu0 0.0
    %3299 = vmatprep.subr.mxu0 0.0
    %3300 = vmatpush1.msra.mxu0 0.0
    %3301 = vmatprep.subr.mxu0 0.0
    %3302 = vmatpush1.msra.mxu0 0.0
    %3303 = vmatprep.subr.mxu0 0.0
    %3304 = vmatpush1.msra.mxu0 0.0
    %3305 = vmatprep.subr.mxu0 0.0
    %3306 = vmatpush1.msra.mxu0 0.0
    %3307 = vmatprep.subr.mxu0 0.0
    %3308 = vmatpush1.msra.mxu0 0.0
    %3309 = vmatprep.subr.mxu0 0.0
    %3310 = vmatpush1.msra.mxu0 0.0
    %3311 = vmatprep.subr.mxu0 0.0
    %3312 = vmatpush1.msra.mxu0 %v1662
    %3313 = vmatprep.subr.mxu0 0.0
    %3314 = vmatpush1.msra.mxu0 %v1661
    %3315 = vmatprep.subr.mxu0 0.0
    %3316 = vmatpush1.msra.mxu0 %v1660
    %3317 = vmatprep.subr.mxu0 0.0
    %3318 = vmatpush1.msra.mxu0 %v1659
    %3319 = vmatprep.subr.mxu0 0.0
    %3320 = vmatpush2.msra.mxu0 0.0
    %3321 = vmatprep.subr.mxu0 0.0
    %3322 = vmatpush2.msra.mxu0 0.0
    %3323 = vmatprep.subr.mxu0 0.0
    %3324 = vmatpush2.msra.mxu0 0.0
    %3325 = vmatprep.subr.mxu0 0.0
    %3326 = vmatpush2.msra.mxu0 0.0
    %3327 = vmatprep.subr.mxu0 0.0
    %3328 = vmatpush2.msra.mxu0 0.0
    %3329 = vmatprep.subr.mxu0 0.0
    %3330 = vmatpush2.msra.mxu0 0.0
    %3331 = vmatprep.subr.mxu0 0.0
    %3332 = vmatpush2.msra.mxu0 0.0
    %3333 = vmatprep.subr.mxu0 0.0
    %3334 = vmatpush2.msra.mxu0 0.0
    %3335 = vmatprep.subr.mxu0 0.0
    %3336 = vmatpush2.msra.mxu0 0.0
    %3337 = vmatprep.subr.mxu0 0.0
    %3338 = vmatpush2.msra.mxu0 0.0
    %3339 = vmatprep.subr.mxu0 0.0
    %3340 = vmatpush2.msra.mxu0 0.0
    %3341 = vmatprep.subr.mxu0 0.0
    %3342 = vmatpush2.msra.mxu0 0.0
    %3343 = vmatprep.subr.mxu0 0.0
    %3344 = vmatpush2.msra.mxu0 0.0
    %3345 = vmatprep.subr.mxu0 0.0
    %3346 = vmatpush2.msra.mxu0 0.0
    %3347 = vmatprep.subr.mxu0 0.0
    %3348 = vmatpush2.msra.mxu0 0.0
    %3349 = vmatprep.subr.mxu0 0.0
    %3350 = vmatpush2.msra.mxu0 0.0
    %3351 = vmatprep.mubr.f32.mxu0 0.0
    %3352 = vmatmul.mubr.f32.gmra.mxu0 %v3028
    %v3353 = vpop.f32.mrf.mxu0
    %v3354 = vadd.f32 0.0, %v3353
    %v3355 = vpop.f32.mrf.mxu0
    %3356 = vdwg.mxu0
    %v3357 = vadd.f32 %v3284, %v3354
    %v3358 = vadd.f32 %v3357, %v1899
    %v3359 = vxor.u32 %v3358, 2147483648
    %v3360 = vmul.f32 %v3359, 1.442695
    %v3361 = vpow.pop %v3360
    %v3362 = vadd.f32 %v3361, 1.0
    %v3363 = vrcp.pop %v3362
    %v3364 = vmul.f32 1.0, %v3363
    %v3365 = vadd.f32 %v3284, %v1899
    %v3366 = vadd.f32 %v3354, %v1910
    %3368 = vrot.lane.b32.xlu0 %v3366, 64
    %v3369 = vpop.permute.xlu0 %3368
    %v3371 = vmul.f32 %v3364, %v3369
    %3373 = vrot.lane.b32.xlu0 %v3371, 64
    %v3374 = vpop.permute.xlu0 %3373
    %v3376 = vadd.f32 %v3365, %v3374
    %v3377 = vtanh.pop %v3376
    %v3378 = vsub.f32 1.0, %v3364
    %3380 = vrot.lane.b32.xlu0 %v3377, 96
    %v3381 = vpop.permute.xlu0 %3380
    %v3383 = vmul.f32 %v3378, %v3381
    %v3384 = vmul.f32 %v3364, %v3024
    %v3385 = vadd.f32 %v3383, %v3384
    %3387 = vrot.lane.b32.xlu0 %v3385, 96
    %v3388 = vpop.permute.xlu0 %3387
    %v3389 = vsel %vm178, %v3388, 0
    %3391 = vmatprep.subr.mxu0 0.0
    %3392 = vmatpush1.msra.mxu0 0.0
    %3393 = vmatprep.subr.mxu0 0.0
    %3394 = vmatpush1.msra.mxu0 0.0
    %3395 = vmatprep.subr.mxu0 0.0
    %3396 = vmatpush1.msra.mxu0 0.0
    %3397 = vmatprep.subr.mxu0 0.0
    %3398 = vmatpush1.msra.mxu0 0.0
    %3399 = vmatprep.subr.mxu0 0.0
    %3400 = vmatpush1.msra.mxu0 0.0
    %3401 = vmatprep.subr.mxu0 0.0
    %3402 = vmatpush1.msra.mxu0 0.0
    %3403 = vmatprep.subr.mxu0 0.0
    %3404 = vmatpush1.msra.mxu0 0.0
    %3405 = vmatprep.subr.mxu0 0.0
    %3406 = vmatpush1.msra.mxu0 0.0
    %3407 = vmatprep.subr.mxu0 0.0
    %3408 = vmatpush1.msra.mxu0 0.0
    %3409 = vmatprep.subr.mxu0 0.0
    %3410 = vmatpush1.msra.mxu0 0.0
    %3411 = vmatprep.subr.mxu0 0.0
    %3412 = vmatpush1.msra.mxu0 0.0
    %3413 = vmatprep.subr.mxu0 0.0
    %3414 = vmatpush1.msra.mxu0 0.0
    %3415 = vmatprep.subr.mxu0 0.0
    %3416 = vmatpush1.msra.mxu0 %v1667
    %3417 = vmatprep.subr.mxu0 0.0
    %3418 = vmatpush1.msra.mxu0 %v1666
    %3419 = vmatprep.subr.mxu0 0.0
    %3420 = vmatpush1.msra.mxu0 %v1665
    %3421 = vmatprep.subr.mxu0 0.0
    %3422 = vmatpush1.msra.mxu0 %v1664
    %3423 = vmatprep.subr.mxu0 0.0
    %3424 = vmatpush2.msra.mxu0 0.0
    %3425 = vmatprep.subr.mxu0 0.0
    %3426 = vmatpush2.msra.mxu0 0.0
    %3427 = vmatprep.subr.mxu0 0.0
    %3428 = vmatpush2.msra.mxu0 0.0
    %3429 = vmatprep.subr.mxu0 0.0
    %3430 = vmatpush2.msra.mxu0 0.0
    %3431 = vmatprep.subr.mxu0 0.0
    %3432 = vmatpush2.msra.mxu0 0.0
    %3433 = vmatprep.subr.mxu0 0.0
    %3434 = vmatpush2.msra.mxu0 0.0
    %3435 = vmatprep.subr.mxu0 0.0
    %3436 = vmatpush2.msra.mxu0 0.0
    %3437 = vmatprep.subr.mxu0 0.0
    %3438 = vmatpush2.msra.mxu0 0.0
    %3439 = vmatprep.subr.mxu0 0.0
    %3440 = vmatpush2.msra.mxu0 0.0
    %3441 = vmatprep.subr.mxu0 0.0
    %3442 = vmatpush2.msra.mxu0 0.0
    %3443 = vmatprep.subr.mxu0 0.0
    %3444 = vmatpush2.msra.mxu0 0.0
    %3445 = vmatprep.subr.mxu0 0.0
    %3446 = vmatpush2.msra.mxu0 0.0
    %3447 = vmatprep.subr.mxu0 0.0
    %3448 = vmatpush2.msra.mxu0 0.0
    %3449 = vmatprep.subr.mxu0 0.0
    %3450 = vmatpush2.msra.mxu0 0.0
    %3451 = vmatprep.subr.mxu0 0.0
    %3452 = vmatpush2.msra.mxu0 0.0
    %3453 = vmatprep.subr.mxu0 0.0
    %3454 = vmatpush2.msra.mxu0 0.0
    %3455 = vmatprep.mubr.f32.mxu0 0.0
    %3456 = vmatmul.mubr.f32.gmra.mxu0 %v3389
    %v3457 = vpop.f32.mrf.mxu0
    %v3458 = vadd.f32 %v1939, %v3457
    %v3459 = vpop.f32.mrf.mxu0
    %3460 = vdwg.mxu0
    %v3461 = vsel %vm2016, %v3458, -inf
    %3462 = vmax.xlane.f32.xlu0 %v3461
    %v3463 = vpop.xlane.xlu0 %3462
    %vm3464 = vweird.f32 %v3463
    %vm3465 = vmxor %vm3464, 1
    %v3466 = vsel %vm3465, %v3463, 0.0
    %v3467 = vsub.f32 %v3458, %v3466
    %v3468 = vmul.f32 %v3467, 1.442695
    %v3469 = vpow.pop %v3468
    %v3470 = vsel %vm2016, %v3469, 0.0
    %3471 = vadd.xlane.f32.xlu0 %v3470
    %v3472 = vpop.xlane.xlu0 %3471
    %v3473 = vand.u32 2147483647, %v3472
    %v3474 = vlog2.pop %v3473
    %v3475 = vmul.f32 %v3474, 0.6931472
    %v3476 = vadd.f32 %v3475, %v3466
    %v3477 = vsub.f32 %v3458, %v3476
    %v3478 = vsel %vm2016, %v3477, -inf
    %3479 = vmax.xlane.f32.xlu0 %v3478
    %v3480 = vpop.xlane.xlu0 %3479
    %vm3481 = vcmp.eq.f32.partialorder %v3477, %v3480
    %v3482 = vsel %vm3481, %v1670, 32
    %v3483 = vsel %vm2016, %v3482, 2147483647
    %v3484 = vand.u32 %v3483, 65535
    %v3485 = vshra.s32 %v3483, 16
    %v3486 = vcvt.s32.f32 %v3484
    %v3487 = vcvt.s32.f32 %v3485
    %3488 = vmin.xlane.f32.xlu0 %v3487
    %v3489 = vpop.xlane.xlu0 %3488
    %vm3490 = vcmp.eq.f32.partialorder %v3487, %v3489
    %v3491 = vsel %vm3490, %v3486, inf
    %3492 = vmin.xlane.f32.xlu0 %v3491
    %v3493 = vpop.xlane.xlu0 %3492
    %v3494 = vcvt.f32.s32 %v3493
    %v3495 = vcvt.f32.s32 %v3489
    %v3496 = vshll.u32 %v3495, 16
    %v3497 = vadd.s32 %v3496, %v3494
    %vm3498 = vcmp.eq.s32.totalorder %v1670, %v3497
    %v3499 = vsel %vm3498, 1, 0
    %v3500 = vcvt.s32.f32 %v3499
    %v3502 = vsel %vm178, %v3500, 0
    %3504 = vmatprep.subr.mxu0 0.0
    %3505 = vmatpush1.msra.mxu0 0.0
    %3506 = vmatprep.subr.mxu0 0.0
    %3507 = vmatpush1.msra.mxu0 0.0
    %3508 = vmatprep.subr.mxu0 0.0
    %3509 = vmatpush1.msra.mxu0 0.0
    %3510 = vmatprep.subr.mxu0 0.0
    %3511 = vmatpush1.msra.mxu0 0.0
    %3512 = vmatprep.subr.mxu0 0.0
    %3513 = vmatpush1.msra.mxu0 0.0
    %3514 = vmatprep.subr.mxu0 0.0
    %3515 = vmatpush1.msra.mxu0 0.0
    %3516 = vmatprep.subr.mxu0 0.0
    %3517 = vmatpush1.msra.mxu0 0.0
    %3518 = vmatprep.subr.mxu0 0.0
    %3519 = vmatpush1.msra.mxu0 0.0
    %3520 = vmatprep.subr.mxu0 0.0
    %3521 = vmatpush1.msra.mxu0 0.0
    %3522 = vmatprep.subr.mxu0 0.0
    %3523 = vmatpush1.msra.mxu0 0.0
    %3524 = vmatprep.subr.mxu0 0.0
    %3525 = vmatpush1.msra.mxu0 0.0
    %3526 = vmatprep.subr.mxu0 0.0
    %3527 = vmatpush1.msra.mxu0 0.0
    %3528 = vmatprep.subr.mxu0 0.0
    %3529 = vmatpush1.msra.mxu0 %v1654
    %3530 = vmatprep.subr.mxu0 0.0
    %3531 = vmatpush1.msra.mxu0 %v1653
    %3532 = vmatprep.subr.mxu0 0.0
    %3533 = vmatpush1.msra.mxu0 %v1652
    %3534 = vmatprep.subr.mxu0 0.0
    %3535 = vmatpush1.msra.mxu0 %v1651
    %3536 = vmatprep.subr.mxu0 0.0
    %3537 = vmatpush2.msra.mxu0 0.0
    %3538 = vmatprep.subr.mxu0 0.0
    %3539 = vmatpush2.msra.mxu0 0.0
    %3540 = vmatprep.subr.mxu0 0.0
    %3541 = vmatpush2.msra.mxu0 0.0
    %3542 = vmatprep.subr.mxu0 0.0
    %3543 = vmatpush2.msra.mxu0 0.0
    %3544 = vmatprep.subr.mxu0 0.0
    %3545 = vmatpush2.msra.mxu0 0.0
    %3546 = vmatprep.subr.mxu0 0.0
    %3547 = vmatpush2.msra.mxu0 0.0
    %3548 = vmatprep.subr.mxu0 0.0
    %3549 = vmatpush2.msra.mxu0 0.0
    %3550 = vmatprep.subr.mxu0 0.0
    %3551 = vmatpush2.msra.mxu0 0.0
    %3552 = vmatprep.subr.mxu0 0.0
    %3553 = vmatpush2.msra.mxu0 0.0
    %3554 = vmatprep.subr.mxu0 0.0
    %3555 = vmatpush2.msra.mxu0 0.0
    %3556 = vmatprep.subr.mxu0 0.0
    %3557 = vmatpush2.msra.mxu0 0.0
    %3558 = vmatprep.subr.mxu0 0.0
    %3559 = vmatpush2.msra.mxu0 0.0
    %3560 = vmatprep.subr.mxu0 0.0
    %3561 = vmatpush2.msra.mxu0 0.0
    %3562 = vmatprep.subr.mxu0 0.0
    %3563 = vmatpush2.msra.mxu0 0.0
    %3564 = vmatprep.subr.mxu0 0.0
    %3565 = vmatpush2.msra.mxu0 0.0
    %3566 = vmatprep.subr.mxu0 0.0
    %3567 = vmatpush2.msra.mxu0 0.0
    %3568 = vmatprep.mubr.f32.mxu0 0.0
    %3569 = vmatmul.mubr.f32.gmra.mxu0 %v3502
    %v3570 = vpop.f32.mrf.mxu0
    %v3571 = vadd.f32 0.0, %v3570
    %v3572 = vpop.f32.mrf.mxu0
    %3573 = vdwg.mxu0
    %v3574 = vmax.f32 %v3571, 0.0
    %v3576 = vsel %vm178, %v3574, 0
    %3578 = vmatprep.subr.mxu0 0.0
    %3579 = vmatpush1.msra.mxu0 0.0
    %3580 = vmatprep.subr.mxu0 0.0
    %3581 = vmatpush1.msra.mxu0 0.0
    %3582 = vmatprep.subr.mxu0 0.0
    %3583 = vmatpush1.msra.mxu0 0.0
    %3584 = vmatprep.subr.mxu0 0.0
    %3585 = vmatpush1.msra.mxu0 0.0
    %3586 = vmatprep.subr.mxu0 0.0
    %3587 = vmatpush1.msra.mxu0 0.0
    %3588 = vmatprep.subr.mxu0 0.0
    %3589 = vmatpush1.msra.mxu0 0.0
    %3590 = vmatprep.subr.mxu0 0.0
    %3591 = vmatpush1.msra.mxu0 0.0
    %3592 = vmatprep.subr.mxu0 0.0
    %3593 = vmatpush1.msra.mxu0 0.0
    %3594 = vmatprep.subr.mxu0 0.0
    %3595 = vmatpush1.msra.mxu0 0.0
    %3596 = vmatprep.subr.mxu0 0.0
    %3597 = vmatpush1.msra.mxu0 0.0
    %3598 = vmatprep.subr.mxu0 0.0
    %3599 = vmatpush1.msra.mxu0 0.0
    %3600 = vmatprep.subr.mxu0 0.0
    %3601 = vmatpush1.msra.mxu0 0.0
    %3602 = vmatprep.subr.mxu0 0.0
    %3603 = vmatpush1.msra.mxu0 %v1658
    %3604 = vmatprep.subr.mxu0 0.0
    %3605 = vmatpush1.msra.mxu0 %v1657
    %3606 = vmatprep.subr.mxu0 0.0
    %3607 = vmatpush1.msra.mxu0 %v1656
    %3608 = vmatprep.subr.mxu0 0.0
    %3609 = vmatpush1.msra.mxu0 %v1655
    %3610 = vmatprep.subr.mxu0 0.0
    %3611 = vmatpush2.msra.mxu0 0.0
    %3612 = vmatprep.subr.mxu0 0.0
    %3613 = vmatpush2.msra.mxu0 0.0
    %3614 = vmatprep.subr.mxu0 0.0
    %3615 = vmatpush2.msra.mxu0 0.0
    %3616 = vmatprep.subr.mxu0 0.0
    %3617 = vmatpush2.msra.mxu0 0.0
    %3618 = vmatprep.subr.mxu0 0.0
    %3619 = vmatpush2.msra.mxu0 0.0
    %3620 = vmatprep.subr.mxu0 0.0
    %3621 = vmatpush2.msra.mxu0 0.0
    %3622 = vmatprep.subr.mxu0 0.0
    %3623 = vmatpush2.msra.mxu0 0.0
    %3624 = vmatprep.subr.mxu0 0.0
    %3625 = vmatpush2.msra.mxu0 0.0
    %3626 = vmatprep.subr.mxu0 0.0
    %3627 = vmatpush2.msra.mxu0 0.0
    %3628 = vmatprep.subr.mxu0 0.0
    %3629 = vmatpush2.msra.mxu0 0.0
    %3630 = vmatprep.subr.mxu0 0.0
    %3631 = vmatpush2.msra.mxu0 0.0
    %3632 = vmatprep.subr.mxu0 0.0
    %3633 = vmatpush2.msra.mxu0 0.0
    %3634 = vmatprep.subr.mxu0 0.0
    %3635 = vmatpush2.msra.mxu0 0.0
    %3636 = vmatprep.subr.mxu0 0.0
    %3637 = vmatpush2.msra.mxu0 0.0
    %3638 = vmatprep.subr.mxu0 0.0
    %3639 = vmatpush2.msra.mxu0 0.0
    %3640 = vmatprep.subr.mxu0 0.0
    %3641 = vmatpush2.msra.mxu0 0.0
    %3642 = vmatprep.mubr.f32.mxu0 0.0
    %3643 = vmatmul.mubr.f32.gmra.mxu0 %v3576
    %v3644 = vpop.f32.mrf.mxu0
    %v3645 = vadd.f32 0.0, %v3644
    %v3646 = vpop.f32.mrf.mxu0
    %3647 = vdwg.mxu0
    %3648 = vmatprep.subr.mxu0 0.0
    %3649 = vmatpush1.msra.mxu0 0.0
    %3650 = vmatprep.subr.mxu0 0.0
    %3651 = vmatpush1.msra.mxu0 0.0
    %3652 = vmatprep.subr.mxu0 0.0
    %3653 = vmatpush1.msra.mxu0 0.0
    %3654 = vmatprep.subr.mxu0 0.0
    %3655 = vmatpush1.msra.mxu0 0.0
    %3656 = vmatprep.subr.mxu0 0.0
    %3657 = vmatpush1.msra.mxu0 0.0
    %3658 = vmatprep.subr.mxu0 0.0
    %3659 = vmatpush1.msra.mxu0 0.0
    %3660 = vmatprep.subr.mxu0 0.0
    %3661 = vmatpush1.msra.mxu0 0.0
    %3662 = vmatprep.subr.mxu0 0.0
    %3663 = vmatpush1.msra.mxu0 0.0
    %3664 = vmatprep.subr.mxu0 0.0
    %3665 = vmatpush1.msra.mxu0 0.0
    %3666 = vmatprep.subr.mxu0 0.0
    %3667 = vmatpush1.msra.mxu0 0.0
    %3668 = vmatprep.subr.mxu0 0.0
    %3669 = vmatpush1.msra.mxu0 0.0
    %3670 = vmatprep.subr.mxu0 0.0
    %3671 = vmatpush1.msra.mxu0 0.0
    %3672 = vmatprep.subr.mxu0 0.0
    %3673 = vmatpush1.msra.mxu0 %v1662
    %3674 = vmatprep.subr.mxu0 0.0
    %3675 = vmatpush1.msra.mxu0 %v1661
    %3676 = vmatprep.subr.mxu0 0.0
    %3677 = vmatpush1.msra.mxu0 %v1660
    %3678 = vmatprep.subr.mxu0 0.0
    %3679 = vmatpush1.msra.mxu0 %v1659
    %3680 = vmatprep.subr.mxu0 0.0
    %3681 = vmatpush2.msra.mxu0 0.0
    %3682 = vmatprep.subr.mxu0 0.0
    %3683 = vmatpush2.msra.mxu0 0.0
    %3684 = vmatprep.subr.mxu0 0.0
    %3685 = vmatpush2.msra.mxu0 0.0
    %3686 = vmatprep.subr.mxu0 0.0
    %3687 = vmatpush2.msra.mxu0 0.0
    %3688 = vmatprep.subr.mxu0 0.0
    %3689 = vmatpush2.msra.mxu0 0.0
    %3690 = vmatprep.subr.mxu0 0.0
    %3691 = vmatpush2.msra.mxu0 0.0
    %3692 = vmatprep.subr.mxu0 0.0
    %3693 = vmatpush2.msra.mxu0 0.0
    %3694 = vmatprep.subr.mxu0 0.0
    %3695 = vmatpush2.msra.mxu0 0.0
    %3696 = vmatprep.subr.mxu0 0.0
    %3697 = vmatpush2.msra.mxu0 0.0
    %3698 = vmatprep.subr.mxu0 0.0
    %3699 = vmatpush2.msra.mxu0 0.0
    %3700 = vmatprep.subr.mxu0 0.0
    %3701 = vmatpush2.msra.mxu0 0.0
    %3702 = vmatprep.subr.mxu0 0.0
    %3703 = vmatpush2.msra.mxu0 0.0
    %3704 = vmatprep.subr.mxu0 0.0
    %3705 = vmatpush2.msra.mxu0 0.0
    %3706 = vmatprep.subr.mxu0 0.0
    %3707 = vmatpush2.msra.mxu0 0.0
    %3708 = vmatprep.subr.mxu0 0.0
    %3709 = vmatpush2.msra.mxu0 0.0
    %3710 = vmatprep.subr.mxu0 0.0
    %3711 = vmatpush2.msra.mxu0 0.0
    %3712 = vmatprep.mubr.f32.mxu0 0.0
    %3713 = vmatmul.mubr.f32.gmra.mxu0 %v3389
    %v3714 = vpop.f32.mrf.mxu0
    %v3715 = vadd.f32 0.0, %v3714
    %v3716 = vpop.f32.mrf.mxu0
    %3717 = vdwg.mxu0
    %v3718 = vadd.f32 %v3645, %v3715
    %v3719 = vadd.f32 %v3718, %v1899
    %v3720 = vxor.u32 %v3719, 2147483648
    %v3721 = vmul.f32 %v3720, 1.442695
    %v3722 = vpow.pop %v3721
    %v3723 = vadd.f32 %v3722, 1.0
    %v3724 = vrcp.pop %v3723
    %v3725 = vmul.f32 1.0, %v3724
    %v3726 = vadd.f32 %v3645, %v1899
    %v3727 = vadd.f32 %v3715, %v1910
    %3729 = vrot.lane.b32.xlu0 %v3727, 64
    %v3730 = vpop.permute.xlu0 %3729
    %v3732 = vmul.f32 %v3725, %v3730
    %3734 = vrot.lane.b32.xlu0 %v3732, 64
    %v3735 = vpop.permute.xlu0 %3734
    %v3737 = vadd.f32 %v3726, %v3735
    %v3738 = vtanh.pop %v3737
    %v3739 = vsub.f32 1.0, %v3725
    %3741 = vrot.lane.b32.xlu0 %v3738, 96
    %v3742 = vpop.permute.xlu0 %3741
    %v3744 = vmul.f32 %v3739, %v3742
    %v3745 = vmul.f32 %v3725, %v3385
    %v3746 = vadd.f32 %v3744, %v3745
    %3748 = vrot.lane.b32.xlu0 %v3746, 96
    %v3749 = vpop.permute.xlu0 %3748
    %v3750 = vsel %vm178, %v3749, 0
    %3752 = vmatprep.subr.mxu0 0.0
    %3753 = vmatpush1.msra.mxu0 0.0
    %3754 = vmatprep.subr.mxu0 0.0
    %3755 = vmatpush1.msra.mxu0 0.0
    %3756 = vmatprep.subr.mxu0 0.0
    %3757 = vmatpush1.msra.mxu0 0.0
    %3758 = vmatprep.subr.mxu0 0.0
    %3759 = vmatpush1.msra.mxu0 0.0
    %3760 = vmatprep.subr.mxu0 0.0
    %3761 = vmatpush1.msra.mxu0 0.0
    %3762 = vmatprep.subr.mxu0 0.0
    %3763 = vmatpush1.msra.mxu0 0.0
    %3764 = vmatprep.subr.mxu0 0.0
    %3765 = vmatpush1.msra.mxu0 0.0
    %3766 = vmatprep.subr.mxu0 0.0
    %3767 = vmatpush1.msra.mxu0 0.0
    %3768 = vmatprep.subr.mxu0 0.0
    %3769 = vmatpush1.msra.mxu0 0.0
    %3770 = vmatprep.subr.mxu0 0.0
    %3771 = vmatpush1.msra.mxu0 0.0
    %3772 = vmatprep.subr.mxu0 0.0
    %3773 = vmatpush1.msra.mxu0 0.0
    %3774 = vmatprep.subr.mxu0 0.0
    %3775 = vmatpush1.msra.mxu0 0.0
    %3776 = vmatprep.subr.mxu0 0.0
    %3777 = vmatpush1.msra.mxu0 %v1667
    %3778 = vmatprep.subr.mxu0 0.0
    %3779 = vmatpush1.msra.mxu0 %v1666
    %3780 = vmatprep.subr.mxu0 0.0
    %3781 = vmatpush1.msra.mxu0 %v1665
    %3782 = vmatprep.subr.mxu0 0.0
    %3783 = vmatpush1.msra.mxu0 %v1664
    %3784 = vmatprep.subr.mxu0 0.0
    %3785 = vmatpush2.msra.mxu0 0.0
    %3786 = vmatprep.subr.mxu0 0.0
    %3787 = vmatpush2.msra.mxu0 0.0
    %3788 = vmatprep.subr.mxu0 0.0
    %3789 = vmatpush2.msra.mxu0 0.0
    %3790 = vmatprep.subr.mxu0 0.0
    %3791 = vmatpush2.msra.mxu0 0.0
    %3792 = vmatprep.subr.mxu0 0.0
    %3793 = vmatpush2.msra.mxu0 0.0
    %3794 = vmatprep.subr.mxu0 0.0
    %3795 = vmatpush2.msra.mxu0 0.0
    %3796 = vmatprep.subr.mxu0 0.0
    %3797 = vmatpush2.msra.mxu0 0.0
    %3798 = vmatprep.subr.mxu0 0.0
    %3799 = vmatpush2.msra.mxu0 0.0
    %3800 = vmatprep.subr.mxu0 0.0
    %3801 = vmatpush2.msra.mxu0 0.0
    %3802 = vmatprep.subr.mxu0 0.0
    %3803 = vmatpush2.msra.mxu0 0.0
    %3804 = vmatprep.subr.mxu0 0.0
    %3805 = vmatpush2.msra.mxu0 0.0
    %3806 = vmatprep.subr.mxu0 0.0
    %3807 = vmatpush2.msra.mxu0 0.0
    %3808 = vmatprep.subr.mxu0 0.0
    %3809 = vmatpush2.msra.mxu0 0.0
    %3810 = vmatprep.subr.mxu0 0.0
    %3811 = vmatpush2.msra.mxu0 0.0
    %3812 = vmatprep.subr.mxu0 0.0
    %3813 = vmatpush2.msra.mxu0 0.0
    %3814 = vmatprep.subr.mxu0 0.0
    %3815 = vmatpush2.msra.mxu0 0.0
    %3816 = vmatprep.mubr.f32.mxu0 0.0
    %3817 = vmatmul.mubr.f32.gmra.mxu0 %v3750
    %v3818 = vpop.f32.mrf.mxu0
    %v3819 = vadd.f32 %v1939, %v3818
    %v3820 = vpop.f32.mrf.mxu0
    %3821 = vdwg.mxu0
    %v3822 = vsel %vm2016, %v3819, -inf
    %3823 = vmax.xlane.f32.xlu0 %v3822
    %v3824 = vpop.xlane.xlu0 %3823
    %vm3825 = vweird.f32 %v3824
    %vm3826 = vmxor %vm3825, 1
    %v3827 = vsel %vm3826, %v3824, 0.0
    %v3828 = vsub.f32 %v3819, %v3827
    %v3829 = vmul.f32 %v3828, 1.442695
    %v3830 = vpow.pop %v3829
    %v3831 = vsel %vm2016, %v3830, 0.0
    %3832 = vadd.xlane.f32.xlu0 %v3831
    %v3833 = vpop.xlane.xlu0 %3832
    %v3834 = vand.u32 2147483647, %v3833
    %v3835 = vlog2.pop %v3834
    %v3836 = vmul.f32 %v3835, 0.6931472
    %v3837 = vadd.f32 %v3836, %v3827
    %v3838 = vsub.f32 %v3819, %v3837
    %v3839 = vsel %vm2016, %v3838, -inf
    %3840 = vmax.xlane.f32.xlu0 %v3839
    %v3841 = vpop.xlane.xlu0 %3840
    %vm3842 = vcmp.eq.f32.partialorder %v3838, %v3841
    %v3843 = vsel %vm3842, %v1670, 32
    %v3844 = vsel %vm2016, %v3843, 2147483647
    %v3845 = vand.u32 %v3844, 65535
    %v3846 = vshra.s32 %v3844, 16
    %v3847 = vcvt.s32.f32 %v3845
    %v3848 = vcvt.s32.f32 %v3846
    %3849 = vmin.xlane.f32.xlu0 %v3848
    %v3850 = vpop.xlane.xlu0 %3849
    %vm3851 = vcmp.eq.f32.partialorder %v3848, %v3850
    %v3852 = vsel %vm3851, %v3847, inf
    %3853 = vmin.xlane.f32.xlu0 %v3852
    %v3854 = vpop.xlane.xlu0 %3853
    %v3855 = vcvt.f32.s32 %v3854
    %v3856 = vcvt.f32.s32 %v3850
    %v3857 = vshll.u32 %v3856, 16
    %v3858 = vadd.s32 %v3857, %v3855
    %vm3859 = vcmp.eq.s32.totalorder %v1670, %v3858
    %v3860 = vsel %vm3859, 1, 0
    %v3861 = vcvt.s32.f32 %v3860
    %v3863 = vsel %vm178, %v3861, 0
    %3865 = vmatprep.subr.mxu0 0.0
    %3866 = vmatpush1.msra.mxu0 0.0
    %3867 = vmatprep.subr.mxu0 0.0
    %3868 = vmatpush1.msra.mxu0 0.0
    %3869 = vmatprep.subr.mxu0 0.0
    %3870 = vmatpush1.msra.mxu0 0.0
    %3871 = vmatprep.subr.mxu0 0.0
    %3872 = vmatpush1.msra.mxu0 0.0
    %3873 = vmatprep.subr.mxu0 0.0
    %3874 = vmatpush1.msra.mxu0 0.0
    %3875 = vmatprep.subr.mxu0 0.0
    %3876 = vmatpush1.msra.mxu0 0.0
    %3877 = vmatprep.subr.mxu0 0.0
    %3878 = vmatpush1.msra.mxu0 0.0
    %3879 = vmatprep.subr.mxu0 0.0
    %3880 = vmatpush1.msra.mxu0 0.0
    %3881 = vmatprep.subr.mxu0 0.0
    %3882 = vmatpush1.msra.mxu0 0.0
    %3883 = vmatprep.subr.mxu0 0.0
    %3884 = vmatpush1.msra.mxu0 0.0
    %3885 = vmatprep.subr.mxu0 0.0
    %3886 = vmatpush1.msra.mxu0 0.0
    %3887 = vmatprep.subr.mxu0 0.0
    %3888 = vmatpush1.msra.mxu0 0.0
    %3889 = vmatprep.subr.mxu0 0.0
    %3890 = vmatpush1.msra.mxu0 %v1654
    %3891 = vmatprep.subr.mxu0 0.0
    %3892 = vmatpush1.msra.mxu0 %v1653
    %3893 = vmatprep.subr.mxu0 0.0
    %3894 = vmatpush1.msra.mxu0 %v1652
    %3895 = vmatprep.subr.mxu0 0.0
    %3896 = vmatpush1.msra.mxu0 %v1651
    %3897 = vmatprep.subr.mxu0 0.0
    %3898 = vmatpush2.msra.mxu0 0.0
    %3899 = vmatprep.subr.mxu0 0.0
    %3900 = vmatpush2.msra.mxu0 0.0
    %3901 = vmatprep.subr.mxu0 0.0
    %3902 = vmatpush2.msra.mxu0 0.0
    %3903 = vmatprep.subr.mxu0 0.0
    %3904 = vmatpush2.msra.mxu0 0.0
    %3905 = vmatprep.subr.mxu0 0.0
    %3906 = vmatpush2.msra.mxu0 0.0
    %3907 = vmatprep.subr.mxu0 0.0
    %3908 = vmatpush2.msra.mxu0 0.0
    %3909 = vmatprep.subr.mxu0 0.0
    %3910 = vmatpush2.msra.mxu0 0.0
    %3911 = vmatprep.subr.mxu0 0.0
    %3912 = vmatpush2.msra.mxu0 0.0
    %3913 = vmatprep.subr.mxu0 0.0
    %3914 = vmatpush2.msra.mxu0 0.0
    %3915 = vmatprep.subr.mxu0 0.0
    %3916 = vmatpush2.msra.mxu0 0.0
    %3917 = vmatprep.subr.mxu0 0.0
    %3918 = vmatpush2.msra.mxu0 0.0
    %3919 = vmatprep.subr.mxu0 0.0
    %3920 = vmatpush2.msra.mxu0 0.0
    %3921 = vmatprep.subr.mxu0 0.0
    %3922 = vmatpush2.msra.mxu0 0.0
    %3923 = vmatprep.subr.mxu0 0.0
    %3924 = vmatpush2.msra.mxu0 0.0
    %3925 = vmatprep.subr.mxu0 0.0
    %3926 = vmatpush2.msra.mxu0 0.0
    %3927 = vmatprep.subr.mxu0 0.0
    %3928 = vmatpush2.msra.mxu0 0.0
    %3929 = vmatprep.mubr.f32.mxu0 0.0
    %3930 = vmatmul.mubr.f32.gmra.mxu0 %v3863
    %v3931 = vpop.f32.mrf.mxu0
    %v3932 = vadd.f32 0.0, %v3931
    %v3933 = vpop.f32.mrf.mxu0
    %3934 = vdwg.mxu0
    %v3935 = vmax.f32 %v3932, 0.0
    %v3937 = vsel %vm178, %v3935, 0
    %3939 = vmatprep.subr.mxu0 0.0
    %3940 = vmatpush1.msra.mxu0 0.0
    %3941 = vmatprep.subr.mxu0 0.0
    %3942 = vmatpush1.msra.mxu0 0.0
    %3943 = vmatprep.subr.mxu0 0.0
    %3944 = vmatpush1.msra.mxu0 0.0
    %3945 = vmatprep.subr.mxu0 0.0
    %3946 = vmatpush1.msra.mxu0 0.0
    %3947 = vmatprep.subr.mxu0 0.0
    %3948 = vmatpush1.msra.mxu0 0.0
    %3949 = vmatprep.subr.mxu0 0.0
    %3950 = vmatpush1.msra.mxu0 0.0
    %3951 = vmatprep.subr.mxu0 0.0
    %3952 = vmatpush1.msra.mxu0 0.0
    %3953 = vmatprep.subr.mxu0 0.0
    %3954 = vmatpush1.msra.mxu0 0.0
    %3955 = vmatprep.subr.mxu0 0.0
    %3956 = vmatpush1.msra.mxu0 0.0
    %3957 = vmatprep.subr.mxu0 0.0
    %3958 = vmatpush1.msra.mxu0 0.0
    %3959 = vmatprep.subr.mxu0 0.0
    %3960 = vmatpush1.msra.mxu0 0.0
    %3961 = vmatprep.subr.mxu0 0.0
    %3962 = vmatpush1.msra.mxu0 0.0
    %3963 = vmatprep.subr.mxu0 0.0
    %3964 = vmatpush1.msra.mxu0 %v1658
    %3965 = vmatprep.subr.mxu0 0.0
    %3966 = vmatpush1.msra.mxu0 %v1657
    %3967 = vmatprep.subr.mxu0 0.0
    %3968 = vmatpush1.msra.mxu0 %v1656
    %3969 = vmatprep.subr.mxu0 0.0
    %3970 = vmatpush1.msra.mxu0 %v1655
    %3971 = vmatprep.subr.mxu0 0.0
    %3972 = vmatpush2.msra.mxu0 0.0
    %3973 = vmatprep.subr.mxu0 0.0
    %3974 = vmatpush2.msra.mxu0 0.0
    %3975 = vmatprep.subr.mxu0 0.0
    %3976 = vmatpush2.msra.mxu0 0.0
    %3977 = vmatprep.subr.mxu0 0.0
    %3978 = vmatpush2.msra.mxu0 0.0
    %3979 = vmatprep.subr.mxu0 0.0
    %3980 = vmatpush2.msra.mxu0 0.0
    %3981 = vmatprep.subr.mxu0 0.0
    %3982 = vmatpush2.msra.mxu0 0.0
    %3983 = vmatprep.subr.mxu0 0.0
    %3984 = vmatpush2.msra.mxu0 0.0
    %3985 = vmatprep.subr.mxu0 0.0
    %3986 = vmatpush2.msra.mxu0 0.0
    %3987 = vmatprep.subr.mxu0 0.0
    %3988 = vmatpush2.msra.mxu0 0.0
    %3989 = vmatprep.subr.mxu0 0.0
    %3990 = vmatpush2.msra.mxu0 0.0
    %3991 = vmatprep.subr.mxu0 0.0
    %3992 = vmatpush2.msra.mxu0 0.0
    %3993 = vmatprep.subr.mxu0 0.0
    %3994 = vmatpush2.msra.mxu0 0.0
    %3995 = vmatprep.subr.mxu0 0.0
    %3996 = vmatpush2.msra.mxu0 0.0
    %3997 = vmatprep.subr.mxu0 0.0
    %3998 = vmatpush2.msra.mxu0 0.0
    %3999 = vmatprep.subr.mxu0 0.0
    %4000 = vmatpush2.msra.mxu0 0.0
    %4001 = vmatprep.subr.mxu0 0.0
    %4002 = vmatpush2.msra.mxu0 0.0
    %4003 = vmatprep.mubr.f32.mxu0 0.0
    %4004 = vmatmul.mubr.f32.gmra.mxu0 %v3937
    %v4005 = vpop.f32.mrf.mxu0
    %v4006 = vadd.f32 0.0, %v4005
    %v4007 = vpop.f32.mrf.mxu0
    %4008 = vdwg.mxu0
    %4009 = vmatprep.subr.mxu0 0.0
    %4010 = vmatpush1.msra.mxu0 0.0
    %4011 = vmatprep.subr.mxu0 0.0
    %4012 = vmatpush1.msra.mxu0 0.0
    %4013 = vmatprep.subr.mxu0 0.0
    %4014 = vmatpush1.msra.mxu0 0.0
    %4015 = vmatprep.subr.mxu0 0.0
    %4016 = vmatpush1.msra.mxu0 0.0
    %4017 = vmatprep.subr.mxu0 0.0
    %4018 = vmatpush1.msra.mxu0 0.0
    %4019 = vmatprep.subr.mxu0 0.0
    %4020 = vmatpush1.msra.mxu0 0.0
    %4021 = vmatprep.subr.mxu0 0.0
    %4022 = vmatpush1.msra.mxu0 0.0
    %4023 = vmatprep.subr.mxu0 0.0
    %4024 = vmatpush1.msra.mxu0 0.0
    %4025 = vmatprep.subr.mxu0 0.0
    %4026 = vmatpush1.msra.mxu0 0.0
    %4027 = vmatprep.subr.mxu0 0.0
    %4028 = vmatpush1.msra.mxu0 0.0
    %4029 = vmatprep.subr.mxu0 0.0
    %4030 = vmatpush1.msra.mxu0 0.0
    %4031 = vmatprep.subr.mxu0 0.0
    %4032 = vmatpush1.msra.mxu0 0.0
    %4033 = vmatprep.subr.mxu0 0.0
    %4034 = vmatpush1.msra.mxu0 %v1662
    %4035 = vmatprep.subr.mxu0 0.0
    %4036 = vmatpush1.msra.mxu0 %v1661
    %4037 = vmatprep.subr.mxu0 0.0
    %4038 = vmatpush1.msra.mxu0 %v1660
    %4039 = vmatprep.subr.mxu0 0.0
    %4040 = vmatpush1.msra.mxu0 %v1659
    %4041 = vmatprep.subr.mxu0 0.0
    %4042 = vmatpush2.msra.mxu0 0.0
    %4043 = vmatprep.subr.mxu0 0.0
    %4044 = vmatpush2.msra.mxu0 0.0
    %4045 = vmatprep.subr.mxu0 0.0
    %4046 = vmatpush2.msra.mxu0 0.0
    %4047 = vmatprep.subr.mxu0 0.0
    %4048 = vmatpush2.msra.mxu0 0.0
    %4049 = vmatprep.subr.mxu0 0.0
    %4050 = vmatpush2.msra.mxu0 0.0
    %4051 = vmatprep.subr.mxu0 0.0
    %4052 = vmatpush2.msra.mxu0 0.0
    %4053 = vmatprep.subr.mxu0 0.0
    %4054 = vmatpush2.msra.mxu0 0.0
    %4055 = vmatprep.subr.mxu0 0.0
    %4056 = vmatpush2.msra.mxu0 0.0
    %4057 = vmatprep.subr.mxu0 0.0
    %4058 = vmatpush2.msra.mxu0 0.0
    %4059 = vmatprep.subr.mxu0 0.0
    %4060 = vmatpush2.msra.mxu0 0.0
    %4061 = vmatprep.subr.mxu0 0.0
    %4062 = vmatpush2.msra.mxu0 0.0
    %4063 = vmatprep.subr.mxu0 0.0
    %4064 = vmatpush2.msra.mxu0 0.0
    %4065 = vmatprep.subr.mxu0 0.0
    %4066 = vmatpush2.msra.mxu0 0.0
    %4067 = vmatprep.subr.mxu0 0.0
    %4068 = vmatpush2.msra.mxu0 0.0
    %4069 = vmatprep.subr.mxu0 0.0
    %4070 = vmatpush2.msra.mxu0 0.0
    %4071 = vmatprep.subr.mxu0 0.0
    %4072 = vmatpush2.msra.mxu0 0.0
    %4073 = vmatprep.mubr.f32.mxu0 0.0
    %4074 = vmatmul.mubr.f32.gmra.mxu0 %v3750
    %v4075 = vpop.f32.mrf.mxu0
    %v4076 = vadd.f32 0.0, %v4075
    %v4077 = vpop.f32.mrf.mxu0
    %4078 = vdwg.mxu0
    %v4079 = vadd.f32 %v4006, %v4076
    %v4080 = vadd.f32 %v4079, %v1899
    %v4081 = vxor.u32 %v4080, 2147483648
    %v4082 = vmul.f32 %v4081, 1.442695
    %v4083 = vpow.pop %v4082
    %v4084 = vadd.f32 %v4083, 1.0
    %v4085 = vrcp.pop %v4084
    %v4086 = vmul.f32 1.0, %v4085
    %v4087 = vadd.f32 %v4006, %v1899
    %v4088 = vadd.f32 %v4076, %v1910
    %4090 = vrot.lane.b32.xlu0 %v4088, 64
    %v4091 = vpop.permute.xlu0 %4090
    %v4093 = vmul.f32 %v4086, %v4091
    %4095 = vrot.lane.b32.xlu0 %v4093, 64
    %v4096 = vpop.permute.xlu0 %4095
    %v4098 = vadd.f32 %v4087, %v4096
    %v4099 = vtanh.pop %v4098
    %v4100 = vsub.f32 1.0, %v4086
    %4102 = vrot.lane.b32.xlu0 %v4099, 96
    %v4103 = vpop.permute.xlu0 %4102
    %v4105 = vmul.f32 %v4100, %v4103
    %v4106 = vmul.f32 %v4086, %v3746
    %v4107 = vadd.f32 %v4105, %v4106
    %4109 = vrot.lane.b32.xlu0 %v4107, 96
    %v4110 = vpop.permute.xlu0 %4109
    %v4111 = vsel %vm178, %v4110, 0
    %4113 = vmatprep.subr.mxu0 0.0
    %4114 = vmatpush1.msra.mxu0 0.0
    %4115 = vmatprep.subr.mxu0 0.0
    %4116 = vmatpush1.msra.mxu0 0.0
    %4117 = vmatprep.subr.mxu0 0.0
    %4118 = vmatpush1.msra.mxu0 0.0
    %4119 = vmatprep.subr.mxu0 0.0
    %4120 = vmatpush1.msra.mxu0 0.0
    %4121 = vmatprep.subr.mxu0 0.0
    %4122 = vmatpush1.msra.mxu0 0.0
    %4123 = vmatprep.subr.mxu0 0.0
    %4124 = vmatpush1.msra.mxu0 0.0
    %4125 = vmatprep.subr.mxu0 0.0
    %4126 = vmatpush1.msra.mxu0 0.0
    %4127 = vmatprep.subr.mxu0 0.0
    %4128 = vmatpush1.msra.mxu0 0.0
    %4129 = vmatprep.subr.mxu0 0.0
    %4130 = vmatpush1.msra.mxu0 0.0
    %4131 = vmatprep.subr.mxu0 0.0
    %4132 = vmatpush1.msra.mxu0 0.0
    %4133 = vmatprep.subr.mxu0 0.0
    %4134 = vmatpush1.msra.mxu0 0.0
    %4135 = vmatprep.subr.mxu0 0.0
    %4136 = vmatpush1.msra.mxu0 0.0
    %4137 = vmatprep.subr.mxu0 0.0
    %4138 = vmatpush1.msra.mxu0 %v1667
    %4139 = vmatprep.subr.mxu0 0.0
    %4140 = vmatpush1.msra.mxu0 %v1666
    %4141 = vmatprep.subr.mxu0 0.0
    %4142 = vmatpush1.msra.mxu0 %v1665
    %4143 = vmatprep.subr.mxu0 0.0
    %4144 = vmatpush1.msra.mxu0 %v1664
    %4145 = vmatprep.subr.mxu0 0.0
    %4146 = vmatpush2.msra.mxu0 0.0
    %4147 = vmatprep.subr.mxu0 0.0
    %4148 = vmatpush2.msra.mxu0 0.0
    %4149 = vmatprep.subr.mxu0 0.0
    %4150 = vmatpush2.msra.mxu0 0.0
    %4151 = vmatprep.subr.mxu0 0.0
    %4152 = vmatpush2.msra.mxu0 0.0
    %4153 = vmatprep.subr.mxu0 0.0
    %4154 = vmatpush2.msra.mxu0 0.0
    %4155 = vmatprep.subr.mxu0 0.0
    %4156 = vmatpush2.msra.mxu0 0.0
    %4157 = vmatprep.subr.mxu0 0.0
    %4158 = vmatpush2.msra.mxu0 0.0
    %4159 = vmatprep.subr.mxu0 0.0
    %4160 = vmatpush2.msra.mxu0 0.0
    %4161 = vmatprep.subr.mxu0 0.0
    %4162 = vmatpush2.msra.mxu0 0.0
    %4163 = vmatprep.subr.mxu0 0.0
    %4164 = vmatpush2.msra.mxu0 0.0
    %4165 = vmatprep.subr.mxu0 0.0
    %4166 = vmatpush2.msra.mxu0 0.0
    %4167 = vmatprep.subr.mxu0 0.0
    %4168 = vmatpush2.msra.mxu0 0.0
    %4169 = vmatprep.subr.mxu0 0.0
    %4170 = vmatpush2.msra.mxu0 0.0
    %4171 = vmatprep.subr.mxu0 0.0
    %4172 = vmatpush2.msra.mxu0 0.0
    %4173 = vmatprep.subr.mxu0 0.0
    %4174 = vmatpush2.msra.mxu0 0.0
    %4175 = vmatprep.subr.mxu0 0.0
    %4176 = vmatpush2.msra.mxu0 0.0
    %4177 = vmatprep.mubr.f32.mxu0 0.0
    %4178 = vmatmul.mubr.f32.gmra.mxu0 %v4111
    %v4179 = vpop.f32.mrf.mxu0
    %v4180 = vadd.f32 %v1939, %v4179
    %v4181 = vpop.f32.mrf.mxu0
    %4182 = vdwg.mxu0
    %v4183 = vsel %vm2016, %v4180, -inf
    %4184 = vmax.xlane.f32.xlu0 %v4183
    %v4185 = vpop.xlane.xlu0 %4184
    %vm4186 = vweird.f32 %v4185
    %vm4187 = vmxor %vm4186, 1
    %v4188 = vsel %vm4187, %v4185, 0.0
    %v4189 = vsub.f32 %v4180, %v4188
    %v4190 = vmul.f32 %v4189, 1.442695
    %v4191 = vpow.pop %v4190
    %v4192 = vsel %vm2016, %v4191, 0.0
    %4193 = vadd.xlane.f32.xlu0 %v4192
    %v4194 = vpop.xlane.xlu0 %4193
    %v4195 = vand.u32 2147483647, %v4194
    %v4196 = vlog2.pop %v4195
    %v4197 = vmul.f32 %v4196, 0.6931472
    %v4198 = vadd.f32 %v4197, %v4188
    %v4199 = vsub.f32 %v4180, %v4198
    %v4200 = vsel %vm2016, %v4199, -inf
    %4201 = vmax.xlane.f32.xlu0 %v4200
    %v4202 = vpop.xlane.xlu0 %4201
    %vm4203 = vcmp.eq.f32.partialorder %v4199, %v4202
    %v4204 = vsel %vm4203, %v1670, 32
    %v4205 = vsel %vm2016, %v4204, 2147483647
    %v4206 = vand.u32 %v4205, 65535
    %v4207 = vshra.s32 %v4205, 16
    %v4208 = vcvt.s32.f32 %v4206
    %v4209 = vcvt.s32.f32 %v4207
    %4210 = vmin.xlane.f32.xlu0 %v4209
    %v4211 = vpop.xlane.xlu0 %4210
    %vm4212 = vcmp.eq.f32.partialorder %v4209, %v4211
    %v4213 = vsel %vm4212, %v4208, inf
    %4214 = vmin.xlane.f32.xlu0 %v4213
    %v4215 = vpop.xlane.xlu0 %4214
    %v4216 = vcvt.f32.s32 %v4215
    %v4217 = vcvt.f32.s32 %v4211
    %v4218 = vshll.u32 %v4217, 16
    %v4219 = vadd.s32 %v4218, %v4216
    %vm4220 = vcmp.eq.s32.totalorder %v1670, %v4219
    %v4221 = vsel %vm4220, 1, 0
    %v4222 = vcvt.s32.f32 %v4221
    %v4224 = vsel %vm178, %v4222, 0
    %4226 = vmatprep.subr.mxu0 0.0
    %4227 = vmatpush1.msra.mxu0 0.0
    %4228 = vmatprep.subr.mxu0 0.0
    %4229 = vmatpush1.msra.mxu0 0.0
    %4230 = vmatprep.subr.mxu0 0.0
    %4231 = vmatpush1.msra.mxu0 0.0
    %4232 = vmatprep.subr.mxu0 0.0
    %4233 = vmatpush1.msra.mxu0 0.0
    %4234 = vmatprep.subr.mxu0 0.0
    %4235 = vmatpush1.msra.mxu0 0.0
    %4236 = vmatprep.subr.mxu0 0.0
    %4237 = vmatpush1.msra.mxu0 0.0
    %4238 = vmatprep.subr.mxu0 0.0
    %4239 = vmatpush1.msra.mxu0 0.0
    %4240 = vmatprep.subr.mxu0 0.0
    %4241 = vmatpush1.msra.mxu0 0.0
    %4242 = vmatprep.subr.mxu0 0.0
    %4243 = vmatpush1.msra.mxu0 0.0
    %4244 = vmatprep.subr.mxu0 0.0
    %4245 = vmatpush1.msra.mxu0 0.0
    %4246 = vmatprep.subr.mxu0 0.0
    %4247 = vmatpush1.msra.mxu0 0.0
    %4248 = vmatprep.subr.mxu0 0.0
    %4249 = vmatpush1.msra.mxu0 0.0
    %4250 = vmatprep.subr.mxu0 0.0
    %4251 = vmatpush1.msra.mxu0 %v1654
    %4252 = vmatprep.subr.mxu0 0.0
    %4253 = vmatpush1.msra.mxu0 %v1653
    %4254 = vmatprep.subr.mxu0 0.0
    %4255 = vmatpush1.msra.mxu0 %v1652
    %4256 = vmatprep.subr.mxu0 0.0
    %4257 = vmatpush1.msra.mxu0 %v1651
    %4258 = vmatprep.subr.mxu0 0.0
    %4259 = vmatpush2.msra.mxu0 0.0
    %4260 = vmatprep.subr.mxu0 0.0
    %4261 = vmatpush2.msra.mxu0 0.0
    %4262 = vmatprep.subr.mxu0 0.0
    %4263 = vmatpush2.msra.mxu0 0.0
    %4264 = vmatprep.subr.mxu0 0.0
    %4265 = vmatpush2.msra.mxu0 0.0
    %4266 = vmatprep.subr.mxu0 0.0
    %4267 = vmatpush2.msra.mxu0 0.0
    %4268 = vmatprep.subr.mxu0 0.0
    %4269 = vmatpush2.msra.mxu0 0.0
    %4270 = vmatprep.subr.mxu0 0.0
    %4271 = vmatpush2.msra.mxu0 0.0
    %4272 = vmatprep.subr.mxu0 0.0
    %4273 = vmatpush2.msra.mxu0 0.0
    %4274 = vmatprep.subr.mxu0 0.0
    %4275 = vmatpush2.msra.mxu0 0.0
    %4276 = vmatprep.subr.mxu0 0.0
    %4277 = vmatpush2.msra.mxu0 0.0
    %4278 = vmatprep.subr.mxu0 0.0
    %4279 = vmatpush2.msra.mxu0 0.0
    %4280 = vmatprep.subr.mxu0 0.0
    %4281 = vmatpush2.msra.mxu0 0.0
    %4282 = vmatprep.subr.mxu0 0.0
    %4283 = vmatpush2.msra.mxu0 0.0
    %4284 = vmatprep.subr.mxu0 0.0
    %4285 = vmatpush2.msra.mxu0 0.0
    %4286 = vmatprep.subr.mxu0 0.0
    %4287 = vmatpush2.msra.mxu0 0.0
    %4288 = vmatprep.subr.mxu0 0.0
    %4289 = vmatpush2.msra.mxu0 0.0
    %4290 = vmatprep.mubr.f32.mxu0 0.0
    %4291 = vmatmul.mubr.f32.gmra.mxu0 %v4224
    %v4292 = vpop.f32.mrf.mxu0
    %v4293 = vadd.f32 0.0, %v4292
    %v4294 = vpop.f32.mrf.mxu0
    %4295 = vdwg.mxu0
    %v4296 = vmax.f32 %v4293, 0.0
    %v4298 = vsel %vm178, %v4296, 0
    %4300 = vmatprep.subr.mxu0 0.0
    %4301 = vmatpush1.msra.mxu0 0.0
    %4302 = vmatprep.subr.mxu0 0.0
    %4303 = vmatpush1.msra.mxu0 0.0
    %4304 = vmatprep.subr.mxu0 0.0
    %4305 = vmatpush1.msra.mxu0 0.0
    %4306 = vmatprep.subr.mxu0 0.0
    %4307 = vmatpush1.msra.mxu0 0.0
    %4308 = vmatprep.subr.mxu0 0.0
    %4309 = vmatpush1.msra.mxu0 0.0
    %4310 = vmatprep.subr.mxu0 0.0
    %4311 = vmatpush1.msra.mxu0 0.0
    %4312 = vmatprep.subr.mxu0 0.0
    %4313 = vmatpush1.msra.mxu0 0.0
    %4314 = vmatprep.subr.mxu0 0.0
    %4315 = vmatpush1.msra.mxu0 0.0
    %4316 = vmatprep.subr.mxu0 0.0
    %4317 = vmatpush1.msra.mxu0 0.0
    %4318 = vmatprep.subr.mxu0 0.0
    %4319 = vmatpush1.msra.mxu0 0.0
    %4320 = vmatprep.subr.mxu0 0.0
    %4321 = vmatpush1.msra.mxu0 0.0
    %4322 = vmatprep.subr.mxu0 0.0
    %4323 = vmatpush1.msra.mxu0 0.0
    %4324 = vmatprep.subr.mxu0 0.0
    %4325 = vmatpush1.msra.mxu0 %v1658
    %4326 = vmatprep.subr.mxu0 0.0
    %4327 = vmatpush1.msra.mxu0 %v1657
    %4328 = vmatprep.subr.mxu0 0.0
    %4329 = vmatpush1.msra.mxu0 %v1656
    %4330 = vmatprep.subr.mxu0 0.0
    %4331 = vmatpush1.msra.mxu0 %v1655
    %4332 = vmatprep.subr.mxu0 0.0
    %4333 = vmatpush2.msra.mxu0 0.0
    %4334 = vmatprep.subr.mxu0 0.0
    %4335 = vmatpush2.msra.mxu0 0.0
    %4336 = vmatprep.subr.mxu0 0.0
    %4337 = vmatpush2.msra.mxu0 0.0
    %4338 = vmatprep.subr.mxu0 0.0
    %4339 = vmatpush2.msra.mxu0 0.0
    %4340 = vmatprep.subr.mxu0 0.0
    %4341 = vmatpush2.msra.mxu0 0.0
    %4342 = vmatprep.subr.mxu0 0.0
    %4343 = vmatpush2.msra.mxu0 0.0
    %4344 = vmatprep.subr.mxu0 0.0
    %4345 = vmatpush2.msra.mxu0 0.0
    %4346 = vmatprep.subr.mxu0 0.0
    %4347 = vmatpush2.msra.mxu0 0.0
    %4348 = vmatprep.subr.mxu0 0.0
    %4349 = vmatpush2.msra.mxu0 0.0
    %4350 = vmatprep.subr.mxu0 0.0
    %4351 = vmatpush2.msra.mxu0 0.0
    %4352 = vmatprep.subr.mxu0 0.0
    %4353 = vmatpush2.msra.mxu0 0.0
    %4354 = vmatprep.subr.mxu0 0.0
    %4355 = vmatpush2.msra.mxu0 0.0
    %4356 = vmatprep.subr.mxu0 0.0
    %4357 = vmatpush2.msra.mxu0 0.0
    %4358 = vmatprep.subr.mxu0 0.0
    %4359 = vmatpush2.msra.mxu0 0.0
    %4360 = vmatprep.subr.mxu0 0.0
    %4361 = vmatpush2.msra.mxu0 0.0
    %4362 = vmatprep.subr.mxu0 0.0
    %4363 = vmatpush2.msra.mxu0 0.0
    %4364 = vmatprep.mubr.f32.mxu0 0.0
    %4365 = vmatmul.mubr.f32.gmra.mxu0 %v4298
    %v4366 = vpop.f32.mrf.mxu0
    %v4367 = vadd.f32 0.0, %v4366
    %v4368 = vpop.f32.mrf.mxu0
    %4369 = vdwg.mxu0
    %4370 = vmatprep.subr.mxu0 0.0
    %4371 = vmatpush1.msra.mxu0 0.0
    %4372 = vmatprep.subr.mxu0 0.0
    %4373 = vmatpush1.msra.mxu0 0.0
    %4374 = vmatprep.subr.mxu0 0.0
    %4375 = vmatpush1.msra.mxu0 0.0
    %4376 = vmatprep.subr.mxu0 0.0
    %4377 = vmatpush1.msra.mxu0 0.0
    %4378 = vmatprep.subr.mxu0 0.0
    %4379 = vmatpush1.msra.mxu0 0.0
    %4380 = vmatprep.subr.mxu0 0.0
    %4381 = vmatpush1.msra.mxu0 0.0
    %4382 = vmatprep.subr.mxu0 0.0
    %4383 = vmatpush1.msra.mxu0 0.0
    %4384 = vmatprep.subr.mxu0 0.0
    %4385 = vmatpush1.msra.mxu0 0.0
    %4386 = vmatprep.subr.mxu0 0.0
    %4387 = vmatpush1.msra.mxu0 0.0
    %4388 = vmatprep.subr.mxu0 0.0
    %4389 = vmatpush1.msra.mxu0 0.0
    %4390 = vmatprep.subr.mxu0 0.0
    %4391 = vmatpush1.msra.mxu0 0.0
    %4392 = vmatprep.subr.mxu0 0.0
    %4393 = vmatpush1.msra.mxu0 0.0
    %4394 = vmatprep.subr.mxu0 0.0
    %4395 = vmatpush1.msra.mxu0 %v1662
    %4396 = vmatprep.subr.mxu0 0.0
    %4397 = vmatpush1.msra.mxu0 %v1661
    %4398 = vmatprep.subr.mxu0 0.0
    %4399 = vmatpush1.msra.mxu0 %v1660
    %4400 = vmatprep.subr.mxu0 0.0
    %4401 = vmatpush1.msra.mxu0 %v1659
    %4402 = vmatprep.subr.mxu0 0.0
    %4403 = vmatpush2.msra.mxu0 0.0
    %4404 = vmatprep.subr.mxu0 0.0
    %4405 = vmatpush2.msra.mxu0 0.0
    %4406 = vmatprep.subr.mxu0 0.0
    %4407 = vmatpush2.msra.mxu0 0.0
    %4408 = vmatprep.subr.mxu0 0.0
    %4409 = vmatpush2.msra.mxu0 0.0
    %4410 = vmatprep.subr.mxu0 0.0
    %4411 = vmatpush2.msra.mxu0 0.0
    %4412 = vmatprep.subr.mxu0 0.0
    %4413 = vmatpush2.msra.mxu0 0.0
    %4414 = vmatprep.subr.mxu0 0.0
    %4415 = vmatpush2.msra.mxu0 0.0
    %4416 = vmatprep.subr.mxu0 0.0
    %4417 = vmatpush2.msra.mxu0 0.0
    %4418 = vmatprep.subr.mxu0 0.0
    %4419 = vmatpush2.msra.mxu0 0.0
    %4420 = vmatprep.subr.mxu0 0.0
    %4421 = vmatpush2.msra.mxu0 0.0
    %4422 = vmatprep.subr.mxu0 0.0
    %4423 = vmatpush2.msra.mxu0 0.0
    %4424 = vmatprep.subr.mxu0 0.0
    %4425 = vmatpush2.msra.mxu0 0.0
    %4426 = vmatprep.subr.mxu0 0.0
    %4427 = vmatpush2.msra.mxu0 0.0
    %4428 = vmatprep.subr.mxu0 0.0
    %4429 = vmatpush2.msra.mxu0 0.0
    %4430 = vmatprep.subr.mxu0 0.0
    %4431 = vmatpush2.msra.mxu0 0.0
    %4432 = vmatprep.subr.mxu0 0.0
    %4433 = vmatpush2.msra.mxu0 0.0
    %4434 = vmatprep.mubr.f32.mxu0 0.0
    %4435 = vmatmul.mubr.f32.gmra.mxu0 %v4111
    %v4436 = vpop.f32.mrf.mxu0
    %v4437 = vadd.f32 0.0, %v4436
    %v4438 = vpop.f32.mrf.mxu0
    %4439 = vdwg.mxu0
    %v4440 = vadd.f32 %v4367, %v4437
    %v4441 = vadd.f32 %v4440, %v1899
    %v4442 = vxor.u32 %v4441, 2147483648
    %v4443 = vmul.f32 %v4442, 1.442695
    %v4444 = vpow.pop %v4443
    %v4445 = vadd.f32 %v4444, 1.0
    %v4446 = vrcp.pop %v4445
    %v4447 = vmul.f32 1.0, %v4446
    %v4448 = vadd.f32 %v4367, %v1899
    %v4449 = vadd.f32 %v4437, %v1910
    %4451 = vrot.lane.b32.xlu0 %v4449, 64
    %v4452 = vpop.permute.xlu0 %4451
    %v4454 = vmul.f32 %v4447, %v4452
    %4456 = vrot.lane.b32.xlu0 %v4454, 64
    %v4457 = vpop.permute.xlu0 %4456
    %v4459 = vadd.f32 %v4448, %v4457
    %v4460 = vtanh.pop %v4459
    %v4461 = vsub.f32 1.0, %v4447
    %4463 = vrot.lane.b32.xlu0 %v4460, 96
    %v4464 = vpop.permute.xlu0 %4463
    %v4466 = vmul.f32 %v4461, %v4464
    %v4467 = vmul.f32 %v4447, %v4107
    %v4468 = vadd.f32 %v4466, %v4467
    %4470 = vrot.lane.b32.xlu0 %v4468, 96
    %v4471 = vpop.permute.xlu0 %4470
    %v4472 = vsel %vm178, %v4471, 0
    %4474 = vmatprep.subr.mxu0 0.0
    %4475 = vmatpush1.msra.mxu0 0.0
    %4476 = vmatprep.subr.mxu0 0.0
    %4477 = vmatpush1.msra.mxu0 0.0
    %4478 = vmatprep.subr.mxu0 0.0
    %4479 = vmatpush1.msra.mxu0 0.0
    %4480 = vmatprep.subr.mxu0 0.0
    %4481 = vmatpush1.msra.mxu0 0.0
    %4482 = vmatprep.subr.mxu0 0.0
    %4483 = vmatpush1.msra.mxu0 0.0
    %4484 = vmatprep.subr.mxu0 0.0
    %4485 = vmatpush1.msra.mxu0 0.0
    %4486 = vmatprep.subr.mxu0 0.0
    %4487 = vmatpush1.msra.mxu0 0.0
    %4488 = vmatprep.subr.mxu0 0.0
    %4489 = vmatpush1.msra.mxu0 0.0
    %4490 = vmatprep.subr.mxu0 0.0
    %4491 = vmatpush1.msra.mxu0 0.0
    %4492 = vmatprep.subr.mxu0 0.0
    %4493 = vmatpush1.msra.mxu0 0.0
    %4494 = vmatprep.subr.mxu0 0.0
    %4495 = vmatpush1.msra.mxu0 0.0
    %4496 = vmatprep.subr.mxu0 0.0
    %4497 = vmatpush1.msra.mxu0 0.0
    %4498 = vmatprep.subr.mxu0 0.0
    %4499 = vmatpush1.msra.mxu0 %v1667
    %4500 = vmatprep.subr.mxu0 0.0
    %4501 = vmatpush1.msra.mxu0 %v1666
    %4502 = vmatprep.subr.mxu0 0.0
    %4503 = vmatpush1.msra.mxu0 %v1665
    %4504 = vmatprep.subr.mxu0 0.0
    %4505 = vmatpush1.msra.mxu0 %v1664
    %4506 = vmatprep.subr.mxu0 0.0
    %4507 = vmatpush2.msra.mxu0 0.0
    %4508 = vmatprep.subr.mxu0 0.0
    %4509 = vmatpush2.msra.mxu0 0.0
    %4510 = vmatprep.subr.mxu0 0.0
    %4511 = vmatpush2.msra.mxu0 0.0
    %4512 = vmatprep.subr.mxu0 0.0
    %4513 = vmatpush2.msra.mxu0 0.0
    %4514 = vmatprep.subr.mxu0 0.0
    %4515 = vmatpush2.msra.mxu0 0.0
    %4516 = vmatprep.subr.mxu0 0.0
    %4517 = vmatpush2.msra.mxu0 0.0
    %4518 = vmatprep.subr.mxu0 0.0
    %4519 = vmatpush2.msra.mxu0 0.0
    %4520 = vmatprep.subr.mxu0 0.0
    %4521 = vmatpush2.msra.mxu0 0.0
    %4522 = vmatprep.subr.mxu0 0.0
    %4523 = vmatpush2.msra.mxu0 0.0
    %4524 = vmatprep.subr.mxu0 0.0
    %4525 = vmatpush2.msra.mxu0 0.0
    %4526 = vmatprep.subr.mxu0 0.0
    %4527 = vmatpush2.msra.mxu0 0.0
    %4528 = vmatprep.subr.mxu0 0.0
    %4529 = vmatpush2.msra.mxu0 0.0
    %4530 = vmatprep.subr.mxu0 0.0
    %4531 = vmatpush2.msra.mxu0 0.0
    %4532 = vmatprep.subr.mxu0 0.0
    %4533 = vmatpush2.msra.mxu0 0.0
    %4534 = vmatprep.subr.mxu0 0.0
    %4535 = vmatpush2.msra.mxu0 0.0
    %4536 = vmatprep.subr.mxu0 0.0
    %4537 = vmatpush2.msra.mxu0 0.0
    %4538 = vmatprep.mubr.f32.mxu0 0.0
    %4539 = vmatmul.mubr.f32.gmra.mxu0 %v4472
    %v4540 = vpop.f32.mrf.mxu0
    %v4541 = vadd.f32 %v1939, %v4540
    %v4542 = vpop.f32.mrf.mxu0
    %4543 = vdwg.mxu0
    %v4544 = vsel %vm2016, %v4541, -inf
    %4545 = vmax.xlane.f32.xlu0 %v4544
    %v4546 = vpop.xlane.xlu0 %4545
    %vm4547 = vweird.f32 %v4546
    %vm4548 = vmxor %vm4547, 1
    %v4549 = vsel %vm4548, %v4546, 0.0
    %v4550 = vsub.f32 %v4541, %v4549
    %v4551 = vmul.f32 %v4550, 1.442695
    %v4552 = vpow.pop %v4551
    %v4553 = vsel %vm2016, %v4552, 0.0
    %4554 = vadd.xlane.f32.xlu0 %v4553
    %v4555 = vpop.xlane.xlu0 %4554
    %v4556 = vand.u32 2147483647, %v4555
    %v4557 = vlog2.pop %v4556
    %v4558 = vmul.f32 %v4557, 0.6931472
    %v4559 = vadd.f32 %v4558, %v4549
    %v4560 = vsub.f32 %v4541, %v4559
    %v4561 = vsel %vm2016, %v4560, -inf
    %4562 = vmax.xlane.f32.xlu0 %v4561
    %v4563 = vpop.xlane.xlu0 %4562
    %vm4564 = vcmp.eq.f32.partialorder %v4560, %v4563
    %v4565 = vsel %vm4564, %v1670, 32
    %v4566 = vsel %vm2016, %v4565, 2147483647
    %v4567 = vand.u32 %v4566, 65535
    %v4568 = vshra.s32 %v4566, 16
    %v4569 = vcvt.s32.f32 %v4567
    %v4570 = vcvt.s32.f32 %v4568
    %4571 = vmin.xlane.f32.xlu0 %v4570
    %v4572 = vpop.xlane.xlu0 %4571
    %vm4573 = vcmp.eq.f32.partialorder %v4570, %v4572
    %v4574 = vsel %vm4573, %v4569, inf
    %4575 = vmin.xlane.f32.xlu0 %v4574
    %v4576 = vpop.xlane.xlu0 %4575
    %v4577 = vcvt.f32.s32 %v4576
    %v4578 = vcvt.f32.s32 %v4572
    %v4579 = vshll.u32 %v4578, 16
    %v4580 = vadd.s32 %v4579, %v4577
    %4582 = vrot.lane.b32.xlu0 %v2394, 32
    %v4583 = vpop.permute.xlu0 %4582
    %4586 = vrot.lane.b32.xlu0 %v2755, 64
    %v4587 = vpop.permute.xlu0 %4586
    %4590 = vrot.lane.b32.xlu0 %v3116, 96
    %v4591 = vpop.permute.xlu0 %4590
    %4594 = vrot.lane.b32.xlu0 %v3838, 32
    %v4595 = vpop.permute.xlu0 %4594
    %4598 = vrot.lane.b32.xlu0 %v4199, 64
    %v4599 = vpop.permute.xlu0 %4598
    %4602 = vrot.lane.b32.xlu0 %v4560, 96
    %v4603 = vpop.permute.xlu0 %4602
    %v4605 = vsel %vm178, %v2033, %v4583
    %vm4606 = vcmask 523264
    %v4607 = vsel %vm4606, %v4605, %v4587
    %vm4608 = vcmask 785408
    %v4609 = vsel %vm4608, %v4607, %v4591
    %v4610 = vsel %vm178, %v3477, %v4595
    %v4611 = vsel %vm4606, %v4610, %v4599
    %v4612 = vsel %vm4608, %v4611, %v4603
    %v4615 = vcombine.low %v4609, %v4612
    %v4617 = vunpack.c.l.s4 1983009808
    %v4618 = vunpack.c.0.s8 %v4617
    %v4619 = vlaneseq
    %v4620 = vshrl.u32 %v4619, 7
    %v4621 = vsub.s32 %v4618, %v4620
    %v4622 = vrot.slane %v4615, %v4621
    %4624 = vst [vmem:[%s12] sm:$0xf] %v4622
    %vm4625 = vcmask 7168
    %v4626 = vsel %vm4625, %v2053, %v2414
    %vm4627 = vcmask 15360
    %v4628 = vsel %vm4627, %v4626, %v2775
    %vm4629 = vcmask 23552
    %v4630 = vsel %vm4629, %v4628, %v3136
    %vm4631 = vcmask 31744
    %v4632 = vsel %vm4631, %v4630, %v3497
    %vm4633 = vcmask 39936
    %v4634 = vsel %vm4633, %v4632, %v3858
    %vm4635 = vcmask 48128
    %v4636 = vsel %vm4635, %v4634, %v4219
    %vm4637 = vcmask 56320
    %v4638 = vsel %vm4637, %v4636, %v4580
    %vm4639 = vcmask 58368
    %4640 = vst.msk [vmem:[#allocation10] sm:$0x3] %vm4639, %v4638
    // Predicated region
    $region66: #{seq2seq_forward.1} parent=1 // pred_check
      _
    $region67: #{seq2seq_forward.1} parent=1 // pred_check_branch
      %4642 = sbr.rel (0) target = $region69
    $region68: #{seq2seq_forward.1} parent=1 // pred_region
      _
    $region69: #{seq2seq_forward.1} parent=1 // pred_fallthru
      _
    // Predicated region
    $region70: #{seq2seq_forward.1} parent=1 // pred_check
      _
    $region71: #{seq2seq_forward.1} parent=1 // pred_check_branch
      %4644 = sbr.rel (0) target = $region73
    $region72: #{seq2seq_forward.1} parent=1 // pred_region
      %s4646 = ssub.s32 32, 32
      %4647 = vsyncadd [#allocation4], %s4646
      %s4649 = sshll.u32 [#allocation10], 4
      %s4650 = int_to_ptr.vmem [resolvable:$true] %s4649
      %4652 = dma.vmem_to_hbm [thread:$0]  %s4650, 32, %s13, [#allocation4]
    $region73: #{seq2seq_forward.1} parent=1 // pred_fallthru
      _
    // Predicated region
    $region74: #{seq2seq_forward.1} parent=1 // pred_check
      _
    $region75: #{seq2seq_forward.1} parent=1 // pred_check_branch
      %4654 = sbr.rel (0) target = $region77
    $region76: #{seq2seq_forward.1} parent=1 // pred_region
      _
    $region77: #{seq2seq_forward.1} parent=1 // pred_fallthru
      _
    // Predicated region
    $region78: #{seq2seq_forward.1} parent=1 // pred_check
      _
    $region79: #{seq2seq_forward.1} parent=1 // pred_check_branch
      %4656 = sbr.rel (0) target = $region81
    $region80: #{seq2seq_forward.1} parent=1 // pred_region
      %4657 = dma.done [#allocation4], 32
    $region81: #{seq2seq_forward.1} parent=1 // pred_fallthru
      _
    %4658 = vsyncpa [#allocation3], 1
    %4659 = vsyncpa [#allocation6], 1
    %4660 = vsyncpa [#allocation9], 1
    %4661 = vsyncpa [#allocation4], 1

</llo_original>
